<compile_context>
chip_gen: v7x
topology: tpu7x:2x2x1
jax: 0.10.0
libtpu: 0.0.40
codegen_flags: <defaults>
</compile_context>

<pallas_src>
import jax
import jax.numpy as jnp
from jax.experimental import pallas as pl
from jax.experimental.pallas import tpu as pltpu  # noqa: F401  (TPU backend assumed)

# ---- model hyper-parameters (small, lane-friendly, consistent with h/d_model/d_ff) ----
H = 4              # number of heads
D_MODEL = 128      # model width (lane-dense)
D_K = D_MODEL // H # 32 per-head width
D_FF = 256         # FFN hidden width
B = 2              # batch
T = 8              # target (decoder) sequence length
S = 8              # source (memory / encoder) sequence length
EPS = 1e-5         # nn.LayerNorm default eps

# TODO(synk): dropout (drop_rate=0.1) is a no-op in eval mode; training-mode RNG dropout
# is intentionally not implemented.
# TODO(synk): masks are kept as runtime inputs (additive-bias form) to preserve the
# module's forward signature instead of baking a causal mask into the kernel.
# TODO(synk): if this layer is stacked N deep, hide the weight DMA with cross-call
# prefetch (semaphore/VMEM-ref outputs) or a small grid; pointless for a single layer.


# ----------------------------- fused decoder-layer kernel ------------------------------

def _make_kernel(batch):
  """Build the fused decoder-layer kernel for a given (static) batch size."""
  D = D_MODEL
  f32 = jnp.float32
  bf16 = jnp.bfloat16
  scale = 1.0 / float(D_K) ** 0.5

  def kernel(x_ref, mem_ref, tbias_ref, sbias_ref, w_ref, w2_ref, vec_ref, o_ref):
    x = x_ref[...]          # (B*T, D)  f32
    mem = mem_ref[...]      # (B*S, D)  f32
    vec = vec_ref[...]      # (13, 3D)  f32  packed biases / LN params

    # ---- packed bf16 weight slab; all column offsets are multiples of 128 ----
    sa_wqkv = w_ref[:, 0:3 * D]
    sa_wo   = w_ref[:, 3 * D:4 * D]
    st_wq   = w_ref[:, 4 * D:5 * D]
    st_wkv  = w_ref[:, 5 * D:7 * D]
    st_wo   = w_ref[:, 7 * D:8 * D]
    ffn_w1  = w_ref[:, 8 * D:8 * D + D_FF]
    ffn_w2  = w2_ref[...]

    # ---- packed f32 vector slab (lane-prefix slices only) ----
    sa_bqkv = vec[0:1, :]
    sa_bo   = vec[1:2, :D]
    ln1_g, ln1_b = vec[2:3, :D], vec[3:4, :D]
    st_bq   = vec[4:5, :D]
    st_bkv  = vec[5:6, :2 * D]
    st_bo   = vec[6:7, :D]
    ln2_g, ln2_b = vec[7:8, :D], vec[8:9, :D]
    ffn_b1  = vec[9:10, :D_FF]
    ffn_b2  = vec[10:11, :D]
    ln3_g, ln3_b = vec[11:12, :D], vec[12:13, :D]

    def layer_norm(z, g, b):
      mu = jnp.mean(z, axis=-1, keepdims=True)
      zc = z - mu
      var = jnp.mean(zc * zc, axis=-1, keepdims=True)   # biased, matches nn.LayerNorm
      return zc * jax.lax.rsqrt(var + EPS) * g + b

    def split_heads(z, tlen):
      # (B*tlen, D) f32 -> (H*B, tlen, D_K) bf16 ; z-index = h*B + b.
      heads = [z[:, i * D_K:(i + 1) * D_K].reshape(batch, tlen, D_K) for i in range(H)]
      return jnp.concatenate(heads, axis=0).astype(bf16)

    def attention(q, k, v, bias):
      """q: (B*Tq, D), k/v: (B*Tk, D) f32; bias: (B, Tq, Tk) additive (0 / -1e9)."""
      tq = q.shape[0] // batch
      tk = k.shape[0] // batch
      qh, kh, vh = split_heads(q, tq), split_heads(k, tk), split_heads(v, tk)
      # One batched scores matmul over all heads & batches (bf16 in, f32 acc).
      s = jnp.einsum("zqd,zkd->zqk", qh, kh,
                     preferred_element_type=f32)                  # (H*B, tq, tk)
      # NOTE: -1e9 bias gives a uniform (not zero) row if a row is fully masked;
      # causal target mask + all-valid source mask never fully mask a row here.
      s = s.reshape(H, batch, tq, tk) * f32(scale) + bias[None]
      s = s - jnp.max(s, axis=-1, keepdims=True)
      p = jnp.exp(s)
      p = p * pl.reciprocal(jnp.sum(p, axis=-1, keepdims=True), approx=True)
      ctx = jnp.einsum("zqk,zkd->zqd",
                       p.reshape(H * batch, tq, tk).astype(bf16), vh,
                       preferred_element_type=f32)                # (H*B, tq, D_K)
      ctx = ctx.reshape(H, batch * tq, D_K)
      return jnp.concatenate([ctx[i] for i in range(H)], axis=-1)  # (B*tq, D) f32

    # ---- sublayer 1: masked self-attention + residual + LayerNorm ----
    qkv = jnp.dot(x.astype(bf16), sa_wqkv, preferred_element_type=f32) + sa_bqkv
    attn = attention(qkv[:, :D], qkv[:, D:2 * D], qkv[:, 2 * D:], tbias_ref[...])
    attn = jnp.dot(attn.astype(bf16), sa_wo, preferred_element_type=f32) + sa_bo
    x = layer_norm(x + attn, ln1_g, ln1_b)

    # ---- sublayer 2: source-target attention + residual + LayerNorm ----
    q = jnp.dot(x.astype(bf16), st_wq, preferred_element_type=f32) + st_bq
    kv = jnp.dot(mem.astype(bf16), st_wkv, preferred_element_type=f32) + st_bkv
    attn = attention(q, kv[:, :D], kv[:, D:], sbias_ref[...])
    attn = jnp.dot(attn.astype(bf16), st_wo, preferred_element_type=f32) + st_bo
    x = layer_norm(x + attn, ln2_g, ln2_b)

    # ---- sublayer 3: position-wise FFN (ReLU) + residual + LayerNorm ----
    hdn = jnp.maximum(
        jnp.dot(x.astype(bf16), ffn_w1, preferred_element_type=f32) + ffn_b1, 0.0)
    y = jnp.dot(hdn.astype(bf16), ffn_w2, preferred_element_type=f32) + ffn_b2
    x = layer_norm(x + y, ln3_g, ln3_b)

    o_ref[...] = x.astype(o_ref.dtype)   # (B*T, 128): lane-dense, unmasked stores

  return kernel


# ----------------------------- wrapper ---------------------------------------------------

def decoder_layer(x, mem, source_mask, target_mask, packed):
  """Forward pass of DecoderLayer (post-LN residual sublayers, eval mode)."""
  b, t, d = x.shape
  s = mem.shape[1]
  f32 = jnp.float32
  # Masks -> additive biases (1 = keep -> 0, 0 = mask -> -1e9), un-broadcast over heads.
  tmask = jnp.broadcast_to(target_mask.astype(f32), (b, 1, t, t)).reshape(b, t, t)
  smask = jnp.broadcast_to(source_mask.astype(f32), (b, 1, t, s)).reshape(b, t, s)
  tbias = jnp.where(tmask > 0.0, f32(0.0), f32(-1e9))
  sbias = jnp.where(smask > 0.0, f32(0.0), f32(-1e9))

  out = pl.pallas_call(
      _make_kernel(b),
      out_shape=jax.ShapeDtypeStruct((b * t, d), jnp.float32),
  )(
      x.reshape(b * t, d), mem.reshape(b * s, d), tbias, sbias,
      packed["w"], packed["w2"], packed["vec"],
  )
  return out.reshape(b, t, d)


# ----------------------------- parameter init & packing ----------------------------------

def init_params(key):
  ks = jax.random.split(key, 8)
  n = lambda k, shape: 0.02 * jax.random.normal(k, shape, jnp.float32)
  z = lambda m: jnp.zeros((m,), jnp.float32)
  return dict(
      # self-attention: fused QKV projection + output projection
      sa_wqkv=n(ks[0], (D_MODEL, 3 * D_MODEL)), sa_bqkv=z(3 * D_MODEL),
      sa_wo=n(ks[1], (D_MODEL, D_MODEL)), sa_bo=z(D_MODEL),
      # source-target attention: Q from decoder state, fused KV from encoder memory
      st_wq=n(ks[2], (D_MODEL, D_MODEL)), st_bq=z(D_MODEL),
      st_wkv=n(ks[3], (D_MODEL, 2 * D_MODEL)), st_bkv=z(2 * D_MODEL),
      st_wo=n(ks[4], (D_MODEL, D_MODEL)), st_bo=z(D_MODEL),
      # position-wise FFN
      ffn_w1=n(ks[5], (D_MODEL, D_FF)), ffn_b1=z(D_FF),
      ffn_w2=n(ks[6], (D_FF, D_MODEL)), ffn_b2=z(D_MODEL),
      # LayerNorms
      ln1_g=jnp.ones((D_MODEL,), jnp.float32), ln1_b=z(D_MODEL),
      ln2_g=jnp.ones((D_MODEL,), jnp.float32), ln2_b=z(D_MODEL),
      ln3_g=jnp.ones((D_MODEL,), jnp.float32), ln3_b=z(D_MODEL),
  )


def pack_params(p):
  """Pack weights (bf16) and bias/LN vectors (f32) into few large slabs (done once)."""
  w = jnp.concatenate(
      [p["sa_wqkv"], p["sa_wo"], p["st_wq"], p["st_wkv"], p["st_wo"], p["ffn_w1"]],
      axis=1).astype(jnp.bfloat16)                     # (128, 1280), 128-aligned columns
  w2 = p["ffn_w2"].astype(jnp.bfloat16)                # (256, 128)
  width = 3 * D_MODEL
  row = lambda v: jnp.pad(v, (0, width - v.shape[0])).reshape(1, width)
  vec = jnp.concatenate([
      row(p["sa_bqkv"]), row(p["sa_bo"]),
      row(p["ln1_g"]), row(p["ln1_b"]),
      row(p["st_bq"]), row(p["st_bkv"]), row(p["st_bo"]),
      row(p["ln2_g"]), row(p["ln2_b"]),
      row(p["ffn_b1"]), row(p["ffn_b2"]),
      row(p["ln3_g"]), row(p["ln3_b"]),
  ], axis=0).astype(jnp.float32)                       # (13, 384)
  return dict(w=w, w2=w2, vec=vec)


# ----------------------------- main -------------------------------------------------------

if __name__ == "__main__":
  root = jax.random.PRNGKey(0)
  k_params, k_x, k_mem = jax.random.split(root, 3)

  params = init_params(k_params)
  packed = pack_params(params)                          # bf16 weights shipped pre-packed
  x = jax.random.normal(k_x, (B, T, D_MODEL), jnp.float32)      # decoder input
  mem = jax.random.normal(k_mem, (B, S, D_MODEL), jnp.float32)  # encoder memory

  # target mask: causal lower-triangular; source mask: all positions valid.
  target_mask = jnp.broadcast_to(
      jnp.tril(jnp.ones((T, T), jnp.float32)).reshape(1, 1, T, T), (B, 1, T, T))
  source_mask = jnp.ones((B, 1, 1, S), jnp.float32)

  out = jax.jit(decoder_layer)(x, mem, source_mask, target_mask, packed)
  out = jax.block_until_ready(out)
  assert out.shape == (B, T, D_MODEL) and out.dtype == jnp.float32
  assert bool(jnp.all(jnp.isfinite(out)))
  print("KERNEL_OK")
</pallas_src>

<mosaic_0001>
module attributes {stable_mosaic.version = 11 : i64} {
  func.func @kernel(%arg0: memref<16x128xf32, #tpu.memory_space<vmem>>, %arg1: memref<16x128xf32, #tpu.memory_space<vmem>>, %arg2: memref<2x8x8xf32, #tpu.memory_space<vmem>>, %arg3: memref<2x8x8xf32, #tpu.memory_space<vmem>>, %arg4: memref<128x1280xbf16, #tpu.memory_space<vmem>>, %arg5: memref<256x128xbf16, #tpu.memory_space<vmem>>, %arg6: memref<13x384xf32, #tpu.memory_space<vmem>>, %arg7: memref<16x128xf32, #tpu.memory_space<vmem>>) attributes {dimension_semantics = [], scalar_prefetch = 0 : i64, scratch_operands = 0 : i64, tpu.core_type = #tpu.core_type<tc>} {
    %c0 = arith.constant 0 : index
    %c0_0 = arith.constant 0 : index
    %0 = vector.load %arg0[%c0, %c0_0] : memref<16x128xf32, #tpu.memory_space<vmem>>, vector<16x128xf32>
    %c0_1 = arith.constant 0 : index
    %c0_2 = arith.constant 0 : index
    %1 = vector.load %arg1[%c0_1, %c0_2] : memref<16x128xf32, #tpu.memory_space<vmem>>, vector<16x128xf32>
    %c0_3 = arith.constant 0 : index
    %c0_4 = arith.constant 0 : index
    %2 = vector.load %arg6[%c0_3, %c0_4] : memref<13x384xf32, #tpu.memory_space<vmem>>, vector<13x384xf32>
    %c0_5 = arith.constant 0 : index
    %c0_6 = arith.constant 0 : index
    %3 = vector.load %arg4[%c0_5, %c0_6] : memref<128x1280xbf16, #tpu.memory_space<vmem>>, vector<128x384xbf16>
    %c0_7 = arith.constant 0 : index
    %c384 = arith.constant 384 : index
    %4 = vector.load %arg4[%c0_7, %c384] : memref<128x1280xbf16, #tpu.memory_space<vmem>>, vector<128x128xbf16>
    %c0_8 = arith.constant 0 : index
    %c512 = arith.constant 512 : index
    %5 = vector.load %arg4[%c0_8, %c512] : memref<128x1280xbf16, #tpu.memory_space<vmem>>, vector<128x128xbf16>
    %c0_9 = arith.constant 0 : index
    %c640 = arith.constant 640 : index
    %6 = vector.load %arg4[%c0_9, %c640] : memref<128x1280xbf16, #tpu.memory_space<vmem>>, vector<128x256xbf16>
    %c0_10 = arith.constant 0 : index
    %c896 = arith.constant 896 : index
    %7 = vector.load %arg4[%c0_10, %c896] : memref<128x1280xbf16, #tpu.memory_space<vmem>>, vector<128x128xbf16>
    %c0_11 = arith.constant 0 : index
    %c1024 = arith.constant 1024 : index
    %8 = vector.load %arg4[%c0_11, %c1024] : memref<128x1280xbf16, #tpu.memory_space<vmem>>, vector<128x256xbf16>
    %c0_12 = arith.constant 0 : index
    %c0_13 = arith.constant 0 : index
    %9 = vector.load %arg5[%c0_12, %c0_13] : memref<256x128xbf16, #tpu.memory_space<vmem>>, vector<256x128xbf16>
    %10 = vector.extract_strided_slice %2 {offsets = [0, 0], sizes = [1, 384], strides = [1, 1]} : vector<13x384xf32> to vector<1x384xf32>
    %11 = vector.extract_strided_slice %2 {offsets = [1, 0], sizes = [1, 128], strides = [1, 1]} : vector<13x384xf32> to vector<1x128xf32>
    %12 = vector.extract_strided_slice %2 {offsets = [2, 0], sizes = [1, 128], strides = [1, 1]} : vector<13x384xf32> to vector<1x128xf32>
    %13 = vector.extract_strided_slice %2 {offsets = [3, 0], sizes = [1, 128], strides = [1, 1]} : vector<13x384xf32> to vector<1x128xf32>
    %14 = vector.extract_strided_slice %2 {offsets = [4, 0], sizes = [1, 128], strides = [1, 1]} : vector<13x384xf32> to vector<1x128xf32>
    %15 = vector.extract_strided_slice %2 {offsets = [5, 0], sizes = [1, 256], strides = [1, 1]} : vector<13x384xf32> to vector<1x256xf32>
    %16 = vector.extract_strided_slice %2 {offsets = [6, 0], sizes = [1, 128], strides = [1, 1]} : vector<13x384xf32> to vector<1x128xf32>
    %17 = vector.extract_strided_slice %2 {offsets = [7, 0], sizes = [1, 128], strides = [1, 1]} : vector<13x384xf32> to vector<1x128xf32>
    %18 = vector.extract_strided_slice %2 {offsets = [8, 0], sizes = [1, 128], strides = [1, 1]} : vector<13x384xf32> to vector<1x128xf32>
    %19 = vector.extract_strided_slice %2 {offsets = [9, 0], sizes = [1, 256], strides = [1, 1]} : vector<13x384xf32> to vector<1x256xf32>
    %20 = vector.extract_strided_slice %2 {offsets = [10, 0], sizes = [1, 128], strides = [1, 1]} : vector<13x384xf32> to vector<1x128xf32>
    %21 = vector.extract_strided_slice %2 {offsets = [11, 0], sizes = [1, 128], strides = [1, 1]} : vector<13x384xf32> to vector<1x128xf32>
    %22 = vector.extract_strided_slice %2 {offsets = [12, 0], sizes = [1, 128], strides = [1, 1]} : vector<13x384xf32> to vector<1x128xf32>
    %23 = arith.truncf %0 : vector<16x128xf32> to vector<16x128xbf16>
    %cst = arith.constant dense<0.000000e+00> : vector<16x384xf32>
    %24 = tpu.matmul %23, %3, %cst {dimension_numbers = #tpu.dot_dimension_numbers<[1], [0], [0], [1], [0, 0, 1, 1], [], []>} : vector<16x128xbf16>, vector<128x384xbf16>, vector<16x384xf32> -> vector<16x384xf32>
    %25 = vector.broadcast %10 : vector<1x384xf32> to vector<16x384xf32>
    %26 = arith.addf %24, %25 : vector<16x384xf32>
    %27 = vector.extract_strided_slice %26 {offsets = [0, 0], sizes = [16, 128], strides = [1, 1]} : vector<16x384xf32> to vector<16x128xf32>
    %28 = vector.extract_strided_slice %26 {offsets = [0, 128], sizes = [16, 128], strides = [1, 1]} : vector<16x384xf32> to vector<16x128xf32>
    %29 = vector.extract_strided_slice %26 {offsets = [0, 256], sizes = [16, 128], strides = [1, 1]} : vector<16x384xf32> to vector<16x128xf32>
    %c0_14 = arith.constant 0 : index
    %c0_15 = arith.constant 0 : index
    %c0_16 = arith.constant 0 : index
    %30 = vector.load %arg2[%c0_14, %c0_15, %c0_16] : memref<2x8x8xf32, #tpu.memory_space<vmem>>, vector<2x8x8xf32>
    %31 = vector.extract_strided_slice %27 {offsets = [0, 0], sizes = [16, 32], strides = [1, 1]} : vector<16x128xf32> to vector<16x32xf32>
    %32 = vector.shape_cast %31 : vector<16x32xf32> to vector<2x8x32xf32>
    %33 = vector.extract_strided_slice %27 {offsets = [0, 32], sizes = [16, 32], strides = [1, 1]} : vector<16x128xf32> to vector<16x32xf32>
    %34 = vector.shape_cast %33 : vector<16x32xf32> to vector<2x8x32xf32>
    %35 = vector.extract_strided_slice %27 {offsets = [0, 64], sizes = [16, 32], strides = [1, 1]} : vector<16x128xf32> to vector<16x32xf32>
    %36 = vector.shape_cast %35 : vector<16x32xf32> to vector<2x8x32xf32>
    %37 = vector.extract_strided_slice %27 {offsets = [0, 96], sizes = [16, 32], strides = [1, 1]} : vector<16x128xf32> to vector<16x32xf32>
    %38 = vector.shape_cast %37 : vector<16x32xf32> to vector<2x8x32xf32>
    %39 = tpu.concatenate %32, %34, %36, %38 in 0 : vector<2x8x32xf32>, vector<2x8x32xf32>, vector<2x8x32xf32>, vector<2x8x32xf32> -> vector<8x8x32xf32>
    %40 = arith.truncf %39 : vector<8x8x32xf32> to vector<8x8x32xbf16>
    %41 = vector.extract_strided_slice %28 {offsets = [0, 0], sizes = [16, 32], strides = [1, 1]} : vector<16x128xf32> to vector<16x32xf32>
    %42 = vector.shape_cast %41 : vector<16x32xf32> to vector<2x8x32xf32>
    %43 = vector.extract_strided_slice %28 {offsets = [0, 32], sizes = [16, 32], strides = [1, 1]} : vector<16x128xf32> to vector<16x32xf32>
    %44 = vector.shape_cast %43 : vector<16x32xf32> to vector<2x8x32xf32>
    %45 = vector.extract_strided_slice %28 {offsets = [0, 64], sizes = [16, 32], strides = [1, 1]} : vector<16x128xf32> to vector<16x32xf32>
    %46 = vector.shape_cast %45 : vector<16x32xf32> to vector<2x8x32xf32>
    %47 = vector.extract_strided_slice %28 {offsets = [0, 96], sizes = [16, 32], strides = [1, 1]} : vector<16x128xf32> to vector<16x32xf32>
    %48 = vector.shape_cast %47 : vector<16x32xf32> to vector<2x8x32xf32>
    %49 = tpu.concatenate %42, %44, %46, %48 in 0 : vector<2x8x32xf32>, vector<2x8x32xf32>, vector<2x8x32xf32>, vector<2x8x32xf32> -> vector<8x8x32xf32>
    %50 = arith.truncf %49 : vector<8x8x32xf32> to vector<8x8x32xbf16>
    %51 = vector.extract_strided_slice %29 {offsets = [0, 0], sizes = [16, 32], strides = [1, 1]} : vector<16x128xf32> to vector<16x32xf32>
    %52 = vector.shape_cast %51 : vector<16x32xf32> to vector<2x8x32xf32>
    %53 = vector.extract_strided_slice %29 {offsets = [0, 32], sizes = [16, 32], strides = [1, 1]} : vector<16x128xf32> to vector<16x32xf32>
    %54 = vector.shape_cast %53 : vector<16x32xf32> to vector<2x8x32xf32>
    %55 = vector.extract_strided_slice %29 {offsets = [0, 64], sizes = [16, 32], strides = [1, 1]} : vector<16x128xf32> to vector<16x32xf32>
    %56 = vector.shape_cast %55 : vector<16x32xf32> to vector<2x8x32xf32>
    %57 = vector.extract_strided_slice %29 {offsets = [0, 96], sizes = [16, 32], strides = [1, 1]} : vector<16x128xf32> to vector<16x32xf32>
    %58 = vector.shape_cast %57 : vector<16x32xf32> to vector<2x8x32xf32>
    %59 = tpu.concatenate %52, %54, %56, %58 in 0 : vector<2x8x32xf32>, vector<2x8x32xf32>, vector<2x8x32xf32>, vector<2x8x32xf32> -> vector<8x8x32xf32>
    %60 = arith.truncf %59 : vector<8x8x32xf32> to vector<8x8x32xbf16>
    "tpu.trace_start"() <{level = 10 : i32, message = "zqd,zkd->zqk"}> : () -> ()
    %cst_17 = arith.constant dense<0.000000e+00> : vector<8x8x8xf32>
    %61 = tpu.matmul %40, %50, %cst_17 {dimension_numbers = #tpu.dot_dimension_numbers<[2], [2], [1], [1], [0, 0, 0, 1, 1, 1], [0], [0]>} : vector<8x8x32xbf16>, vector<8x8x32xbf16>, vector<8x8x8xf32> -> vector<8x8x8xf32>
    "tpu.trace_stop"() : () -> ()
    %62 = vector.shape_cast %61 : vector<8x8x8xf32> to vector<4x2x8x8xf32>
    %cst_18 = arith.constant 0.176776692 : f32
    %63 = vector.broadcast %cst_18 : f32 to vector<4x2x8x8xf32>
    %64 = arith.mulf %62, %63 : vector<4x2x8x8xf32>
    %65 = vector.shape_cast %30 : vector<2x8x8xf32> to vector<1x2x8x8xf32>
    %66 = vector.broadcast %65 : vector<1x2x8x8xf32> to vector<4x2x8x8xf32>
    %67 = arith.addf %64, %66 : vector<4x2x8x8xf32>
    %cst_19 = arith.constant dense<0xFF800000> : vector<4x2x8xf32>
    %68 = vector.multi_reduction <maximumf>, %67, %cst_19 [3] : vector<4x2x8x8xf32> to vector<4x2x8xf32>
    %69 = vector.shape_cast %68 : vector<4x2x8xf32> to vector<4x2x8x1xf32>
    %70 = vector.broadcast %69 : vector<4x2x8x1xf32> to vector<4x2x8x8xf32>
    %71 = arith.subf %67, %70 : vector<4x2x8x8xf32>
    %72 = math.exp %71 : vector<4x2x8x8xf32>
    %cst_20 = arith.constant dense<0.000000e+00> : vector<4x2x8xf32>
    %73 = vector.multi_reduction <add>, %72, %cst_20 [3] : vector<4x2x8x8xf32> to vector<4x2x8xf32>
    %74 = vector.shape_cast %73 : vector<4x2x8xf32> to vector<4x2x8x1xf32>
    %75 = tpu.reciprocal %74 {approx = true} : vector<4x2x8x1xf32> -> vector<4x2x8x1xf32>
    %76 = vector.broadcast %75 : vector<4x2x8x1xf32> to vector<4x2x8x8xf32>
    %77 = arith.mulf %72, %76 : vector<4x2x8x8xf32>
    %78 = vector.shape_cast %77 : vector<4x2x8x8xf32> to vector<8x8x8xf32>
    %79 = arith.truncf %78 : vector<8x8x8xf32> to vector<8x8x8xbf16>
    "tpu.trace_start"() <{level = 10 : i32, message = "zqk,zkd->zqd"}> : () -> ()
    %cst_21 = arith.constant dense<0.000000e+00> : vector<8x8x32xf32>
    %80 = tpu.matmul %79, %60, %cst_21 {dimension_numbers = #tpu.dot_dimension_numbers<[2], [1], [1], [2], [0, 0, 0, 1, 1, 2], [0], [0]>} : vector<8x8x8xbf16>, vector<8x8x32xbf16>, vector<8x8x32xf32> -> vector<8x8x32xf32>
    "tpu.trace_stop"() : () -> ()
    %81 = vector.shape_cast %80 : vector<8x8x32xf32> to vector<4x16x32xf32>
    %82 = vector.extract_strided_slice %81 {offsets = [0, 0, 0], sizes = [1, 16, 32], strides = [1, 1, 1]} : vector<4x16x32xf32> to vector<1x16x32xf32>
    %83 = vector.shape_cast %82 : vector<1x16x32xf32> to vector<16x32xf32>
    %84 = vector.extract_strided_slice %81 {offsets = [1, 0, 0], sizes = [1, 16, 32], strides = [1, 1, 1]} : vector<4x16x32xf32> to vector<1x16x32xf32>
    %85 = vector.shape_cast %84 : vector<1x16x32xf32> to vector<16x32xf32>
    %86 = vector.extract_strided_slice %81 {offsets = [2, 0, 0], sizes = [1, 16, 32], strides = [1, 1, 1]} : vector<4x16x32xf32> to vector<1x16x32xf32>
    %87 = vector.shape_cast %86 : vector<1x16x32xf32> to vector<16x32xf32>
    %88 = vector.extract_strided_slice %81 {offsets = [3, 0, 0], sizes = [1, 16, 32], strides = [1, 1, 1]} : vector<4x16x32xf32> to vector<1x16x32xf32>
    %89 = vector.shape_cast %88 : vector<1x16x32xf32> to vector<16x32xf32>
    %90 = tpu.concatenate %83, %85, %87, %89 in 1 : vector<16x32xf32>, vector<16x32xf32>, vector<16x32xf32>, vector<16x32xf32> -> vector<16x128xf32>
    %91 = arith.truncf %90 : vector<16x128xf32> to vector<16x128xbf16>
    %cst_22 = arith.constant dense<0.000000e+00> : vector<16x128xf32>
    %92 = tpu.matmul %91, %4, %cst_22 {dimension_numbers = #tpu.dot_dimension_numbers<[1], [0], [0], [1], [0, 0, 1, 1], [], []>} : vector<16x128xbf16>, vector<128x128xbf16>, vector<16x128xf32> -> vector<16x128xf32>
    %93 = vector.broadcast %11 : vector<1x128xf32> to vector<16x128xf32>
    %94 = arith.addf %92, %93 : vector<16x128xf32>
    %95 = arith.addf %0, %94 : vector<16x128xf32>
    %cst_23 = arith.constant dense<0.000000e+00> : vector<16xf32>
    %96 = vector.multi_reduction <add>, %95, %cst_23 [1] : vector<16x128xf32> to vector<16xf32>
    %97 = vector.shape_cast %96 : vector<16xf32> to vector<16x1xf32>
    %cst_24 = arith.constant 1.280000e+02 : f32
    %98 = vector.broadcast %cst_24 : f32 to vector<16x1xf32>
    %99 = arith.divf %97, %98 : vector<16x1xf32>
    %100 = vector.broadcast %99 : vector<16x1xf32> to vector<16x128xf32>
    %101 = arith.subf %95, %100 : vector<16x128xf32>
    %102 = arith.mulf %101, %101 : vector<16x128xf32>
    %cst_25 = arith.constant dense<0.000000e+00> : vector<16xf32>
    %103 = vector.multi_reduction <add>, %102, %cst_25 [1] : vector<16x128xf32> to vector<16xf32>
    %104 = vector.shape_cast %103 : vector<16xf32> to vector<16x1xf32>
    %cst_26 = arith.constant 1.280000e+02 : f32
    %105 = vector.broadcast %cst_26 : f32 to vector<16x1xf32>
    %106 = arith.divf %104, %105 : vector<16x1xf32>
    %cst_27 = arith.constant 9.99999974E-6 : f32
    %107 = vector.broadcast %cst_27 : f32 to vector<16x1xf32>
    %108 = arith.addf %106, %107 : vector<16x1xf32>
    %109 = math.rsqrt %108 : vector<16x1xf32>
    %110 = vector.broadcast %109 : vector<16x1xf32> to vector<16x128xf32>
    %111 = arith.mulf %101, %110 : vector<16x128xf32>
    %112 = vector.broadcast %12 : vector<1x128xf32> to vector<16x128xf32>
    %113 = arith.mulf %111, %112 : vector<16x128xf32>
    %114 = vector.broadcast %13 : vector<1x128xf32> to vector<16x128xf32>
    %115 = arith.addf %113, %114 : vector<16x128xf32>
    %116 = arith.truncf %115 : vector<16x128xf32> to vector<16x128xbf16>
    %cst_28 = arith.constant dense<0.000000e+00> : vector<16x128xf32>
    %117 = tpu.matmul %116, %5, %cst_28 {dimension_numbers = #tpu.dot_dimension_numbers<[1], [0], [0], [1], [0, 0, 1, 1], [], []>} : vector<16x128xbf16>, vector<128x128xbf16>, vector<16x128xf32> -> vector<16x128xf32>
    %118 = vector.broadcast %14 : vector<1x128xf32> to vector<16x128xf32>
    %119 = arith.addf %117, %118 : vector<16x128xf32>
    %120 = arith.truncf %1 : vector<16x128xf32> to vector<16x128xbf16>
    %cst_29 = arith.constant dense<0.000000e+00> : vector<16x256xf32>
    %121 = tpu.matmul %120, %6, %cst_29 {dimension_numbers = #tpu.dot_dimension_numbers<[1], [0], [0], [1], [0, 0, 1, 1], [], []>} : vector<16x128xbf16>, vector<128x256xbf16>, vector<16x256xf32> -> vector<16x256xf32>
    %122 = vector.broadcast %15 : vector<1x256xf32> to vector<16x256xf32>
    %123 = arith.addf %121, %122 : vector<16x256xf32>
    %124 = vector.extract_strided_slice %123 {offsets = [0, 0], sizes = [16, 128], strides = [1, 1]} : vector<16x256xf32> to vector<16x128xf32>
    %125 = vector.extract_strided_slice %123 {offsets = [0, 128], sizes = [16, 128], strides = [1, 1]} : vector<16x256xf32> to vector<16x128xf32>
    %c0_30 = arith.constant 0 : index
    %c0_31 = arith.constant 0 : index
    %c0_32 = arith.constant 0 : index
    %126 = vector.load %arg3[%c0_30, %c0_31, %c0_32] : memref<2x8x8xf32, #tpu.memory_space<vmem>>, vector<2x8x8xf32>
    %127 = vector.extract_strided_slice %119 {offsets = [0, 0], sizes = [16, 32], strides = [1, 1]} : vector<16x128xf32> to vector<16x32xf32>
    %128 = vector.shape_cast %127 : vector<16x32xf32> to vector<2x8x32xf32>
    %129 = vector.extract_strided_slice %119 {offsets = [0, 32], sizes = [16, 32], strides = [1, 1]} : vector<16x128xf32> to vector<16x32xf32>
    %130 = vector.shape_cast %129 : vector<16x32xf32> to vector<2x8x32xf32>
    %131 = vector.extract_strided_slice %119 {offsets = [0, 64], sizes = [16, 32], strides = [1, 1]} : vector<16x128xf32> to vector<16x32xf32>
    %132 = vector.shape_cast %131 : vector<16x32xf32> to vector<2x8x32xf32>
    %133 = vector.extract_strided_slice %119 {offsets = [0, 96], sizes = [16, 32], strides = [1, 1]} : vector<16x128xf32> to vector<16x32xf32>
    %134 = vector.shape_cast %133 : vector<16x32xf32> to vector<2x8x32xf32>
    %135 = tpu.concatenate %128, %130, %132, %134 in 0 : vector<2x8x32xf32>, vector<2x8x32xf32>, vector<2x8x32xf32>, vector<2x8x32xf32> -> vector<8x8x32xf32>
    %136 = arith.truncf %135 : vector<8x8x32xf32> to vector<8x8x32xbf16>
    %137 = vector.extract_strided_slice %124 {offsets = [0, 0], sizes = [16, 32], strides = [1, 1]} : vector<16x128xf32> to vector<16x32xf32>
    %138 = vector.shape_cast %137 : vector<16x32xf32> to vector<2x8x32xf32>
    %139 = vector.extract_strided_slice %124 {offsets = [0, 32], sizes = [16, 32], strides = [1, 1]} : vector<16x128xf32> to vector<16x32xf32>
    %140 = vector.shape_cast %139 : vector<16x32xf32> to vector<2x8x32xf32>
    %141 = vector.extract_strided_slice %124 {offsets = [0, 64], sizes = [16, 32], strides = [1, 1]} : vector<16x128xf32> to vector<16x32xf32>
    %142 = vector.shape_cast %141 : vector<16x32xf32> to vector<2x8x32xf32>
    %143 = vector.extract_strided_slice %124 {offsets = [0, 96], sizes = [16, 32], strides = [1, 1]} : vector<16x128xf32> to vector<16x32xf32>
    %144 = vector.shape_cast %143 : vector<16x32xf32> to vector<2x8x32xf32>
    %145 = tpu.concatenate %138, %140, %142, %144 in 0 : vector<2x8x32xf32>, vector<2x8x32xf32>, vector<2x8x32xf32>, vector<2x8x32xf32> -> vector<8x8x32xf32>
    %146 = arith.truncf %145 : vector<8x8x32xf32> to vector<8x8x32xbf16>
    %147 = vector.extract_strided_slice %125 {offsets = [0, 0], sizes = [16, 32], strides = [1, 1]} : vector<16x128xf32> to vector<16x32xf32>
    %148 = vector.shape_cast %147 : vector<16x32xf32> to vector<2x8x32xf32>
    %149 = vector.extract_strided_slice %125 {offsets = [0, 32], sizes = [16, 32], strides = [1, 1]} : vector<16x128xf32> to vector<16x32xf32>
    %150 = vector.shape_cast %149 : vector<16x32xf32> to vector<2x8x32xf32>
    %151 = vector.extract_strided_slice %125 {offsets = [0, 64], sizes = [16, 32], strides = [1, 1]} : vector<16x128xf32> to vector<16x32xf32>
    %152 = vector.shape_cast %151 : vector<16x32xf32> to vector<2x8x32xf32>
    %153 = vector.extract_strided_slice %125 {offsets = [0, 96], sizes = [16, 32], strides = [1, 1]} : vector<16x128xf32> to vector<16x32xf32>
    %154 = vector.shape_cast %153 : vector<16x32xf32> to vector<2x8x32xf32>
    %155 = tpu.concatenate %148, %150, %152, %154 in 0 : vector<2x8x32xf32>, vector<2x8x32xf32>, vector<2x8x32xf32>, vector<2x8x32xf32> -> vector<8x8x32xf32>
    %156 = arith.truncf %155 : vector<8x8x32xf32> to vector<8x8x32xbf16>
    "tpu.trace_start"() <{level = 10 : i32, message = "zqd,zkd->zqk"}> : () -> ()
    %cst_33 = arith.constant dense<0.000000e+00> : vector<8x8x8xf32>
    %157 = tpu.matmul %136, %146, %cst_33 {dimension_numbers = #tpu.dot_dimension_numbers<[2], [2], [1], [1], [0, 0, 0, 1, 1, 1], [0], [0]>} : vector<8x8x32xbf16>, vector<8x8x32xbf16>, vector<8x8x8xf32> -> vector<8x8x8xf32>
    "tpu.trace_stop"() : () -> ()
    %158 = vector.shape_cast %157 : vector<8x8x8xf32> to vector<4x2x8x8xf32>
    %cst_34 = arith.constant 0.176776692 : f32
    %159 = vector.broadcast %cst_34 : f32 to vector<4x2x8x8xf32>
    %160 = arith.mulf %158, %159 : vector<4x2x8x8xf32>
    %161 = vector.shape_cast %126 : vector<2x8x8xf32> to vector<1x2x8x8xf32>
    %162 = vector.broadcast %161 : vector<1x2x8x8xf32> to vector<4x2x8x8xf32>
    %163 = arith.addf %160, %162 : vector<4x2x8x8xf32>
    %cst_35 = arith.constant dense<0xFF800000> : vector<4x2x8xf32>
    %164 = vector.multi_reduction <maximumf>, %163, %cst_35 [3] : vector<4x2x8x8xf32> to vector<4x2x8xf32>
    %165 = vector.shape_cast %164 : vector<4x2x8xf32> to vector<4x2x8x1xf32>
    %166 = vector.broadcast %165 : vector<4x2x8x1xf32> to vector<4x2x8x8xf32>
    %167 = arith.subf %163, %166 : vector<4x2x8x8xf32>
    %168 = math.exp %167 : vector<4x2x8x8xf32>
    %cst_36 = arith.constant dense<0.000000e+00> : vector<4x2x8xf32>
    %169 = vector.multi_reduction <add>, %168, %cst_36 [3] : vector<4x2x8x8xf32> to vector<4x2x8xf32>
    %170 = vector.shape_cast %169 : vector<4x2x8xf32> to vector<4x2x8x1xf32>
    %171 = tpu.reciprocal %170 {approx = true} : vector<4x2x8x1xf32> -> vector<4x2x8x1xf32>
    %172 = vector.broadcast %171 : vector<4x2x8x1xf32> to vector<4x2x8x8xf32>
    %173 = arith.mulf %168, %172 : vector<4x2x8x8xf32>
    %174 = vector.shape_cast %173 : vector<4x2x8x8xf32> to vector<8x8x8xf32>
    %175 = arith.truncf %174 : vector<8x8x8xf32> to vector<8x8x8xbf16>
    "tpu.trace_start"() <{level = 10 : i32, message = "zqk,zkd->zqd"}> : () -> ()
    %cst_37 = arith.constant dense<0.000000e+00> : vector<8x8x32xf32>
    %176 = tpu.matmul %175, %156, %cst_37 {dimension_numbers = #tpu.dot_dimension_numbers<[2], [1], [1], [2], [0, 0, 0, 1, 1, 2], [0], [0]>} : vector<8x8x8xbf16>, vector<8x8x32xbf16>, vector<8x8x32xf32> -> vector<8x8x32xf32>
    "tpu.trace_stop"() : () -> ()
    %177 = vector.shape_cast %176 : vector<8x8x32xf32> to vector<4x16x32xf32>
    %178 = vector.extract_strided_slice %177 {offsets = [0, 0, 0], sizes = [1, 16, 32], strides = [1, 1, 1]} : vector<4x16x32xf32> to vector<1x16x32xf32>
    %179 = vector.shape_cast %178 : vector<1x16x32xf32> to vector<16x32xf32>
    %180 = vector.extract_strided_slice %177 {offsets = [1, 0, 0], sizes = [1, 16, 32], strides = [1, 1, 1]} : vector<4x16x32xf32> to vector<1x16x32xf32>
    %181 = vector.shape_cast %180 : vector<1x16x32xf32> to vector<16x32xf32>
    %182 = vector.extract_strided_slice %177 {offsets = [2, 0, 0], sizes = [1, 16, 32], strides = [1, 1, 1]} : vector<4x16x32xf32> to vector<1x16x32xf32>
    %183 = vector.shape_cast %182 : vector<1x16x32xf32> to vector<16x32xf32>
    %184 = vector.extract_strided_slice %177 {offsets = [3, 0, 0], sizes = [1, 16, 32], strides = [1, 1, 1]} : vector<4x16x32xf32> to vector<1x16x32xf32>
    %185 = vector.shape_cast %184 : vector<1x16x32xf32> to vector<16x32xf32>
    %186 = tpu.concatenate %179, %181, %183, %185 in 1 : vector<16x32xf32>, vector<16x32xf32>, vector<16x32xf32>, vector<16x32xf32> -> vector<16x128xf32>
    %187 = arith.truncf %186 : vector<16x128xf32> to vector<16x128xbf16>
    %cst_38 = arith.constant dense<0.000000e+00> : vector<16x128xf32>
    %188 = tpu.matmul %187, %7, %cst_38 {dimension_numbers = #tpu.dot_dimension_numbers<[1], [0], [0], [1], [0, 0, 1, 1], [], []>} : vector<16x128xbf16>, vector<128x128xbf16>, vector<16x128xf32> -> vector<16x128xf32>
    %189 = vector.broadcast %16 : vector<1x128xf32> to vector<16x128xf32>
    %190 = arith.addf %188, %189 : vector<16x128xf32>
    %191 = arith.addf %115, %190 : vector<16x128xf32>
    %cst_39 = arith.constant dense<0.000000e+00> : vector<16xf32>
    %192 = vector.multi_reduction <add>, %191, %cst_39 [1] : vector<16x128xf32> to vector<16xf32>
    %193 = vector.shape_cast %192 : vector<16xf32> to vector<16x1xf32>
    %cst_40 = arith.constant 1.280000e+02 : f32
    %194 = vector.broadcast %cst_40 : f32 to vector<16x1xf32>
    %195 = arith.divf %193, %194 : vector<16x1xf32>
    %196 = vector.broadcast %195 : vector<16x1xf32> to vector<16x128xf32>
    %197 = arith.subf %191, %196 : vector<16x128xf32>
    %198 = arith.mulf %197, %197 : vector<16x128xf32>
    %cst_41 = arith.constant dense<0.000000e+00> : vector<16xf32>
    %199 = vector.multi_reduction <add>, %198, %cst_41 [1] : vector<16x128xf32> to vector<16xf32>
    %200 = vector.shape_cast %199 : vector<16xf32> to vector<16x1xf32>
    %cst_42 = arith.constant 1.280000e+02 : f32
    %201 = vector.broadcast %cst_42 : f32 to vector<16x1xf32>
    %202 = arith.divf %200, %201 : vector<16x1xf32>
    %cst_43 = arith.constant 9.99999974E-6 : f32
    %203 = vector.broadcast %cst_43 : f32 to vector<16x1xf32>
    %204 = arith.addf %202, %203 : vector<16x1xf32>
    %205 = math.rsqrt %204 : vector<16x1xf32>
    %206 = vector.broadcast %205 : vector<16x1xf32> to vector<16x128xf32>
    %207 = arith.mulf %197, %206 : vector<16x128xf32>
    %208 = vector.broadcast %17 : vector<1x128xf32> to vector<16x128xf32>
    %209 = arith.mulf %207, %208 : vector<16x128xf32>
    %210 = vector.broadcast %18 : vector<1x128xf32> to vector<16x128xf32>
    %211 = arith.addf %209, %210 : vector<16x128xf32>
    %212 = arith.truncf %211 : vector<16x128xf32> to vector<16x128xbf16>
    %cst_44 = arith.constant dense<0.000000e+00> : vector<16x256xf32>
    %213 = tpu.matmul %212, %8, %cst_44 {dimension_numbers = #tpu.dot_dimension_numbers<[1], [0], [0], [1], [0, 0, 1, 1], [], []>} : vector<16x128xbf16>, vector<128x256xbf16>, vector<16x256xf32> -> vector<16x256xf32>
    %214 = vector.broadcast %19 : vector<1x256xf32> to vector<16x256xf32>
    %215 = arith.addf %213, %214 : vector<16x256xf32>
    %cst_45 = arith.constant 0.000000e+00 : f32
    %216 = vector.broadcast %cst_45 : f32 to vector<16x256xf32>
    %217 = arith.maximumf %215, %216 : vector<16x256xf32>
    %218 = arith.truncf %217 : vector<16x256xf32> to vector<16x256xbf16>
    %cst_46 = arith.constant dense<0.000000e+00> : vector<16x128xf32>
    %219 = tpu.matmul %218, %9, %cst_46 {dimension_numbers = #tpu.dot_dimension_numbers<[1], [0], [0], [1], [0, 0, 1, 1], [], []>} : vector<16x256xbf16>, vector<256x128xbf16>, vector<16x128xf32> -> vector<16x128xf32>
    %220 = vector.broadcast %20 : vector<1x128xf32> to vector<16x128xf32>
    %221 = arith.addf %219, %220 : vector<16x128xf32>
    %222 = arith.addf %211, %221 : vector<16x128xf32>
    %cst_47 = arith.constant dense<0.000000e+00> : vector<16xf32>
    %223 = vector.multi_reduction <add>, %222, %cst_47 [1] : vector<16x128xf32> to vector<16xf32>
    %224 = vector.shape_cast %223 : vector<16xf32> to vector<16x1xf32>
    %cst_48 = arith.constant 1.280000e+02 : f32
    %225 = vector.broadcast %cst_48 : f32 to vector<16x1xf32>
    %226 = arith.divf %224, %225 : vector<16x1xf32>
    %227 = vector.broadcast %226 : vector<16x1xf32> to vector<16x128xf32>
    %228 = arith.subf %222, %227 : vector<16x128xf32>
    %229 = arith.mulf %228, %228 : vector<16x128xf32>
    %cst_49 = arith.constant dense<0.000000e+00> : vector<16xf32>
    %230 = vector.multi_reduction <add>, %229, %cst_49 [1] : vector<16x128xf32> to vector<16xf32>
    %231 = vector.shape_cast %230 : vector<16xf32> to vector<16x1xf32>
    %cst_50 = arith.constant 1.280000e+02 : f32
    %232 = vector.broadcast %cst_50 : f32 to vector<16x1xf32>
    %233 = arith.divf %231, %232 : vector<16x1xf32>
    %cst_51 = arith.constant 9.99999974E-6 : f32
    %234 = vector.broadcast %cst_51 : f32 to vector<16x1xf32>
    %235 = arith.addf %233, %234 : vector<16x1xf32>
    %236 = math.rsqrt %235 : vector<16x1xf32>
    %237 = vector.broadcast %236 : vector<16x1xf32> to vector<16x128xf32>
    %238 = arith.mulf %228, %237 : vector<16x128xf32>
    %239 = vector.broadcast %21 : vector<1x128xf32> to vector<16x128xf32>
    %240 = arith.mulf %238, %239 : vector<16x128xf32>
    %241 = vector.broadcast %22 : vector<1x128xf32> to vector<16x128xf32>
    %242 = arith.addf %240, %241 : vector<16x128xf32>
    %c0_52 = arith.constant 0 : index
    %c0_53 = arith.constant 0 : index
    %243 = vector.load %arg7[%c0_52, %c0_53] : memref<16x128xf32, #tpu.memory_space<vmem>>, vector<16x128xf32>
    tpu.vector_store %arg7[%c0_52, %c0_53], %242 {strides = array<i32>} : memref<16x128xf32, #tpu.memory_space<vmem>>, vector<16x128xf32>,
    return
  }
}

</mosaic_0001>

<llo_original>
// kernel: decoder_layer.1
$region0: #{decoder_layer.1}
  #allocation0 [shape = 'u32[]', space=smem, size = 0x4, offset = 0x4, fixed_abs, tag = 'smem constant byte address 0x4 - core index']
  #allocation1 [shape = 'u32[144,128]{1,0:T(1,128)}', space=vmem, size = 0x12000, scoped, tag = 'internal scratch']
  %s0 = inlined_call_operand.vmem [shape: f32[16,128], index: 0, kind: input, shape index: {}]
  %s1 = inlined_call_operand.vmem [shape: f32[16,128], index: 1, kind: input, shape index: {}]
  %s2 = inlined_call_operand.vmem [shape: f32[2,8,8], index: 2, kind: input, shape index: {}]
  %s3 = inlined_call_operand.vmem [shape: f32[2,8,8], index: 3, kind: input, shape index: {}]
  %s4 = inlined_call_operand.hbm [shape: bf16[128,1280], index: 4, kind: input, shape index: {}]
  %s5 = inlined_call_operand.hbm [shape: bf16[256,128], index: 5, kind: input, shape index: {}]
  %s6 = inlined_call_operand.vmem [shape: f32[13,384], index: 6, kind: input, shape index: {}]
  %s7 = inlined_call_operand.hbm [shape: f32[16,128], index: 7, kind: output, shape index: {}]
  %s8 = sld [smem:[#allocation0]]
  $region46: #{decoder_layer.1} parent=0
    _
  %s10 = ssub.s32 1, %s8
  %s11 = scalar_select 0, %s10, %s8
  $region1: #{decoder_layer.1} parent=0
    #allocation2 [shape = 'u8[327680]{0}', space=vmem, size = 0x50000, scoped, tag = 'input window, operand 4, single buffered']
    #allocation3 [shape = 's32[1]{0}', space=sflag, size = 0x4, scoped, tag = 'scoped memory for decoder_layer.1']
    #allocation4 [shape = 's32[1]{0}', space=sflag, size = 0x4, scoped, tag = 'scoped memory for decoder_layer.1']
    #allocation5 [shape = 'u8[65536]{0}', space=vmem, size = 0x10000, scoped, tag = 'input window, operand 5, single buffered']
    #allocation6 [shape = 's32[1]{0}', space=sflag, size = 0x4, scoped, tag = 'scoped memory for decoder_layer.1']
    #allocation7 [shape = 'u8[8192]{0}', space=vmem, size = 0x2000, scoped, tag = 'output window, operand 0, single buffered']
    %12 = vsyncpa [#allocation3], 0
    %13 = vsyncpa [#allocation6], 0
    %14 = vsyncpa [#allocation4], 0
    // Predicated region
    $region2: #{decoder_layer.1} parent=1 // pred_check
      _
    $region3: #{decoder_layer.1} parent=1 // pred_check_branch
      %16 = sbr.rel (0) target = $region5
    $region4: #{decoder_layer.1} parent=1 // pred_region
      _
    $region5: #{decoder_layer.1} parent=1 // pred_fallthru
      _
    // Predicated region
    $region6: #{decoder_layer.1} parent=1 // pred_check
      _
    $region7: #{decoder_layer.1} parent=1 // pred_check_branch
      %18 = sbr.rel (0) target = $region9
    $region8: #{decoder_layer.1} parent=1 // pred_region
      _
    $region9: #{decoder_layer.1} parent=1 // pred_fallthru
      _
    // Predicated region
    $region10: #{decoder_layer.1} parent=1 // pred_check
      _
    $region11: #{decoder_layer.1} parent=1 // pred_check_branch
      %20 = sbr.rel (0) target = $region13
    $region12: #{decoder_layer.1} parent=1 // pred_region
      _
    $region13: #{decoder_layer.1} parent=1 // pred_fallthru
      _
    // Predicated region
    $region14: #{decoder_layer.1} parent=1 // pred_check
      _
    $region15: #{decoder_layer.1} parent=1 // pred_check_branch
      %22 = sbr.rel (0) target = $region17
    $region16: #{decoder_layer.1} parent=1 // pred_region
      _
    $region17: #{decoder_layer.1} parent=1 // pred_fallthru
      _
    // Predicated region
    $region18: #{decoder_layer.1} parent=1 // pred_check
      _
    $region19: #{decoder_layer.1} parent=1 // pred_check_branch
      %24 = sbr.rel (0) target = $region21
    $region20: #{decoder_layer.1} parent=1 // pred_region
      %s26 = ssub.s32 10240, 10240
      %27 = vsyncadd [#allocation3], %s26
      %s28 = sshll.u32 [#allocation2], 4
      %s29 = int_to_ptr.vmem [resolvable:$true] %s28
      %34 = dma.hbm_to_vmem [thread:$0]  %s4, 10240, %s29, [#allocation3], 640, 640, 40
    $region21: #{decoder_layer.1} parent=1 // pred_fallthru
      _
    // Predicated region
    $region22: #{decoder_layer.1} parent=1 // pred_check
      _
    $region23: #{decoder_layer.1} parent=1 // pred_check_branch
      %36 = sbr.rel (0) target = $region25
    $region24: #{decoder_layer.1} parent=1 // pred_region
      %s38 = ssub.s32 2048, 2048
      %39 = vsyncadd [#allocation6], %s38
      %s40 = sshll.u32 [#allocation5], 4
      %s41 = int_to_ptr.vmem [resolvable:$true] %s40
      %46 = dma.hbm_to_vmem [thread:$0]  %s5, 2048, %s41, [#allocation6], 64, 64, 4
    $region25: #{decoder_layer.1} parent=1 // pred_fallthru
      _
    // Predicated region
    $region26: #{decoder_layer.1} parent=1 // pred_check
      _
    $region27: #{decoder_layer.1} parent=1 // pred_check_branch
      %48 = sbr.rel (0) target = $region29
    $region28: #{decoder_layer.1} parent=1 // pred_region
      _
    $region29: #{decoder_layer.1} parent=1 // pred_fallthru
      _
    // Predicated region
    $region30: #{decoder_layer.1} parent=1 // pred_check
      _
    $region31: #{decoder_layer.1} parent=1 // pred_check_branch
      %50 = sbr.rel (0) target = $region33
    $region32: #{decoder_layer.1} parent=1 // pred_region
      %51 = dma.done [#allocation3], 10240
    $region33: #{decoder_layer.1} parent=1 // pred_fallthru
      _
    // Predicated region
    $region34: #{decoder_layer.1} parent=1 // pred_check
      _
    $region35: #{decoder_layer.1} parent=1 // pred_check_branch
      %53 = sbr.rel (0) target = $region37
    $region36: #{decoder_layer.1} parent=1 // pred_region
      %54 = dma.done [#allocation6], 2048
    $region37: #{decoder_layer.1} parent=1 // pred_fallthru
      _
    %v56 = vld [vmem:[%s0] sm:$0xff]
    %v57 = vld [vmem:[%s0 + $0x8] sm:$0xff]
    %v58 = vld [vmem:[%s1] sm:$0xff]
    %v59 = vld [vmem:[%s1 + $0x8] sm:$0xff]
    %v60 = vld [vmem:[%s6] sm:$0xff]
    %v61 = vld [vmem:[%s6 + $0x8] sm:$0xff]
    %v62 = vld [vmem:[%s6 + $0x10] sm:$0xff]
    %v63 = vld [vmem:[%s6 + $0x18] sm:$0x1f]
    %v64 = vld [vmem:[%s6 + $0x20] sm:$0x1f]
    %v65 = vld [vmem:[#allocation2] sm:$0xff]
    %v66 = vld [vmem:[#allocation2 + $0x8] sm:$0xf]
    %v67 = vld [vmem:[#allocation2 + $0x28] sm:$0xff]
    %v68 = vld [vmem:[#allocation2 + $0x30] sm:$0xf]
    %v69 = vld [vmem:[#allocation2 + $0x50] sm:$0xff]
    %v70 = vld [vmem:[#allocation2 + $0x58] sm:$0xf]
    %v71 = vld [vmem:[#allocation2 + $0x78] sm:$0xff]
    %v72 = vld [vmem:[#allocation2 + $0x80] sm:$0xf]
    %v73 = vld [vmem:[#allocation2 + $0xa0] sm:$0xff]
    %v74 = vld [vmem:[#allocation2 + $0xa8] sm:$0xf]
    %v75 = vld [vmem:[#allocation2 + $0xc8] sm:$0xff]
    %v76 = vld [vmem:[#allocation2 + $0xd0] sm:$0xf]
    %v77 = vld [vmem:[#allocation2 + $0xf0] sm:$0xff]
    %v78 = vld [vmem:[#allocation2 + $0xf8] sm:$0xf]
    %v79 = vld [vmem:[#allocation2 + $0x118] sm:$0xff]
    %v80 = vld [vmem:[#allocation2 + $0x120] sm:$0xf]
    %v81 = vld [vmem:[#allocation2 + $0x140] sm:$0xff]
    %v82 = vld [vmem:[#allocation2 + $0x148] sm:$0xf]
    %v83 = vld [vmem:[#allocation2 + $0x168] sm:$0xff]
    %v84 = vld [vmem:[#allocation2 + $0x170] sm:$0xf]
    %v85 = vld [vmem:[#allocation2 + $0x190] sm:$0xff]
    %v86 = vld [vmem:[#allocation2 + $0x198] sm:$0xf]
    %v87 = vld [vmem:[#allocation2 + $0x1b8] sm:$0xff]
    %v88 = vld [vmem:[#allocation2 + $0x1c0] sm:$0xf]
    %v89 = vld [vmem:[#allocation2 + $0x1e0] sm:$0xff]
    %v90 = vld [vmem:[#allocation2 + $0x1e8] sm:$0xf]
    %v91 = vld [vmem:[#allocation2 + $0x208] sm:$0xff]
    %v92 = vld [vmem:[#allocation2 + $0x210] sm:$0xf]
    %v93 = vld [vmem:[#allocation2 + $0x230] sm:$0xff]
    %v94 = vld [vmem:[#allocation2 + $0x238] sm:$0xf]
    %v95 = vld [vmem:[#allocation2 + $0x258] sm:$0xff]
    %v96 = vld [vmem:[#allocation2 + $0x260] sm:$0xf]
    %v97 = vld [vmem:[#allocation2 + $0xc] sm:$0xf]
    %v98 = vld [vmem:[#allocation2 + $0x34] sm:$0xf]
    %v99 = vld [vmem:[#allocation2 + $0x5c] sm:$0xf]
    %v100 = vld [vmem:[#allocation2 + $0x84] sm:$0xf]
    %v101 = vld [vmem:[#allocation2 + $0xac] sm:$0xf]
    %v102 = vld [vmem:[#allocation2 + $0xd4] sm:$0xf]
    %v103 = vld [vmem:[#allocation2 + $0xfc] sm:$0xf]
    %v104 = vld [vmem:[#allocation2 + $0x124] sm:$0xf]
    %v105 = vld [vmem:[#allocation2 + $0x14c] sm:$0xf]
    %v106 = vld [vmem:[#allocation2 + $0x174] sm:$0xf]
    %v107 = vld [vmem:[#allocation2 + $0x19c] sm:$0xf]
    %v108 = vld [vmem:[#allocation2 + $0x1c4] sm:$0xf]
    %v109 = vld [vmem:[#allocation2 + $0x1ec] sm:$0xf]
    %v110 = vld [vmem:[#allocation2 + $0x214] sm:$0xf]
    %v111 = vld [vmem:[#allocation2 + $0x23c] sm:$0xf]
    %v112 = vld [vmem:[#allocation2 + $0x264] sm:$0xf]
    %v113 = vld [vmem:[#allocation2 + $0x10] sm:$0xf]
    %v114 = vld [vmem:[#allocation2 + $0x38] sm:$0xf]
    %v115 = vld [vmem:[#allocation2 + $0x60] sm:$0xf]
    %v116 = vld [vmem:[#allocation2 + $0x88] sm:$0xf]
    %v117 = vld [vmem:[#allocation2 + $0xb0] sm:$0xf]
    %v118 = vld [vmem:[#allocation2 + $0xd8] sm:$0xf]
    %v119 = vld [vmem:[#allocation2 + $0x100] sm:$0xf]
    %v120 = vld [vmem:[#allocation2 + $0x128] sm:$0xf]
    %v121 = vld [vmem:[#allocation2 + $0x150] sm:$0xf]
    %v122 = vld [vmem:[#allocation2 + $0x178] sm:$0xf]
    %v123 = vld [vmem:[#allocation2 + $0x1a0] sm:$0xf]
    %v124 = vld [vmem:[#allocation2 + $0x1c8] sm:$0xf]
    %v125 = vld [vmem:[#allocation2 + $0x1f0] sm:$0xf]
    %v126 = vld [vmem:[#allocation2 + $0x218] sm:$0xf]
    %v127 = vld [vmem:[#allocation2 + $0x240] sm:$0xf]
    %v128 = vld [vmem:[#allocation2 + $0x268] sm:$0xf]
    %v129 = vld [vmem:[#allocation2 + $0x14] sm:$0xff]
    %v130 = vld [vmem:[#allocation2 + $0x3c] sm:$0xff]
    %v131 = vld [vmem:[#allocation2 + $0x64] sm:$0xff]
    %v132 = vld [vmem:[#allocation2 + $0x8c] sm:$0xff]
    %v133 = vld [vmem:[#allocation2 + $0xb4] sm:$0xff]
    %v134 = vld [vmem:[#allocation2 + $0xdc] sm:$0xff]
    %v135 = vld [vmem:[#allocation2 + $0x104] sm:$0xff]
    %v136 = vld [vmem:[#allocation2 + $0x12c] sm:$0xff]
    %v137 = vld [vmem:[#allocation2 + $0x154] sm:$0xff]
    %v138 = vld [vmem:[#allocation2 + $0x17c] sm:$0xff]
    %v139 = vld [vmem:[#allocation2 + $0x1a4] sm:$0xff]
    %v140 = vld [vmem:[#allocation2 + $0x1cc] sm:$0xff]
    %v141 = vld [vmem:[#allocation2 + $0x1f4] sm:$0xff]
    %v142 = vld [vmem:[#allocation2 + $0x21c] sm:$0xff]
    %v143 = vld [vmem:[#allocation2 + $0x244] sm:$0xff]
    %v144 = vld [vmem:[#allocation2 + $0x26c] sm:$0xff]
    %v145 = vld [vmem:[#allocation2 + $0x1c] sm:$0xf]
    %v146 = vld [vmem:[#allocation2 + $0x44] sm:$0xf]
    %v147 = vld [vmem:[#allocation2 + $0x6c] sm:$0xf]
    %v148 = vld [vmem:[#allocation2 + $0x94] sm:$0xf]
    %v149 = vld [vmem:[#allocation2 + $0xbc] sm:$0xf]
    %v150 = vld [vmem:[#allocation2 + $0xe4] sm:$0xf]
    %v151 = vld [vmem:[#allocation2 + $0x10c] sm:$0xf]
    %v152 = vld [vmem:[#allocation2 + $0x134] sm:$0xf]
    %v153 = vld [vmem:[#allocation2 + $0x15c] sm:$0xf]
    %v154 = vld [vmem:[#allocation2 + $0x184] sm:$0xf]
    %v155 = vld [vmem:[#allocation2 + $0x1ac] sm:$0xf]
    %v156 = vld [vmem:[#allocation2 + $0x1d4] sm:$0xf]
    %v157 = vld [vmem:[#allocation2 + $0x1fc] sm:$0xf]
    %v158 = vld [vmem:[#allocation2 + $0x224] sm:$0xf]
    %v159 = vld [vmem:[#allocation2 + $0x24c] sm:$0xf]
    %v160 = vld [vmem:[#allocation2 + $0x274] sm:$0xf]
    %v161 = vld [vmem:[#allocation2 + $0x20] sm:$0xff]
    %v162 = vld [vmem:[#allocation2 + $0x48] sm:$0xff]
    %v163 = vld [vmem:[#allocation2 + $0x70] sm:$0xff]
    %v164 = vld [vmem:[#allocation2 + $0x98] sm:$0xff]
    %v165 = vld [vmem:[#allocation2 + $0xc0] sm:$0xff]
    %v166 = vld [vmem:[#allocation2 + $0xe8] sm:$0xff]
    %v167 = vld [vmem:[#allocation2 + $0x110] sm:$0xff]
    %v168 = vld [vmem:[#allocation2 + $0x138] sm:$0xff]
    %v169 = vld [vmem:[#allocation2 + $0x160] sm:$0xff]
    %v170 = vld [vmem:[#allocation2 + $0x188] sm:$0xff]
    %v171 = vld [vmem:[#allocation2 + $0x1b0] sm:$0xff]
    %v172 = vld [vmem:[#allocation2 + $0x1d8] sm:$0xff]
    %v173 = vld [vmem:[#allocation2 + $0x200] sm:$0xff]
    %v174 = vld [vmem:[#allocation2 + $0x228] sm:$0xff]
    %v175 = vld [vmem:[#allocation2 + $0x250] sm:$0xff]
    %v176 = vld [vmem:[#allocation2 + $0x278] sm:$0xff]
    %v177 = vld [vmem:[#allocation5] sm:$0xf]
    %v178 = vld [vmem:[#allocation5 + $0x4] sm:$0xf]
    %v179 = vld [vmem:[#allocation5 + $0x8] sm:$0xf]
    %v180 = vld [vmem:[#allocation5 + $0xc] sm:$0xf]
    %v181 = vld [vmem:[#allocation5 + $0x10] sm:$0xf]
    %v182 = vld [vmem:[#allocation5 + $0x14] sm:$0xf]
    %v183 = vld [vmem:[#allocation5 + $0x18] sm:$0xf]
    %v184 = vld [vmem:[#allocation5 + $0x1c] sm:$0xf]
    %v185 = vld [vmem:[#allocation5 + $0x20] sm:$0xf]
    %v186 = vld [vmem:[#allocation5 + $0x24] sm:$0xf]
    %v187 = vld [vmem:[#allocation5 + $0x28] sm:$0xf]
    %v188 = vld [vmem:[#allocation5 + $0x2c] sm:$0xf]
    %v189 = vld [vmem:[#allocation5 + $0x30] sm:$0xf]
    %v190 = vld [vmem:[#allocation5 + $0x34] sm:$0xf]
    %v191 = vld [vmem:[#allocation5 + $0x38] sm:$0xf]
    %v192 = vld [vmem:[#allocation5 + $0x3c] sm:$0xf]
    %v193 = vld [vmem:[#allocation5 + $0x40] sm:$0xf]
    %v194 = vld [vmem:[#allocation5 + $0x44] sm:$0xf]
    %v195 = vld [vmem:[#allocation5 + $0x48] sm:$0xf]
    %v196 = vld [vmem:[#allocation5 + $0x4c] sm:$0xf]
    %v197 = vld [vmem:[#allocation5 + $0x50] sm:$0xf]
    %v198 = vld [vmem:[#allocation5 + $0x54] sm:$0xf]
    %v199 = vld [vmem:[#allocation5 + $0x58] sm:$0xf]
    %v200 = vld [vmem:[#allocation5 + $0x5c] sm:$0xf]
    %v201 = vld [vmem:[#allocation5 + $0x60] sm:$0xf]
    %v202 = vld [vmem:[#allocation5 + $0x64] sm:$0xf]
    %v203 = vld [vmem:[#allocation5 + $0x68] sm:$0xf]
    %v204 = vld [vmem:[#allocation5 + $0x6c] sm:$0xf]
    %v205 = vld [vmem:[#allocation5 + $0x70] sm:$0xf]
    %v206 = vld [vmem:[#allocation5 + $0x74] sm:$0xf]
    %v207 = vld [vmem:[#allocation5 + $0x78] sm:$0xf]
    %v208 = vld [vmem:[#allocation5 + $0x7c] sm:$0xf]
    %v209 = vpack.c.bf16 %v57, %v56
    %v210 = vlaneseq
    %v211 = vshrl.u32 %v210, 7
    %v212 = vsub.s32 0, %v211
    %v213 = vrot.slane %v60, %v212
    %v214 = vlaneseq
    %v215 = vshrl.u32 %v214, 7
    %v216 = vsub.s32 0, %v215
    %v217 = vrot.slane %v61, %v216
    %v218 = vlaneseq
    %v219 = vshrl.u32 %v218, 7
    %v220 = vsub.s32 0, %v219
    %v221 = vrot.slane %v62, %v220
    %v254 = vunpack.c.l.b16 %v65
    %v255 = vunpack.c.h.b16 %v65
    %v256 = vunpack.c.l.b16 %v66
    %v257 = vunpack.c.l.b16 %v67
    %v258 = vunpack.c.h.b16 %v67
    %v259 = vunpack.c.l.b16 %v68
    %v260 = vunpack.c.l.b16 %v69
    %v261 = vunpack.c.h.b16 %v69
    %v262 = vunpack.c.l.b16 %v70
    %v263 = vunpack.c.l.b16 %v71
    %v264 = vunpack.c.h.b16 %v71
    %v265 = vunpack.c.l.b16 %v72
    %v266 = vunpack.c.l.b16 %v73
    %v267 = vunpack.c.h.b16 %v73
    %v268 = vunpack.c.l.b16 %v74
    %v269 = vunpack.c.l.b16 %v75
    %v270 = vunpack.c.h.b16 %v75
    %v271 = vunpack.c.l.b16 %v76
    %v272 = vunpack.c.l.b16 %v77
    %v273 = vunpack.c.h.b16 %v77
    %v274 = vunpack.c.l.b16 %v78
    %v275 = vunpack.c.l.b16 %v79
    %v276 = vunpack.c.h.b16 %v79
    %v277 = vunpack.c.l.b16 %v80
    %v278 = vunpack.c.l.b16 %v81
    %v279 = vunpack.c.h.b16 %v81
    %v280 = vunpack.c.l.b16 %v82
    %v281 = vunpack.c.l.b16 %v83
    %v282 = vunpack.c.h.b16 %v83
    %v283 = vunpack.c.l.b16 %v84
    %v284 = vunpack.c.l.b16 %v85
    %v285 = vunpack.c.h.b16 %v85
    %v286 = vunpack.c.l.b16 %v86
    %v287 = vunpack.c.l.b16 %v87
    %v288 = vunpack.c.h.b16 %v87
    %v289 = vunpack.c.l.b16 %v88
    %v290 = vunpack.c.l.b16 %v89
    %v291 = vunpack.c.h.b16 %v89
    %v292 = vunpack.c.l.b16 %v90
    %v293 = vunpack.c.l.b16 %v91
    %v294 = vunpack.c.h.b16 %v91
    %v295 = vunpack.c.l.b16 %v92
    %v296 = vunpack.c.l.b16 %v93
    %v297 = vunpack.c.h.b16 %v93
    %v298 = vunpack.c.l.b16 %v94
    %v299 = vunpack.c.l.b16 %v95
    %v300 = vunpack.c.h.b16 %v95
    %v301 = vunpack.c.l.b16 %v96
    %v302 = vpack.c.b16 %v257, %v254
    %v303 = vpack.c.b16 %v258, %v255
    %v304 = vpack.c.b16 %v259, %v256
    %v305 = vpack.c.b16 %v263, %v260
    %v306 = vpack.c.b16 %v264, %v261
    %v307 = vpack.c.b16 %v265, %v262
    %v308 = vpack.c.b16 %v269, %v266
    %v309 = vpack.c.b16 %v270, %v267
    %v310 = vpack.c.b16 %v271, %v268
    %v311 = vpack.c.b16 %v275, %v272
    %v312 = vpack.c.b16 %v276, %v273
    %v313 = vpack.c.b16 %v277, %v274
    %v314 = vpack.c.b16 %v281, %v278
    %v315 = vpack.c.b16 %v282, %v279
    %v316 = vpack.c.b16 %v283, %v280
    %v317 = vpack.c.b16 %v287, %v284
    %v318 = vpack.c.b16 %v288, %v285
    %v319 = vpack.c.b16 %v289, %v286
    %v320 = vpack.c.b16 %v293, %v290
    %v321 = vpack.c.b16 %v294, %v291
    %v322 = vpack.c.b16 %v295, %v292
    %v323 = vpack.c.b16 %v299, %v296
    %v324 = vpack.c.b16 %v300, %v297
    %v325 = vpack.c.b16 %v301, %v298
    %350 = vmatprep.subr.bf16.mxu0 %v303
    %351 = vmatpush1.bf16.msra.mxu0 %v302
    %352 = vmatprep.subr.bf16.mxu0 %v306
    %353 = vmatpush1.bf16.msra.mxu0 %v305
    %354 = vmatprep.subr.bf16.mxu0 %v309
    %355 = vmatpush1.bf16.msra.mxu0 %v308
    %356 = vmatprep.subr.bf16.mxu0 %v312
    %357 = vmatpush1.bf16.msra.mxu0 %v311
    %358 = vmatprep.subr.bf16.mxu0 %v315
    %359 = vmatpush1.bf16.msra.mxu0 %v314
    %360 = vmatprep.subr.bf16.mxu0 %v318
    %361 = vmatpush1.bf16.msra.mxu0 %v317
    %362 = vmatprep.subr.bf16.mxu0 %v321
    %363 = vmatpush1.bf16.msra.mxu0 %v320
    %364 = vmatprep.subr.bf16.mxu0 %v324
    %365 = vmatpush1.bf16.msra.mxu0 %v323
    %366 = vmatprep.subr.bf16.mxu0 0
    %367 = vmatpush1.bf16.msra.mxu0 0
    %368 = vmatprep.subr.bf16.mxu0 0
    %369 = vmatpush1.bf16.msra.mxu0 0
    %370 = vmatprep.subr.bf16.mxu0 0
    %371 = vmatpush1.bf16.msra.mxu0 0
    %372 = vmatprep.subr.bf16.mxu0 0
    %373 = vmatpush1.bf16.msra.mxu0 0
    %374 = vmatprep.subr.bf16.mxu0 0
    %375 = vmatpush1.bf16.msra.mxu0 0
    %376 = vmatprep.subr.bf16.mxu0 0
    %377 = vmatpush1.bf16.msra.mxu0 0
    %378 = vmatprep.subr.bf16.mxu0 0
    %379 = vmatpush1.bf16.msra.mxu0 0
    %380 = vmatprep.subr.bf16.mxu0 0
    %381 = vmatpush1.bf16.msra.mxu0 0
    %382 = vmatprep.mubr.bf16.mxu0 0
    %383 = vmatmul.mubr.bf16.gmra.mrb[0].mxu0 %v209
    %v384 = vpop.f32.mrb[0].mxu0
    %v385 = vadd.f32 %v213, %v384
    %v386 = vpop.f32.mrb[0].mxu0
    %v387 = vadd.f32 %v217, %v386
    %v388 = vpop.f32.mrb[0].mxu0
    %v389 = vadd.f32 %v213, %v388
    %v390 = vpop.f32.mrb[0].mxu0
    %v391 = vadd.f32 %v217, %v390
    %392 = vdwg.mxu0
    %393 = vmatprep.subr.bf16.mxu0 0
    %394 = vmatpush1.bf16.msra.mxu0 %v304
    %395 = vmatprep.subr.bf16.mxu0 0
    %396 = vmatpush1.bf16.msra.mxu0 %v307
    %397 = vmatprep.subr.bf16.mxu0 0
    %398 = vmatpush1.bf16.msra.mxu0 %v310
    %399 = vmatprep.subr.bf16.mxu0 0
    %400 = vmatpush1.bf16.msra.mxu0 %v313
    %401 = vmatprep.subr.bf16.mxu0 0
    %402 = vmatpush1.bf16.msra.mxu0 %v316
    %403 = vmatprep.subr.bf16.mxu0 0
    %404 = vmatpush1.bf16.msra.mxu0 %v319
    %405 = vmatprep.subr.bf16.mxu0 0
    %406 = vmatpush1.bf16.msra.mxu0 %v322
    %407 = vmatprep.subr.bf16.mxu0 0
    %408 = vmatpush1.bf16.msra.mxu0 %v325
    %409 = vmatprep.subr.bf16.mxu0 0
    %410 = vmatpush1.bf16.msra.mxu0 0
    %411 = vmatprep.subr.bf16.mxu0 0
    %412 = vmatpush1.bf16.msra.mxu0 0
    %413 = vmatprep.subr.bf16.mxu0 0
    %414 = vmatpush1.bf16.msra.mxu0 0
    %415 = vmatprep.subr.bf16.mxu0 0
    %416 = vmatpush1.bf16.msra.mxu0 0
    %417 = vmatprep.subr.bf16.mxu0 0
    %418 = vmatpush1.bf16.msra.mxu0 0
    %419 = vmatprep.subr.bf16.mxu0 0
    %420 = vmatpush1.bf16.msra.mxu0 0
    %421 = vmatprep.subr.bf16.mxu0 0
    %422 = vmatpush1.bf16.msra.mxu0 0
    %423 = vmatprep.subr.bf16.mxu0 0
    %424 = vmatpush1.bf16.msra.mxu0 0
    %425 = vmatprep.mubr.bf16.mxu0 0
    %426 = vmatmul.mubr.bf16.gmra.mrb[0].mxu0 %v209
    %v427 = vpop.f32.mrb[0].mxu0
    %v428 = vadd.f32 %v221, %v427
    %v429 = vpop.f32.mrb[0].mxu0
    %v430 = vpop.f32.mrb[0].mxu0
    %v431 = vadd.f32 %v221, %v430
    %v432 = vpop.f32.mrb[0].mxu0
    %433 = vdwg.mxu0
    %v434 = vld [vmem:[%s2] sm:$0xff]
    %v435 = vld [vmem:[%s2 + $0x8] sm:$0xff]
    %438 = vrot.lane.b32.xlu0 %v385, 96
    %v439 = vpop.permute.xlu0 %438
    %440 = vrot.lane.b32.xlu0 %v389, 96
    %v441 = vpop.permute.xlu0 %440
    %444 = vrot.lane.b32.xlu0 %v385, 64
    %v445 = vpop.permute.xlu0 %444
    %446 = vrot.lane.b32.xlu0 %v389, 64
    %v447 = vpop.permute.xlu0 %446
    %450 = vrot.lane.b32.xlu0 %v385, 32
    %v451 = vpop.permute.xlu0 %450
    %452 = vrot.lane.b32.xlu0 %v389, 32
    %v453 = vpop.permute.xlu0 %452
    %v456 = vpack.c.bf16 %v385, %v385
    %v457 = vpack.c.bf16 %v389, %v389
    %v458 = vpack.c.bf16 %v439, %v439
    %v459 = vpack.c.bf16 %v441, %v441
    %v460 = vpack.c.bf16 %v445, %v445
    %v461 = vpack.c.bf16 %v447, %v447
    %v462 = vpack.c.bf16 %v451, %v451
    %v463 = vpack.c.bf16 %v453, %v453
    %466 = vrot.lane.b32.xlu0 %v387, 96
    %v467 = vpop.permute.xlu0 %466
    %468 = vrot.lane.b32.xlu0 %v391, 96
    %v469 = vpop.permute.xlu0 %468
    %472 = vrot.lane.b32.xlu0 %v387, 64
    %v473 = vpop.permute.xlu0 %472
    %474 = vrot.lane.b32.xlu0 %v391, 64
    %v475 = vpop.permute.xlu0 %474
    %478 = vrot.lane.b32.xlu0 %v387, 32
    %v479 = vpop.permute.xlu0 %478
    %480 = vrot.lane.b32.xlu0 %v391, 32
    %v481 = vpop.permute.xlu0 %480
    %v484 = vpack.c.bf16 %v387, %v387
    %v485 = vpack.c.bf16 %v391, %v391
    %v486 = vpack.c.bf16 %v467, %v467
    %v487 = vpack.c.bf16 %v469, %v469
    %v488 = vpack.c.bf16 %v473, %v473
    %v489 = vpack.c.bf16 %v475, %v475
    %v490 = vpack.c.bf16 %v479, %v479
    %v491 = vpack.c.bf16 %v481, %v481
    %494 = vrot.lane.b32.xlu0 %v428, 96
    %v495 = vpop.permute.xlu0 %494
    %496 = vrot.lane.b32.xlu0 %v431, 96
    %v497 = vpop.permute.xlu0 %496
    %500 = vrot.lane.b32.xlu0 %v428, 64
    %v501 = vpop.permute.xlu0 %500
    %502 = vrot.lane.b32.xlu0 %v431, 64
    %v503 = vpop.permute.xlu0 %502
    %506 = vrot.lane.b32.xlu0 %v428, 32
    %v507 = vpop.permute.xlu0 %506
    %508 = vrot.lane.b32.xlu0 %v431, 32
    %v509 = vpop.permute.xlu0 %508
    %v512 = vpack.c.bf16 %v428, %v428
    %v513 = vpack.c.bf16 %v431, %v431
    %v514 = vpack.c.bf16 %v495, %v495
    %v515 = vpack.c.bf16 %v497, %v497
    %v516 = vpack.c.bf16 %v501, %v501
    %v517 = vpack.c.bf16 %v503, %v503
    %v518 = vpack.c.bf16 %v507, %v507
    %v519 = vpack.c.bf16 %v509, %v509
    %vm520 = vcmask 261120
    %v522 = vsel %vm520, %v456, 0
    %v525 = vsel %vm520, %v484, 0
    %527 = vmatprep.subr.bf16.mxu0 0
    %528 = vmatpush1.bf16.xpose.msra.mxu0 %v525
    %529 = vmatprep.subr.bf16.mxu0 0
    %530 = vmatpush1.bf16.xpose.msra.mxu0 0
    %531 = vmatprep.subr.bf16.mxu0 0
    %532 = vmatpush1.bf16.xpose.msra.mxu0 0
    %533 = vmatprep.subr.bf16.mxu0 0
    %534 = vmatpush1.bf16.xpose.msra.mxu0 0
    %535 = vmatprep.subr.bf16.mxu0 0
    %536 = vmatpush1.bf16.xpose.msra.mxu0 0
    %537 = vmatprep.subr.bf16.mxu0 0
    %538 = vmatpush1.bf16.xpose.msra.mxu0 0
    %539 = vmatprep.subr.bf16.mxu0 0
    %540 = vmatpush1.bf16.xpose.msra.mxu0 0
    %541 = vmatprep.subr.bf16.mxu0 0
    %542 = vmatpush1.bf16.xpose.msra.mxu0 0
    %543 = vmatprep.subr.bf16.mxu0 0
    %544 = vmatpush1.bf16.xpose.msra.mxu0 0
    %545 = vmatprep.subr.bf16.mxu0 0
    %546 = vmatpush1.bf16.xpose.msra.mxu0 0
    %547 = vmatprep.subr.bf16.mxu0 0
    %548 = vmatpush1.bf16.xpose.msra.mxu0 0
    %549 = vmatprep.subr.bf16.mxu0 0
    %550 = vmatpush1.bf16.xpose.msra.mxu0 0
    %551 = vmatprep.subr.bf16.mxu0 0
    %552 = vmatpush1.bf16.xpose.msra.mxu0 0
    %553 = vmatprep.subr.bf16.mxu0 0
    %554 = vmatpush1.bf16.xpose.msra.mxu0 0
    %555 = vmatprep.subr.bf16.mxu0 0
    %556 = vmatpush1.bf16.xpose.msra.mxu0 0
    %557 = vmatprep.subr.bf16.mxu0 0
    %558 = vmatpush1.bf16.xpose.msra.mxu0 0
    %559 = vmatprep.mubr.bf16.mxu0 0
    %560 = vmatmul.mubr.bf16.gmra.mrb[0].mxu0 %v522
    %v561 = vpop.f32.mrb[0].mxu0
    %v562 = vadd.f32 0.0, %v561
    %v563 = vpop.f32.mrb[0].mxu0
    %v564 = vpop.f32.mrb[0].mxu0
    %v565 = vpop.f32.mrb[0].mxu0
    %566 = vdwg.mxu0
    %v568 = vsel %vm520, %v457, 0
    %v571 = vsel %vm520, %v485, 0
    %573 = vmatprep.subr.bf16.mxu0 0
    %574 = vmatpush1.bf16.xpose.msra.mxu0 %v571
    %575 = vmatprep.subr.bf16.mxu0 0
    %576 = vmatpush1.bf16.xpose.msra.mxu0 0
    %577 = vmatprep.subr.bf16.mxu0 0
    %578 = vmatpush1.bf16.xpose.msra.mxu0 0
    %579 = vmatprep.subr.bf16.mxu0 0
    %580 = vmatpush1.bf16.xpose.msra.mxu0 0
    %581 = vmatprep.subr.bf16.mxu0 0
    %582 = vmatpush1.bf16.xpose.msra.mxu0 0
    %583 = vmatprep.subr.bf16.mxu0 0
    %584 = vmatpush1.bf16.xpose.msra.mxu0 0
    %585 = vmatprep.subr.bf16.mxu0 0
    %586 = vmatpush1.bf16.xpose.msra.mxu0 0
    %587 = vmatprep.subr.bf16.mxu0 0
    %588 = vmatpush1.bf16.xpose.msra.mxu0 0
    %589 = vmatprep.subr.bf16.mxu0 0
    %590 = vmatpush1.bf16.xpose.msra.mxu0 0
    %591 = vmatprep.subr.bf16.mxu0 0
    %592 = vmatpush1.bf16.xpose.msra.mxu0 0
    %593 = vmatprep.subr.bf16.mxu0 0
    %594 = vmatpush1.bf16.xpose.msra.mxu0 0
    %595 = vmatprep.subr.bf16.mxu0 0
    %596 = vmatpush1.bf16.xpose.msra.mxu0 0
    %597 = vmatprep.subr.bf16.mxu0 0
    %598 = vmatpush1.bf16.xpose.msra.mxu0 0
    %599 = vmatprep.subr.bf16.mxu0 0
    %600 = vmatpush1.bf16.xpose.msra.mxu0 0
    %601 = vmatprep.subr.bf16.mxu0 0
    %602 = vmatpush1.bf16.xpose.msra.mxu0 0
    %603 = vmatprep.subr.bf16.mxu0 0
    %604 = vmatpush1.bf16.xpose.msra.mxu0 0
    %605 = vmatprep.mubr.bf16.mxu0 0
    %606 = vmatmul.mubr.bf16.gmra.mrb[0].mxu0 %v568
    %v607 = vpop.f32.mrb[0].mxu0
    %v608 = vadd.f32 0.0, %v607
    %v609 = vpop.f32.mrb[0].mxu0
    %v610 = vpop.f32.mrb[0].mxu0
    %v611 = vpop.f32.mrb[0].mxu0
    %612 = vdwg.mxu0
    %v614 = vsel %vm520, %v458, 0
    %v617 = vsel %vm520, %v486, 0
    %619 = vmatprep.subr.bf16.mxu0 0
    %620 = vmatpush1.bf16.xpose.msra.mxu0 %v617
    %621 = vmatprep.subr.bf16.mxu0 0
    %622 = vmatpush1.bf16.xpose.msra.mxu0 0
    %623 = vmatprep.subr.bf16.mxu0 0
    %624 = vmatpush1.bf16.xpose.msra.mxu0 0
    %625 = vmatprep.subr.bf16.mxu0 0
    %626 = vmatpush1.bf16.xpose.msra.mxu0 0
    %627 = vmatprep.subr.bf16.mxu0 0
    %628 = vmatpush1.bf16.xpose.msra.mxu0 0
    %629 = vmatprep.subr.bf16.mxu0 0
    %630 = vmatpush1.bf16.xpose.msra.mxu0 0
    %631 = vmatprep.subr.bf16.mxu0 0
    %632 = vmatpush1.bf16.xpose.msra.mxu0 0
    %633 = vmatprep.subr.bf16.mxu0 0
    %634 = vmatpush1.bf16.xpose.msra.mxu0 0
    %635 = vmatprep.subr.bf16.mxu0 0
    %636 = vmatpush1.bf16.xpose.msra.mxu0 0
    %637 = vmatprep.subr.bf16.mxu0 0
    %638 = vmatpush1.bf16.xpose.msra.mxu0 0
    %639 = vmatprep.subr.bf16.mxu0 0
    %640 = vmatpush1.bf16.xpose.msra.mxu0 0
    %641 = vmatprep.subr.bf16.mxu0 0
    %642 = vmatpush1.bf16.xpose.msra.mxu0 0
    %643 = vmatprep.subr.bf16.mxu0 0
    %644 = vmatpush1.bf16.xpose.msra.mxu0 0
    %645 = vmatprep.subr.bf16.mxu0 0
    %646 = vmatpush1.bf16.xpose.msra.mxu0 0
    %647 = vmatprep.subr.bf16.mxu0 0
    %648 = vmatpush1.bf16.xpose.msra.mxu0 0
    %649 = vmatprep.subr.bf16.mxu0 0
    %650 = vmatpush1.bf16.xpose.msra.mxu0 0
    %651 = vmatprep.mubr.bf16.mxu0 0
    %652 = vmatmul.mubr.bf16.gmra.mrb[0].mxu0 %v614
    %v653 = vpop.f32.mrb[0].mxu0
    %v654 = vadd.f32 0.0, %v653
    %v655 = vpop.f32.mrb[0].mxu0
    %v656 = vpop.f32.mrb[0].mxu0
    %v657 = vpop.f32.mrb[0].mxu0
    %658 = vdwg.mxu0
    %v660 = vsel %vm520, %v459, 0
    %v663 = vsel %vm520, %v487, 0
    %665 = vmatprep.subr.bf16.mxu0 0
    %666 = vmatpush1.bf16.xpose.msra.mxu0 %v663
    %667 = vmatprep.subr.bf16.mxu0 0
    %668 = vmatpush1.bf16.xpose.msra.mxu0 0
    %669 = vmatprep.subr.bf16.mxu0 0
    %670 = vmatpush1.bf16.xpose.msra.mxu0 0
    %671 = vmatprep.subr.bf16.mxu0 0
    %672 = vmatpush1.bf16.xpose.msra.mxu0 0
    %673 = vmatprep.subr.bf16.mxu0 0
    %674 = vmatpush1.bf16.xpose.msra.mxu0 0
    %675 = vmatprep.subr.bf16.mxu0 0
    %676 = vmatpush1.bf16.xpose.msra.mxu0 0
    %677 = vmatprep.subr.bf16.mxu0 0
    %678 = vmatpush1.bf16.xpose.msra.mxu0 0
    %679 = vmatprep.subr.bf16.mxu0 0
    %680 = vmatpush1.bf16.xpose.msra.mxu0 0
    %681 = vmatprep.subr.bf16.mxu0 0
    %682 = vmatpush1.bf16.xpose.msra.mxu0 0
    %683 = vmatprep.subr.bf16.mxu0 0
    %684 = vmatpush1.bf16.xpose.msra.mxu0 0
    %685 = vmatprep.subr.bf16.mxu0 0
    %686 = vmatpush1.bf16.xpose.msra.mxu0 0
    %687 = vmatprep.subr.bf16.mxu0 0
    %688 = vmatpush1.bf16.xpose.msra.mxu0 0
    %689 = vmatprep.subr.bf16.mxu0 0
    %690 = vmatpush1.bf16.xpose.msra.mxu0 0
    %691 = vmatprep.subr.bf16.mxu0 0
    %692 = vmatpush1.bf16.xpose.msra.mxu0 0
    %693 = vmatprep.subr.bf16.mxu0 0
    %694 = vmatpush1.bf16.xpose.msra.mxu0 0
    %695 = vmatprep.subr.bf16.mxu0 0
    %696 = vmatpush1.bf16.xpose.msra.mxu0 0
    %697 = vmatprep.mubr.bf16.mxu0 0
    %698 = vmatmul.mubr.bf16.gmra.mrb[0].mxu0 %v660
    %v699 = vpop.f32.mrb[0].mxu0
    %v700 = vadd.f32 0.0, %v699
    %v701 = vpop.f32.mrb[0].mxu0
    %v702 = vpop.f32.mrb[0].mxu0
    %v703 = vpop.f32.mrb[0].mxu0
    %704 = vdwg.mxu0
    %v706 = vsel %vm520, %v460, 0
    %v709 = vsel %vm520, %v488, 0
    %711 = vmatprep.subr.bf16.mxu0 0
    %712 = vmatpush1.bf16.xpose.msra.mxu0 %v709
    %713 = vmatprep.subr.bf16.mxu0 0
    %714 = vmatpush1.bf16.xpose.msra.mxu0 0
    %715 = vmatprep.subr.bf16.mxu0 0
    %716 = vmatpush1.bf16.xpose.msra.mxu0 0
    %717 = vmatprep.subr.bf16.mxu0 0
    %718 = vmatpush1.bf16.xpose.msra.mxu0 0
    %719 = vmatprep.subr.bf16.mxu0 0
    %720 = vmatpush1.bf16.xpose.msra.mxu0 0
    %721 = vmatprep.subr.bf16.mxu0 0
    %722 = vmatpush1.bf16.xpose.msra.mxu0 0
    %723 = vmatprep.subr.bf16.mxu0 0
    %724 = vmatpush1.bf16.xpose.msra.mxu0 0
    %725 = vmatprep.subr.bf16.mxu0 0
    %726 = vmatpush1.bf16.xpose.msra.mxu0 0
    %727 = vmatprep.subr.bf16.mxu0 0
    %728 = vmatpush1.bf16.xpose.msra.mxu0 0
    %729 = vmatprep.subr.bf16.mxu0 0
    %730 = vmatpush1.bf16.xpose.msra.mxu0 0
    %731 = vmatprep.subr.bf16.mxu0 0
    %732 = vmatpush1.bf16.xpose.msra.mxu0 0
    %733 = vmatprep.subr.bf16.mxu0 0
    %734 = vmatpush1.bf16.xpose.msra.mxu0 0
    %735 = vmatprep.subr.bf16.mxu0 0
    %736 = vmatpush1.bf16.xpose.msra.mxu0 0
    %737 = vmatprep.subr.bf16.mxu0 0
    %738 = vmatpush1.bf16.xpose.msra.mxu0 0
    %739 = vmatprep.subr.bf16.mxu0 0
    %740 = vmatpush1.bf16.xpose.msra.mxu0 0
    %741 = vmatprep.subr.bf16.mxu0 0
    %742 = vmatpush1.bf16.xpose.msra.mxu0 0
    %743 = vmatprep.mubr.bf16.mxu0 0
    %744 = vmatmul.mubr.bf16.gmra.mrb[0].mxu0 %v706
    %v745 = vpop.f32.mrb[0].mxu0
    %v746 = vadd.f32 0.0, %v745
    %v747 = vpop.f32.mrb[0].mxu0
    %v748 = vpop.f32.mrb[0].mxu0
    %v749 = vpop.f32.mrb[0].mxu0
    %750 = vdwg.mxu0
    %v752 = vsel %vm520, %v461, 0
    %v755 = vsel %vm520, %v489, 0
    %757 = vmatprep.subr.bf16.mxu0 0
    %758 = vmatpush1.bf16.xpose.msra.mxu0 %v755
    %759 = vmatprep.subr.bf16.mxu0 0
    %760 = vmatpush1.bf16.xpose.msra.mxu0 0
    %761 = vmatprep.subr.bf16.mxu0 0
    %762 = vmatpush1.bf16.xpose.msra.mxu0 0
    %763 = vmatprep.subr.bf16.mxu0 0
    %764 = vmatpush1.bf16.xpose.msra.mxu0 0
    %765 = vmatprep.subr.bf16.mxu0 0
    %766 = vmatpush1.bf16.xpose.msra.mxu0 0
    %767 = vmatprep.subr.bf16.mxu0 0
    %768 = vmatpush1.bf16.xpose.msra.mxu0 0
    %769 = vmatprep.subr.bf16.mxu0 0
    %770 = vmatpush1.bf16.xpose.msra.mxu0 0
    %771 = vmatprep.subr.bf16.mxu0 0
    %772 = vmatpush1.bf16.xpose.msra.mxu0 0
    %773 = vmatprep.subr.bf16.mxu0 0
    %774 = vmatpush1.bf16.xpose.msra.mxu0 0
    %775 = vmatprep.subr.bf16.mxu0 0
    %776 = vmatpush1.bf16.xpose.msra.mxu0 0
    %777 = vmatprep.subr.bf16.mxu0 0
    %778 = vmatpush1.bf16.xpose.msra.mxu0 0
    %779 = vmatprep.subr.bf16.mxu0 0
    %780 = vmatpush1.bf16.xpose.msra.mxu0 0
    %781 = vmatprep.subr.bf16.mxu0 0
    %782 = vmatpush1.bf16.xpose.msra.mxu0 0
    %783 = vmatprep.subr.bf16.mxu0 0
    %784 = vmatpush1.bf16.xpose.msra.mxu0 0
    %785 = vmatprep.subr.bf16.mxu0 0
    %786 = vmatpush1.bf16.xpose.msra.mxu0 0
    %787 = vmatprep.subr.bf16.mxu0 0
    %788 = vmatpush1.bf16.xpose.msra.mxu0 0
    %789 = vmatprep.mubr.bf16.mxu0 0
    %790 = vmatmul.mubr.bf16.gmra.mrb[0].mxu0 %v752
    %v791 = vpop.f32.mrb[0].mxu0
    %v792 = vadd.f32 0.0, %v791
    %v793 = vpop.f32.mrb[0].mxu0
    %v794 = vpop.f32.mrb[0].mxu0
    %v795 = vpop.f32.mrb[0].mxu0
    %796 = vdwg.mxu0
    %v798 = vsel %vm520, %v462, 0
    %v801 = vsel %vm520, %v490, 0
    %803 = vmatprep.subr.bf16.mxu0 0
    %804 = vmatpush1.bf16.xpose.msra.mxu0 %v801
    %805 = vmatprep.subr.bf16.mxu0 0
    %806 = vmatpush1.bf16.xpose.msra.mxu0 0
    %807 = vmatprep.subr.bf16.mxu0 0
    %808 = vmatpush1.bf16.xpose.msra.mxu0 0
    %809 = vmatprep.subr.bf16.mxu0 0
    %810 = vmatpush1.bf16.xpose.msra.mxu0 0
    %811 = vmatprep.subr.bf16.mxu0 0
    %812 = vmatpush1.bf16.xpose.msra.mxu0 0
    %813 = vmatprep.subr.bf16.mxu0 0
    %814 = vmatpush1.bf16.xpose.msra.mxu0 0
    %815 = vmatprep.subr.bf16.mxu0 0
    %816 = vmatpush1.bf16.xpose.msra.mxu0 0
    %817 = vmatprep.subr.bf16.mxu0 0
    %818 = vmatpush1.bf16.xpose.msra.mxu0 0
    %819 = vmatprep.subr.bf16.mxu0 0
    %820 = vmatpush1.bf16.xpose.msra.mxu0 0
    %821 = vmatprep.subr.bf16.mxu0 0
    %822 = vmatpush1.bf16.xpose.msra.mxu0 0
    %823 = vmatprep.subr.bf16.mxu0 0
    %824 = vmatpush1.bf16.xpose.msra.mxu0 0
    %825 = vmatprep.subr.bf16.mxu0 0
    %826 = vmatpush1.bf16.xpose.msra.mxu0 0
    %827 = vmatprep.subr.bf16.mxu0 0
    %828 = vmatpush1.bf16.xpose.msra.mxu0 0
    %829 = vmatprep.subr.bf16.mxu0 0
    %830 = vmatpush1.bf16.xpose.msra.mxu0 0
    %831 = vmatprep.subr.bf16.mxu0 0
    %832 = vmatpush1.bf16.xpose.msra.mxu0 0
    %833 = vmatprep.subr.bf16.mxu0 0
    %834 = vmatpush1.bf16.xpose.msra.mxu0 0
    %835 = vmatprep.mubr.bf16.mxu0 0
    %836 = vmatmul.mubr.bf16.gmra.mrb[0].mxu0 %v798
    %v837 = vpop.f32.mrb[0].mxu0
    %v838 = vadd.f32 0.0, %v837
    %v839 = vpop.f32.mrb[0].mxu0
    %v840 = vpop.f32.mrb[0].mxu0
    %v841 = vpop.f32.mrb[0].mxu0
    %842 = vdwg.mxu0
    %v844 = vsel %vm520, %v463, 0
    %v847 = vsel %vm520, %v491, 0
    %849 = vmatprep.subr.bf16.mxu0 0
    %850 = vmatpush1.bf16.xpose.msra.mxu0 %v847
    %851 = vmatprep.subr.bf16.mxu0 0
    %852 = vmatpush1.bf16.xpose.msra.mxu0 0
    %853 = vmatprep.subr.bf16.mxu0 0
    %854 = vmatpush1.bf16.xpose.msra.mxu0 0
    %855 = vmatprep.subr.bf16.mxu0 0
    %856 = vmatpush1.bf16.xpose.msra.mxu0 0
    %857 = vmatprep.subr.bf16.mxu0 0
    %858 = vmatpush1.bf16.xpose.msra.mxu0 0
    %859 = vmatprep.subr.bf16.mxu0 0
    %860 = vmatpush1.bf16.xpose.msra.mxu0 0
    %861 = vmatprep.subr.bf16.mxu0 0
    %862 = vmatpush1.bf16.xpose.msra.mxu0 0
    %863 = vmatprep.subr.bf16.mxu0 0
    %864 = vmatpush1.bf16.xpose.msra.mxu0 0
    %865 = vmatprep.subr.bf16.mxu0 0
    %866 = vmatpush1.bf16.xpose.msra.mxu0 0
    %867 = vmatprep.subr.bf16.mxu0 0
    %868 = vmatpush1.bf16.xpose.msra.mxu0 0
    %869 = vmatprep.subr.bf16.mxu0 0
    %870 = vmatpush1.bf16.xpose.msra.mxu0 0
    %871 = vmatprep.subr.bf16.mxu0 0
    %872 = vmatpush1.bf16.xpose.msra.mxu0 0
    %873 = vmatprep.subr.bf16.mxu0 0
    %874 = vmatpush1.bf16.xpose.msra.mxu0 0
    %875 = vmatprep.subr.bf16.mxu0 0
    %876 = vmatpush1.bf16.xpose.msra.mxu0 0
    %877 = vmatprep.subr.bf16.mxu0 0
    %878 = vmatpush1.bf16.xpose.msra.mxu0 0
    %879 = vmatprep.subr.bf16.mxu0 0
    %880 = vmatpush1.bf16.xpose.msra.mxu0 0
    %881 = vmatprep.mubr.bf16.mxu0 0
    %882 = vmatmul.mubr.bf16.gmra.mrb[0].mxu0 %v844
    %v883 = vpop.f32.mrb[0].mxu0
    %v884 = vadd.f32 0.0, %v883
    %v885 = vpop.f32.mrb[0].mxu0
    %v886 = vpop.f32.mrb[0].mxu0
    %v887 = vpop.f32.mrb[0].mxu0
    %888 = vdwg.mxu0
    %v889 = vmul.f32 %v562, 0.17677669
    %v890 = vmul.f32 %v608, 0.17677669
    %v891 = vmul.f32 %v654, 0.17677669
    %v892 = vmul.f32 %v700, 0.17677669
    %v893 = vmul.f32 %v746, 0.17677669
    %v894 = vmul.f32 %v792, 0.17677669
    %v895 = vmul.f32 %v838, 0.17677669
    %v896 = vmul.f32 %v884, 0.17677669
    %v897 = vadd.f32 %v889, %v434
    %v898 = vadd.f32 %v890, %v435
    %v899 = vadd.f32 %v891, %v434
    %v900 = vadd.f32 %v892, %v435
    %v901 = vadd.f32 %v893, %v434
    %v902 = vadd.f32 %v894, %v435
    %v903 = vadd.f32 %v895, %v434
    %v904 = vadd.f32 %v896, %v435
    %vm905 = vcmask 64512
    %v906 = vsel %vm905, %v897, -inf
    %907 = vmax.xlane.f32.xlu0 %v906
    %v908 = vpop.xlane.xlu0 %907
    %v909 = vsel %vm905, %v898, -inf
    %910 = vmax.xlane.f32.xlu0 %v909
    %v911 = vpop.xlane.xlu0 %910
    %v912 = vsel %vm905, %v899, -inf
    %913 = vmax.xlane.f32.xlu0 %v912
    %v914 = vpop.xlane.xlu0 %913
    %v915 = vsel %vm905, %v900, -inf
    %916 = vmax.xlane.f32.xlu0 %v915
    %v917 = vpop.xlane.xlu0 %916
    %v918 = vsel %vm905, %v901, -inf
    %919 = vmax.xlane.f32.xlu0 %v918
    %v920 = vpop.xlane.xlu0 %919
    %v921 = vsel %vm905, %v902, -inf
    %922 = vmax.xlane.f32.xlu0 %v921
    %v923 = vpop.xlane.xlu0 %922
    %v924 = vsel %vm905, %v903, -inf
    %925 = vmax.xlane.f32.xlu0 %v924
    %v926 = vpop.xlane.xlu0 %925
    %v927 = vsel %vm905, %v904, -inf
    %928 = vmax.xlane.f32.xlu0 %v927
    %v929 = vpop.xlane.xlu0 %928
    %v930 = vsub.f32 %v897, %v908
    %v931 = vsub.f32 %v898, %v911
    %v932 = vsub.f32 %v899, %v914
    %v933 = vsub.f32 %v900, %v917
    %v934 = vsub.f32 %v901, %v920
    %v935 = vsub.f32 %v902, %v923
    %v936 = vsub.f32 %v903, %v926
    %v937 = vsub.f32 %v904, %v929
    %v938 = vmul.f32 %v930, 1.442695
    %v939 = vpow.pop %v938
    %v940 = vmul.f32 %v931, 1.442695
    %v941 = vpow.pop %v940
    %v942 = vmul.f32 %v932, 1.442695
    %v943 = vpow.pop %v942
    %v944 = vmul.f32 %v933, 1.442695
    %v945 = vpow.pop %v944
    %v946 = vmul.f32 %v934, 1.442695
    %v947 = vpow.pop %v946
    %v948 = vmul.f32 %v935, 1.442695
    %v949 = vpow.pop %v948
    %v950 = vmul.f32 %v936, 1.442695
    %v951 = vpow.pop %v950
    %v952 = vmul.f32 %v937, 1.442695
    %v953 = vpow.pop %v952
    %v954 = vsel %vm905, %v939, 0.0
    %955 = vadd.xlane.f32.xlu0 %v954
    %v956 = vpop.xlane.xlu0 %955
    %v957 = vsel %vm905, %v941, 0.0
    %958 = vadd.xlane.f32.xlu0 %v957
    %v959 = vpop.xlane.xlu0 %958
    %v960 = vsel %vm905, %v943, 0.0
    %961 = vadd.xlane.f32.xlu0 %v960
    %v962 = vpop.xlane.xlu0 %961
    %v963 = vsel %vm905, %v945, 0.0
    %964 = vadd.xlane.f32.xlu0 %v963
    %v965 = vpop.xlane.xlu0 %964
    %v966 = vsel %vm905, %v947, 0.0
    %967 = vadd.xlane.f32.xlu0 %v966
    %v968 = vpop.xlane.xlu0 %967
    %v969 = vsel %vm905, %v949, 0.0
    %970 = vadd.xlane.f32.xlu0 %v969
    %v971 = vpop.xlane.xlu0 %970
    %v972 = vsel %vm905, %v951, 0.0
    %973 = vadd.xlane.f32.xlu0 %v972
    %v974 = vpop.xlane.xlu0 %973
    %v975 = vsel %vm905, %v953, 0.0
    %976 = vadd.xlane.f32.xlu0 %v975
    %v977 = vpop.xlane.xlu0 %976
    %v978 = vrcp.pop %v956
    %v979 = vrcp.pop %v959
    %v980 = vrcp.pop %v962
    %v981 = vrcp.pop %v965
    %v982 = vrcp.pop %v968
    %v983 = vrcp.pop %v971
    %v984 = vrcp.pop %v974
    %v985 = vrcp.pop %v977
    %v986 = vmul.f32 %v939, %v978
    %v987 = vmul.f32 %v941, %v979
    %v988 = vmul.f32 %v943, %v980
    %v989 = vmul.f32 %v945, %v981
    %v990 = vmul.f32 %v947, %v982
    %v991 = vmul.f32 %v949, %v983
    %v992 = vmul.f32 %v951, %v984
    %v993 = vmul.f32 %v953, %v985
    %v994 = vpack.c.bf16 %v986, %v986
    %v995 = vpack.c.bf16 %v987, %v987
    %v996 = vpack.c.bf16 %v988, %v988
    %v997 = vpack.c.bf16 %v989, %v989
    %v998 = vpack.c.bf16 %v990, %v990
    %v999 = vpack.c.bf16 %v991, %v991
    %v1000 = vpack.c.bf16 %v992, %v992
    %v1001 = vpack.c.bf16 %v993, %v993
    %v1003 = vsel %vm905, %v994, 0
    %vm1005 = vcmask 1043456
    %v1007 = vsel %vm1005, %v512, 0
    %1009 = vmatprep.subr.bf16.mxu0 0
    %1010 = vmatpush1.bf16.msra.mxu0 %v1007
    %1011 = vmatprep.subr.bf16.mxu0 0
    %1012 = vmatpush1.bf16.msra.mxu0 0
    %1013 = vmatprep.subr.bf16.mxu0 0
    %1014 = vmatpush1.bf16.msra.mxu0 0
    %1015 = vmatprep.subr.bf16.mxu0 0
    %1016 = vmatpush1.bf16.msra.mxu0 0
    %1017 = vmatprep.subr.bf16.mxu0 0
    %1018 = vmatpush1.bf16.msra.mxu0 0
    %1019 = vmatprep.subr.bf16.mxu0 0
    %1020 = vmatpush1.bf16.msra.mxu0 0
    %1021 = vmatprep.subr.bf16.mxu0 0
    %1022 = vmatpush1.bf16.msra.mxu0 0
    %1023 = vmatprep.subr.bf16.mxu0 0
    %1024 = vmatpush1.bf16.msra.mxu0 0
    %1025 = vmatprep.subr.bf16.mxu0 0
    %1026 = vmatpush1.bf16.msra.mxu0 0
    %1027 = vmatprep.subr.bf16.mxu0 0
    %1028 = vmatpush1.bf16.msra.mxu0 0
    %1029 = vmatprep.subr.bf16.mxu0 0
    %1030 = vmatpush1.bf16.msra.mxu0 0
    %1031 = vmatprep.subr.bf16.mxu0 0
    %1032 = vmatpush1.bf16.msra.mxu0 0
    %1033 = vmatprep.subr.bf16.mxu0 0
    %1034 = vmatpush1.bf16.msra.mxu0 0
    %1035 = vmatprep.subr.bf16.mxu0 0
    %1036 = vmatpush1.bf16.msra.mxu0 0
    %1037 = vmatprep.subr.bf16.mxu0 0
    %1038 = vmatpush1.bf16.msra.mxu0 0
    %1039 = vmatprep.subr.bf16.mxu0 0
    %1040 = vmatpush1.bf16.msra.mxu0 0
    %1041 = vmatprep.mubr.bf16.mxu0 0
    %1042 = vmatmul.mubr.bf16.gmra.mrb[0].mxu0 %v1003
    %v1043 = vpop.f32.mrb[0].mxu0
    %v1044 = vadd.f32 0.0, %v1043
    %v1045 = vpop.f32.mrb[0].mxu0
    %v1046 = vpop.f32.mrb[0].mxu0
    %v1047 = vpop.f32.mrb[0].mxu0
    %1048 = vdwg.mxu0
    %v1050 = vsel %vm905, %v995, 0
    %v1053 = vsel %vm1005, %v513, 0
    %1055 = vmatprep.subr.bf16.mxu0 0
    %1056 = vmatpush1.bf16.msra.mxu0 %v1053
    %1057 = vmatprep.subr.bf16.mxu0 0
    %1058 = vmatpush1.bf16.msra.mxu0 0
    %1059 = vmatprep.subr.bf16.mxu0 0
    %1060 = vmatpush1.bf16.msra.mxu0 0
    %1061 = vmatprep.subr.bf16.mxu0 0
    %1062 = vmatpush1.bf16.msra.mxu0 0
    %1063 = vmatprep.subr.bf16.mxu0 0
    %1064 = vmatpush1.bf16.msra.mxu0 0
    %1065 = vmatprep.subr.bf16.mxu0 0
    %1066 = vmatpush1.bf16.msra.mxu0 0
    %1067 = vmatprep.subr.bf16.mxu0 0
    %1068 = vmatpush1.bf16.msra.mxu0 0
    %1069 = vmatprep.subr.bf16.mxu0 0
    %1070 = vmatpush1.bf16.msra.mxu0 0
    %1071 = vmatprep.subr.bf16.mxu0 0
    %1072 = vmatpush1.bf16.msra.mxu0 0
    %1073 = vmatprep.subr.bf16.mxu0 0
    %1074 = vmatpush1.bf16.msra.mxu0 0
    %1075 = vmatprep.subr.bf16.mxu0 0
    %1076 = vmatpush1.bf16.msra.mxu0 0
    %1077 = vmatprep.subr.bf16.mxu0 0
    %1078 = vmatpush1.bf16.msra.mxu0 0
    %1079 = vmatprep.subr.bf16.mxu0 0
    %1080 = vmatpush1.bf16.msra.mxu0 0
    %1081 = vmatprep.subr.bf16.mxu0 0
    %1082 = vmatpush1.bf16.msra.mxu0 0
    %1083 = vmatprep.subr.bf16.mxu0 0
    %1084 = vmatpush1.bf16.msra.mxu0 0
    %1085 = vmatprep.subr.bf16.mxu0 0
    %1086 = vmatpush1.bf16.msra.mxu0 0
    %1087 = vmatprep.mubr.bf16.mxu0 0
    %1088 = vmatmul.mubr.bf16.gmra.mrb[0].mxu0 %v1050
    %v1089 = vpop.f32.mrb[0].mxu0
    %v1090 = vadd.f32 0.0, %v1089
    %v1091 = vpop.f32.mrb[0].mxu0
    %v1092 = vpop.f32.mrb[0].mxu0
    %v1093 = vpop.f32.mrb[0].mxu0
    %1094 = vdwg.mxu0
    %v1096 = vsel %vm905, %v996, 0
    %v1099 = vsel %vm1005, %v514, 0
    %1101 = vmatprep.subr.bf16.mxu0 0
    %1102 = vmatpush1.bf16.msra.mxu0 %v1099
    %1103 = vmatprep.subr.bf16.mxu0 0
    %1104 = vmatpush1.bf16.msra.mxu0 0
    %1105 = vmatprep.subr.bf16.mxu0 0
    %1106 = vmatpush1.bf16.msra.mxu0 0
    %1107 = vmatprep.subr.bf16.mxu0 0
    %1108 = vmatpush1.bf16.msra.mxu0 0
    %1109 = vmatprep.subr.bf16.mxu0 0
    %1110 = vmatpush1.bf16.msra.mxu0 0
    %1111 = vmatprep.subr.bf16.mxu0 0
    %1112 = vmatpush1.bf16.msra.mxu0 0
    %1113 = vmatprep.subr.bf16.mxu0 0
    %1114 = vmatpush1.bf16.msra.mxu0 0
    %1115 = vmatprep.subr.bf16.mxu0 0
    %1116 = vmatpush1.bf16.msra.mxu0 0
    %1117 = vmatprep.subr.bf16.mxu0 0
    %1118 = vmatpush1.bf16.msra.mxu0 0
    %1119 = vmatprep.subr.bf16.mxu0 0
    %1120 = vmatpush1.bf16.msra.mxu0 0
    %1121 = vmatprep.subr.bf16.mxu0 0
    %1122 = vmatpush1.bf16.msra.mxu0 0
    %1123 = vmatprep.subr.bf16.mxu0 0
    %1124 = vmatpush1.bf16.msra.mxu0 0
    %1125 = vmatprep.subr.bf16.mxu0 0
    %1126 = vmatpush1.bf16.msra.mxu0 0
    %1127 = vmatprep.subr.bf16.mxu0 0
    %1128 = vmatpush1.bf16.msra.mxu0 0
    %1129 = vmatprep.subr.bf16.mxu0 0
    %1130 = vmatpush1.bf16.msra.mxu0 0
    %1131 = vmatprep.subr.bf16.mxu0 0
    %1132 = vmatpush1.bf16.msra.mxu0 0
    %1133 = vmatprep.mubr.bf16.mxu0 0
    %1134 = vmatmul.mubr.bf16.gmra.mrb[0].mxu0 %v1096
    %v1135 = vpop.f32.mrb[0].mxu0
    %v1136 = vadd.f32 0.0, %v1135
    %v1137 = vpop.f32.mrb[0].mxu0
    %v1138 = vpop.f32.mrb[0].mxu0
    %v1139 = vpop.f32.mrb[0].mxu0
    %1140 = vdwg.mxu0
    %v1142 = vsel %vm905, %v997, 0
    %v1145 = vsel %vm1005, %v515, 0
    %1147 = vmatprep.subr.bf16.mxu0 0
    %1148 = vmatpush1.bf16.msra.mxu0 %v1145
    %1149 = vmatprep.subr.bf16.mxu0 0
    %1150 = vmatpush1.bf16.msra.mxu0 0
    %1151 = vmatprep.subr.bf16.mxu0 0
    %1152 = vmatpush1.bf16.msra.mxu0 0
    %1153 = vmatprep.subr.bf16.mxu0 0
    %1154 = vmatpush1.bf16.msra.mxu0 0
    %1155 = vmatprep.subr.bf16.mxu0 0
    %1156 = vmatpush1.bf16.msra.mxu0 0
    %1157 = vmatprep.subr.bf16.mxu0 0
    %1158 = vmatpush1.bf16.msra.mxu0 0
    %1159 = vmatprep.subr.bf16.mxu0 0
    %1160 = vmatpush1.bf16.msra.mxu0 0
    %1161 = vmatprep.subr.bf16.mxu0 0
    %1162 = vmatpush1.bf16.msra.mxu0 0
    %1163 = vmatprep.subr.bf16.mxu0 0
    %1164 = vmatpush1.bf16.msra.mxu0 0
    %1165 = vmatprep.subr.bf16.mxu0 0
    %1166 = vmatpush1.bf16.msra.mxu0 0
    %1167 = vmatprep.subr.bf16.mxu0 0
    %1168 = vmatpush1.bf16.msra.mxu0 0
    %1169 = vmatprep.subr.bf16.mxu0 0
    %1170 = vmatpush1.bf16.msra.mxu0 0
    %1171 = vmatprep.subr.bf16.mxu0 0
    %1172 = vmatpush1.bf16.msra.mxu0 0
    %1173 = vmatprep.subr.bf16.mxu0 0
    %1174 = vmatpush1.bf16.msra.mxu0 0
    %1175 = vmatprep.subr.bf16.mxu0 0
    %1176 = vmatpush1.bf16.msra.mxu0 0
    %1177 = vmatprep.subr.bf16.mxu0 0
    %1178 = vmatpush1.bf16.msra.mxu0 0
    %1179 = vmatprep.mubr.bf16.mxu0 0
    %1180 = vmatmul.mubr.bf16.gmra.mrb[0].mxu0 %v1142
    %v1181 = vpop.f32.mrb[0].mxu0
    %v1182 = vadd.f32 0.0, %v1181
    %v1183 = vpop.f32.mrb[0].mxu0
    %v1184 = vpop.f32.mrb[0].mxu0
    %v1185 = vpop.f32.mrb[0].mxu0
    %1186 = vdwg.mxu0
    %v1188 = vsel %vm905, %v998, 0
    %v1191 = vsel %vm1005, %v516, 0
    %1193 = vmatprep.subr.bf16.mxu0 0
    %1194 = vmatpush1.bf16.msra.mxu0 %v1191
    %1195 = vmatprep.subr.bf16.mxu0 0
    %1196 = vmatpush1.bf16.msra.mxu0 0
    %1197 = vmatprep.subr.bf16.mxu0 0
    %1198 = vmatpush1.bf16.msra.mxu0 0
    %1199 = vmatprep.subr.bf16.mxu0 0
    %1200 = vmatpush1.bf16.msra.mxu0 0
    %1201 = vmatprep.subr.bf16.mxu0 0
    %1202 = vmatpush1.bf16.msra.mxu0 0
    %1203 = vmatprep.subr.bf16.mxu0 0
    %1204 = vmatpush1.bf16.msra.mxu0 0
    %1205 = vmatprep.subr.bf16.mxu0 0
    %1206 = vmatpush1.bf16.msra.mxu0 0
    %1207 = vmatprep.subr.bf16.mxu0 0
    %1208 = vmatpush1.bf16.msra.mxu0 0
    %1209 = vmatprep.subr.bf16.mxu0 0
    %1210 = vmatpush1.bf16.msra.mxu0 0
    %1211 = vmatprep.subr.bf16.mxu0 0
    %1212 = vmatpush1.bf16.msra.mxu0 0
    %1213 = vmatprep.subr.bf16.mxu0 0
    %1214 = vmatpush1.bf16.msra.mxu0 0
    %1215 = vmatprep.subr.bf16.mxu0 0
    %1216 = vmatpush1.bf16.msra.mxu0 0
    %1217 = vmatprep.subr.bf16.mxu0 0
    %1218 = vmatpush1.bf16.msra.mxu0 0
    %1219 = vmatprep.subr.bf16.mxu0 0
    %1220 = vmatpush1.bf16.msra.mxu0 0
    %1221 = vmatprep.subr.bf16.mxu0 0
    %1222 = vmatpush1.bf16.msra.mxu0 0
    %1223 = vmatprep.subr.bf16.mxu0 0
    %1224 = vmatpush1.bf16.msra.mxu0 0
    %1225 = vmatprep.mubr.bf16.mxu0 0
    %1226 = vmatmul.mubr.bf16.gmra.mrb[0].mxu0 %v1188
    %v1227 = vpop.f32.mrb[0].mxu0
    %v1228 = vadd.f32 0.0, %v1227
    %v1229 = vpop.f32.mrb[0].mxu0
    %v1230 = vpop.f32.mrb[0].mxu0
    %v1231 = vpop.f32.mrb[0].mxu0
    %1232 = vdwg.mxu0
    %v1234 = vsel %vm905, %v999, 0
    %v1237 = vsel %vm1005, %v517, 0
    %1239 = vmatprep.subr.bf16.mxu0 0
    %1240 = vmatpush1.bf16.msra.mxu0 %v1237
    %1241 = vmatprep.subr.bf16.mxu0 0
    %1242 = vmatpush1.bf16.msra.mxu0 0
    %1243 = vmatprep.subr.bf16.mxu0 0
    %1244 = vmatpush1.bf16.msra.mxu0 0
    %1245 = vmatprep.subr.bf16.mxu0 0
    %1246 = vmatpush1.bf16.msra.mxu0 0
    %1247 = vmatprep.subr.bf16.mxu0 0
    %1248 = vmatpush1.bf16.msra.mxu0 0
    %1249 = vmatprep.subr.bf16.mxu0 0
    %1250 = vmatpush1.bf16.msra.mxu0 0
    %1251 = vmatprep.subr.bf16.mxu0 0
    %1252 = vmatpush1.bf16.msra.mxu0 0
    %1253 = vmatprep.subr.bf16.mxu0 0
    %1254 = vmatpush1.bf16.msra.mxu0 0
    %1255 = vmatprep.subr.bf16.mxu0 0
    %1256 = vmatpush1.bf16.msra.mxu0 0
    %1257 = vmatprep.subr.bf16.mxu0 0
    %1258 = vmatpush1.bf16.msra.mxu0 0
    %1259 = vmatprep.subr.bf16.mxu0 0
    %1260 = vmatpush1.bf16.msra.mxu0 0
    %1261 = vmatprep.subr.bf16.mxu0 0
    %1262 = vmatpush1.bf16.msra.mxu0 0
    %1263 = vmatprep.subr.bf16.mxu0 0
    %1264 = vmatpush1.bf16.msra.mxu0 0
    %1265 = vmatprep.subr.bf16.mxu0 0
    %1266 = vmatpush1.bf16.msra.mxu0 0
    %1267 = vmatprep.subr.bf16.mxu0 0
    %1268 = vmatpush1.bf16.msra.mxu0 0
    %1269 = vmatprep.subr.bf16.mxu0 0
    %1270 = vmatpush1.bf16.msra.mxu0 0
    %1271 = vmatprep.mubr.bf16.mxu0 0
    %1272 = vmatmul.mubr.bf16.gmra.mrb[0].mxu0 %v1234
    %v1273 = vpop.f32.mrb[0].mxu0
    %v1274 = vadd.f32 0.0, %v1273
    %v1275 = vpop.f32.mrb[0].mxu0
    %v1276 = vpop.f32.mrb[0].mxu0
    %v1277 = vpop.f32.mrb[0].mxu0
    %1278 = vdwg.mxu0
    %v1280 = vsel %vm905, %v1000, 0
    %v1283 = vsel %vm1005, %v518, 0
    %1285 = vmatprep.subr.bf16.mxu0 0
    %1286 = vmatpush1.bf16.msra.mxu0 %v1283
    %1287 = vmatprep.subr.bf16.mxu0 0
    %1288 = vmatpush1.bf16.msra.mxu0 0
    %1289 = vmatprep.subr.bf16.mxu0 0
    %1290 = vmatpush1.bf16.msra.mxu0 0
    %1291 = vmatprep.subr.bf16.mxu0 0
    %1292 = vmatpush1.bf16.msra.mxu0 0
    %1293 = vmatprep.subr.bf16.mxu0 0
    %1294 = vmatpush1.bf16.msra.mxu0 0
    %1295 = vmatprep.subr.bf16.mxu0 0
    %1296 = vmatpush1.bf16.msra.mxu0 0
    %1297 = vmatprep.subr.bf16.mxu0 0
    %1298 = vmatpush1.bf16.msra.mxu0 0
    %1299 = vmatprep.subr.bf16.mxu0 0
    %1300 = vmatpush1.bf16.msra.mxu0 0
    %1301 = vmatprep.subr.bf16.mxu0 0
    %1302 = vmatpush1.bf16.msra.mxu0 0
    %1303 = vmatprep.subr.bf16.mxu0 0
    %1304 = vmatpush1.bf16.msra.mxu0 0
    %1305 = vmatprep.subr.bf16.mxu0 0
    %1306 = vmatpush1.bf16.msra.mxu0 0
    %1307 = vmatprep.subr.bf16.mxu0 0
    %1308 = vmatpush1.bf16.msra.mxu0 0
    %1309 = vmatprep.subr.bf16.mxu0 0
    %1310 = vmatpush1.bf16.msra.mxu0 0
    %1311 = vmatprep.subr.bf16.mxu0 0
    %1312 = vmatpush1.bf16.msra.mxu0 0
    %1313 = vmatprep.subr.bf16.mxu0 0
    %1314 = vmatpush1.bf16.msra.mxu0 0
    %1315 = vmatprep.subr.bf16.mxu0 0
    %1316 = vmatpush1.bf16.msra.mxu0 0
    %1317 = vmatprep.mubr.bf16.mxu0 0
    %1318 = vmatmul.mubr.bf16.gmra.mrb[0].mxu0 %v1280
    %v1319 = vpop.f32.mrb[0].mxu0
    %v1320 = vadd.f32 0.0, %v1319
    %v1321 = vpop.f32.mrb[0].mxu0
    %v1322 = vpop.f32.mrb[0].mxu0
    %v1323 = vpop.f32.mrb[0].mxu0
    %1324 = vdwg.mxu0
    %v1326 = vsel %vm905, %v1001, 0
    %v1329 = vsel %vm1005, %v519, 0
    %1331 = vmatprep.subr.bf16.mxu0 0
    %1332 = vmatpush1.bf16.msra.mxu0 %v1329
    %1333 = vmatprep.subr.bf16.mxu0 0
    %1334 = vmatpush1.bf16.msra.mxu0 0
    %1335 = vmatprep.subr.bf16.mxu0 0
    %1336 = vmatpush1.bf16.msra.mxu0 0
    %1337 = vmatprep.subr.bf16.mxu0 0
    %1338 = vmatpush1.bf16.msra.mxu0 0
    %1339 = vmatprep.subr.bf16.mxu0 0
    %1340 = vmatpush1.bf16.msra.mxu0 0
    %1341 = vmatprep.subr.bf16.mxu0 0
    %1342 = vmatpush1.bf16.msra.mxu0 0
    %1343 = vmatprep.subr.bf16.mxu0 0
    %1344 = vmatpush1.bf16.msra.mxu0 0
    %1345 = vmatprep.subr.bf16.mxu0 0
    %1346 = vmatpush1.bf16.msra.mxu0 0
    %1347 = vmatprep.subr.bf16.mxu0 0
    %1348 = vmatpush1.bf16.msra.mxu0 0
    %1349 = vmatprep.subr.bf16.mxu0 0
    %1350 = vmatpush1.bf16.msra.mxu0 0
    %1351 = vmatprep.subr.bf16.mxu0 0
    %1352 = vmatpush1.bf16.msra.mxu0 0
    %1353 = vmatprep.subr.bf16.mxu0 0
    %1354 = vmatpush1.bf16.msra.mxu0 0
    %1355 = vmatprep.subr.bf16.mxu0 0
    %1356 = vmatpush1.bf16.msra.mxu0 0
    %1357 = vmatprep.subr.bf16.mxu0 0
    %1358 = vmatpush1.bf16.msra.mxu0 0
    %1359 = vmatprep.subr.bf16.mxu0 0
    %1360 = vmatpush1.bf16.msra.mxu0 0
    %1361 = vmatprep.subr.bf16.mxu0 0
    %1362 = vmatpush1.bf16.msra.mxu0 0
    %1363 = vmatprep.mubr.bf16.mxu0 0
    %1364 = vmatmul.mubr.bf16.gmra.mrb[0].mxu0 %v1326
    %v1365 = vpop.f32.mrb[0].mxu0
    %v1366 = vadd.f32 0.0, %v1365
    %v1367 = vpop.f32.mrb[0].mxu0
    %v1368 = vpop.f32.mrb[0].mxu0
    %v1369 = vpop.f32.mrb[0].mxu0
    %1370 = vdwg.mxu0
    %1373 = vrot.lane.b32.xlu0 %v1136, 32
    %v1374 = vpop.permute.xlu0 %1373
    %1375 = vrot.lane.b32.xlu0 %v1182, 32
    %v1376 = vpop.permute.xlu0 %1375
    %1381 = vrot.lane.b32.xlu0 %v1228, 64
    %v1382 = vpop.permute.xlu0 %1381
    %1383 = vrot.lane.b32.xlu0 %v1274, 64
    %v1384 = vpop.permute.xlu0 %1383
    %1389 = vrot.lane.b32.xlu0 %v1320, 96
    %v1390 = vpop.permute.xlu0 %1389
    %1391 = vrot.lane.b32.xlu0 %v1366, 96
    %v1392 = vpop.permute.xlu0 %1391
    %v1395 = vsel %vm520, %v1044, %v1374
    %v1396 = vsel %vm520, %v1090, %v1376
    %vm1397 = vcmask 523264
    %v1398 = vsel %vm1397, %v1395, %v1382
    %v1399 = vsel %vm1397, %v1396, %v1384
    %vm1400 = vcmask 785408
    %v1401 = vsel %vm1400, %v1398, %v1390
    %v1402 = vsel %vm1400, %v1399, %v1392
    %v1403 = vpack.c.bf16 %v1402, %v1401
    %v1404 = vlaneseq
    %v1405 = vshrl.u32 %v1404, 7
    %v1406 = vsub.s32 1, %v1405
    %v1407 = vrot.slane %v60, %v1406
    %v1424 = vunpack.c.l.b16 %v97
    %v1425 = vunpack.c.l.b16 %v98
    %v1426 = vunpack.c.l.b16 %v99
    %v1427 = vunpack.c.l.b16 %v100
    %v1428 = vunpack.c.l.b16 %v101
    %v1429 = vunpack.c.l.b16 %v102
    %v1430 = vunpack.c.l.b16 %v103
    %v1431 = vunpack.c.l.b16 %v104
    %v1432 = vunpack.c.l.b16 %v105
    %v1433 = vunpack.c.l.b16 %v106
    %v1434 = vunpack.c.l.b16 %v107
    %v1435 = vunpack.c.l.b16 %v108
    %v1436 = vunpack.c.l.b16 %v109
    %v1437 = vunpack.c.l.b16 %v110
    %v1438 = vunpack.c.l.b16 %v111
    %v1439 = vunpack.c.l.b16 %v112
    %v1440 = vpack.c.b16 %v1425, %v1424
    %v1441 = vpack.c.b16 %v1427, %v1426
    %v1442 = vpack.c.b16 %v1429, %v1428
    %v1443 = vpack.c.b16 %v1431, %v1430
    %v1444 = vpack.c.b16 %v1433, %v1432
    %v1445 = vpack.c.b16 %v1435, %v1434
    %v1446 = vpack.c.b16 %v1437, %v1436
    %v1447 = vpack.c.b16 %v1439, %v1438
    %1456 = vmatprep.subr.bf16.mxu0 0
    %1457 = vmatpush1.bf16.msra.mxu0 %v1440
    %1458 = vmatprep.subr.bf16.mxu0 0
    %1459 = vmatpush1.bf16.msra.mxu0 %v1441
    %1460 = vmatprep.subr.bf16.mxu0 0
    %1461 = vmatpush1.bf16.msra.mxu0 %v1442
    %1462 = vmatprep.subr.bf16.mxu0 0
    %1463 = vmatpush1.bf16.msra.mxu0 %v1443
    %1464 = vmatprep.subr.bf16.mxu0 0
    %1465 = vmatpush1.bf16.msra.mxu0 %v1444
    %1466 = vmatprep.subr.bf16.mxu0 0
    %1467 = vmatpush1.bf16.msra.mxu0 %v1445
    %1468 = vmatprep.subr.bf16.mxu0 0
    %1469 = vmatpush1.bf16.msra.mxu0 %v1446
    %1470 = vmatprep.subr.bf16.mxu0 0
    %1471 = vmatpush1.bf16.msra.mxu0 %v1447
    %1472 = vmatprep.subr.bf16.mxu0 0
    %1473 = vmatpush1.bf16.msra.mxu0 0
    %1474 = vmatprep.subr.bf16.mxu0 0
    %1475 = vmatpush1.bf16.msra.mxu0 0
    %1476 = vmatprep.subr.bf16.mxu0 0
    %1477 = vmatpush1.bf16.msra.mxu0 0
    %1478 = vmatprep.subr.bf16.mxu0 0
    %1479 = vmatpush1.bf16.msra.mxu0 0
    %1480 = vmatprep.subr.bf16.mxu0 0
    %1481 = vmatpush1.bf16.msra.mxu0 0
    %1482 = vmatprep.subr.bf16.mxu0 0
    %1483 = vmatpush1.bf16.msra.mxu0 0
    %1484 = vmatprep.subr.bf16.mxu0 0
    %1485 = vmatpush1.bf16.msra.mxu0 0
    %1486 = vmatprep.subr.bf16.mxu0 0
    %1487 = vmatpush1.bf16.msra.mxu0 0
    %1488 = vmatprep.mubr.bf16.mxu0 0
    %1489 = vmatmul.mubr.bf16.gmra.mrb[0].mxu0 %v1403
    %v1490 = vpop.f32.mrb[0].mxu0
    %v1491 = vadd.f32 %v1407, %v1490
    %v1492 = vpop.f32.mrb[0].mxu0
    %v1493 = vpop.f32.mrb[0].mxu0
    %v1494 = vadd.f32 %v1407, %v1493
    %v1495 = vpop.f32.mrb[0].mxu0
    %1496 = vdwg.mxu0
    %v1497 = vadd.f32 %v56, %v1491
    %v1498 = vadd.f32 %v57, %v1494
    %1499 = vadd.xlane.f32.xlu0 %v1497
    %v1500 = vpop.xlane.xlu0 %1499
    %1501 = vadd.xlane.f32.xlu0 %v1498
    %v1502 = vpop.xlane.xlu0 %1501
    %v1503 = vrcp.pop 128.0
    %v1504 = vmul.f32 %v1500, %v1503
    %v1505 = vmul.f32 %v1502, %v1503
    %v1506 = vsub.f32 %v1497, %v1504
    %v1507 = vsub.f32 %v1498, %v1505
    %v1508 = vmul.f32 %v1506, %v1506
    %v1509 = vmul.f32 %v1507, %v1507
    %1510 = vadd.xlane.f32.xlu0 %v1508
    %v1511 = vpop.xlane.xlu0 %1510
    %1512 = vadd.xlane.f32.xlu0 %v1509
    %v1513 = vpop.xlane.xlu0 %1512
    %v1514 = vmul.f32 %v1511, %v1503
    %v1515 = vmul.f32 %v1513, %v1503
    %v1516 = vadd.f32 %v1514, 1e-05
    %v1517 = vadd.f32 %v1515, 1e-05
    %v1518 = vrsqrt.pop %v1516
    %v1519 = vrsqrt.pop %v1517
    %v1520 = vmul.f32 %v1506, %v1518
    %v1521 = vmul.f32 %v1507, %v1519
    %v1522 = vlaneseq
    %v1523 = vshrl.u32 %v1522, 7
    %v1524 = vsub.s32 2, %v1523
    %v1525 = vrot.slane %v60, %v1524
    %v1526 = vmul.f32 %v1520, %v1525
    %v1527 = vmul.f32 %v1521, %v1525
    %v1528 = vlaneseq
    %v1529 = vshrl.u32 %v1528, 7
    %v1530 = vsub.s32 3, %v1529
    %v1531 = vrot.slane %v60, %v1530
    %v1532 = vadd.f32 %v1526, %v1531
    %v1533 = vadd.f32 %v1527, %v1531
    %v1534 = vpack.c.bf16 %v1533, %v1532
    %v1535 = vlaneseq
    %v1536 = vshrl.u32 %v1535, 7
    %v1537 = vsub.s32 4, %v1536
    %v1538 = vrot.slane %v60, %v1537
    %v1555 = vunpack.c.l.b16 %v113
    %v1556 = vunpack.c.l.b16 %v114
    %v1557 = vunpack.c.l.b16 %v115
    %v1558 = vunpack.c.l.b16 %v116
    %v1559 = vunpack.c.l.b16 %v117
    %v1560 = vunpack.c.l.b16 %v118
    %v1561 = vunpack.c.l.b16 %v119
    %v1562 = vunpack.c.l.b16 %v120
    %v1563 = vunpack.c.l.b16 %v121
    %v1564 = vunpack.c.l.b16 %v122
    %v1565 = vunpack.c.l.b16 %v123
    %v1566 = vunpack.c.l.b16 %v124
    %v1567 = vunpack.c.l.b16 %v125
    %v1568 = vunpack.c.l.b16 %v126
    %v1569 = vunpack.c.l.b16 %v127
    %v1570 = vunpack.c.l.b16 %v128
    %v1571 = vpack.c.b16 %v1556, %v1555
    %v1572 = vpack.c.b16 %v1558, %v1557
    %v1573 = vpack.c.b16 %v1560, %v1559
    %v1574 = vpack.c.b16 %v1562, %v1561
    %v1575 = vpack.c.b16 %v1564, %v1563
    %v1576 = vpack.c.b16 %v1566, %v1565
    %v1577 = vpack.c.b16 %v1568, %v1567
    %v1578 = vpack.c.b16 %v1570, %v1569
    %1587 = vmatprep.subr.bf16.mxu0 0
    %1588 = vmatpush1.bf16.msra.mxu0 %v1571
    %1589 = vmatprep.subr.bf16.mxu0 0
    %1590 = vmatpush1.bf16.msra.mxu0 %v1572
    %1591 = vmatprep.subr.bf16.mxu0 0
    %1592 = vmatpush1.bf16.msra.mxu0 %v1573
    %1593 = vmatprep.subr.bf16.mxu0 0
    %1594 = vmatpush1.bf16.msra.mxu0 %v1574
    %1595 = vmatprep.subr.bf16.mxu0 0
    %1596 = vmatpush1.bf16.msra.mxu0 %v1575
    %1597 = vmatprep.subr.bf16.mxu0 0
    %1598 = vmatpush1.bf16.msra.mxu0 %v1576
    %1599 = vmatprep.subr.bf16.mxu0 0
    %1600 = vmatpush1.bf16.msra.mxu0 %v1577
    %1601 = vmatprep.subr.bf16.mxu0 0
    %1602 = vmatpush1.bf16.msra.mxu0 %v1578
    %1603 = vmatprep.subr.bf16.mxu0 0
    %1604 = vmatpush1.bf16.msra.mxu0 0
    %1605 = vmatprep.subr.bf16.mxu0 0
    %1606 = vmatpush1.bf16.msra.mxu0 0
    %1607 = vmatprep.subr.bf16.mxu0 0
    %1608 = vmatpush1.bf16.msra.mxu0 0
    %1609 = vmatprep.subr.bf16.mxu0 0
    %1610 = vmatpush1.bf16.msra.mxu0 0
    %1611 = vmatprep.subr.bf16.mxu0 0
    %1612 = vmatpush1.bf16.msra.mxu0 0
    %1613 = vmatprep.subr.bf16.mxu0 0
    %1614 = vmatpush1.bf16.msra.mxu0 0
    %1615 = vmatprep.subr.bf16.mxu0 0
    %1616 = vmatpush1.bf16.msra.mxu0 0
    %1617 = vmatprep.subr.bf16.mxu0 0
    %1618 = vmatpush1.bf16.msra.mxu0 0
    %1619 = vmatprep.mubr.bf16.mxu0 0
    %1620 = vmatmul.mubr.bf16.gmra.mrb[0].mxu0 %v1534
    %v1621 = vpop.f32.mrb[0].mxu0
    %v1622 = vadd.f32 %v1538, %v1621
    %v1623 = vpop.f32.mrb[0].mxu0
    %v1624 = vpop.f32.mrb[0].mxu0
    %v1625 = vadd.f32 %v1538, %v1624
    %v1626 = vpop.f32.mrb[0].mxu0
    %1627 = vdwg.mxu0
    %v1628 = vpack.c.bf16 %v59, %v58
    %v1629 = vlaneseq
    %v1630 = vshrl.u32 %v1629, 7
    %v1631 = vsub.s32 5, %v1630
    %v1632 = vrot.slane %v60, %v1631
    %v1633 = vlaneseq
    %v1634 = vshrl.u32 %v1633, 7
    %v1635 = vsub.s32 5, %v1634
    %v1636 = vrot.slane %v61, %v1635
    %v1653 = vunpack.c.l.b16 %v129
    %v1654 = vunpack.c.h.b16 %v129
    %v1655 = vunpack.c.l.b16 %v130
    %v1656 = vunpack.c.h.b16 %v130
    %v1657 = vunpack.c.l.b16 %v131
    %v1658 = vunpack.c.h.b16 %v131
    %v1659 = vunpack.c.l.b16 %v132
    %v1660 = vunpack.c.h.b16 %v132
    %v1661 = vunpack.c.l.b16 %v133
    %v1662 = vunpack.c.h.b16 %v133
    %v1663 = vunpack.c.l.b16 %v134
    %v1664 = vunpack.c.h.b16 %v134
    %v1665 = vunpack.c.l.b16 %v135
    %v1666 = vunpack.c.h.b16 %v135
    %v1667 = vunpack.c.l.b16 %v136
    %v1668 = vunpack.c.h.b16 %v136
    %v1669 = vunpack.c.l.b16 %v137
    %v1670 = vunpack.c.h.b16 %v137
    %v1671 = vunpack.c.l.b16 %v138
    %v1672 = vunpack.c.h.b16 %v138
    %v1673 = vunpack.c.l.b16 %v139
    %v1674 = vunpack.c.h.b16 %v139
    %v1675 = vunpack.c.l.b16 %v140
    %v1676 = vunpack.c.h.b16 %v140
    %v1677 = vunpack.c.l.b16 %v141
    %v1678 = vunpack.c.h.b16 %v141
    %v1679 = vunpack.c.l.b16 %v142
    %v1680 = vunpack.c.h.b16 %v142
    %v1681 = vunpack.c.l.b16 %v143
    %v1682 = vunpack.c.h.b16 %v143
    %v1683 = vunpack.c.l.b16 %v144
    %v1684 = vunpack.c.h.b16 %v144
    %v1685 = vpack.c.b16 %v1655, %v1653
    %v1686 = vpack.c.b16 %v1656, %v1654
    %v1687 = vpack.c.b16 %v1659, %v1657
    %v1688 = vpack.c.b16 %v1660, %v1658
    %v1689 = vpack.c.b16 %v1663, %v1661
    %v1690 = vpack.c.b16 %v1664, %v1662
    %v1691 = vpack.c.b16 %v1667, %v1665
    %v1692 = vpack.c.b16 %v1668, %v1666
    %v1693 = vpack.c.b16 %v1671, %v1669
    %v1694 = vpack.c.b16 %v1672, %v1670
    %v1695 = vpack.c.b16 %v1675, %v1673
    %v1696 = vpack.c.b16 %v1676, %v1674
    %v1697 = vpack.c.b16 %v1679, %v1677
    %v1698 = vpack.c.b16 %v1680, %v1678
    %v1699 = vpack.c.b16 %v1683, %v1681
    %v1700 = vpack.c.b16 %v1684, %v1682
    %1717 = vmatprep.subr.bf16.mxu0 %v1686
    %1718 = vmatpush1.bf16.msra.mxu0 %v1685
    %1719 = vmatprep.subr.bf16.mxu0 %v1688
    %1720 = vmatpush1.bf16.msra.mxu0 %v1687
    %1721 = vmatprep.subr.bf16.mxu0 %v1690
    %1722 = vmatpush1.bf16.msra.mxu0 %v1689
    %1723 = vmatprep.subr.bf16.mxu0 %v1692
    %1724 = vmatpush1.bf16.msra.mxu0 %v1691
    %1725 = vmatprep.subr.bf16.mxu0 %v1694
    %1726 = vmatpush1.bf16.msra.mxu0 %v1693
    %1727 = vmatprep.subr.bf16.mxu0 %v1696
    %1728 = vmatpush1.bf16.msra.mxu0 %v1695
    %1729 = vmatprep.subr.bf16.mxu0 %v1698
    %1730 = vmatpush1.bf16.msra.mxu0 %v1697
    %1731 = vmatprep.subr.bf16.mxu0 %v1700
    %1732 = vmatpush1.bf16.msra.mxu0 %v1699
    %1733 = vmatprep.subr.bf16.mxu0 0
    %1734 = vmatpush1.bf16.msra.mxu0 0
    %1735 = vmatprep.subr.bf16.mxu0 0
    %1736 = vmatpush1.bf16.msra.mxu0 0
    %1737 = vmatprep.subr.bf16.mxu0 0
    %1738 = vmatpush1.bf16.msra.mxu0 0
    %1739 = vmatprep.subr.bf16.mxu0 0
    %1740 = vmatpush1.bf16.msra.mxu0 0
    %1741 = vmatprep.subr.bf16.mxu0 0
    %1742 = vmatpush1.bf16.msra.mxu0 0
    %1743 = vmatprep.subr.bf16.mxu0 0
    %1744 = vmatpush1.bf16.msra.mxu0 0
    %1745 = vmatprep.subr.bf16.mxu0 0
    %1746 = vmatpush1.bf16.msra.mxu0 0
    %1747 = vmatprep.subr.bf16.mxu0 0
    %1748 = vmatpush1.bf16.msra.mxu0 0
    %1749 = vmatprep.mubr.bf16.mxu0 0
    %1750 = vmatmul.mubr.bf16.gmra.mrb[0].mxu0 %v1628
    %v1751 = vpop.f32.mrb[0].mxu0
    %v1752 = vadd.f32 %v1632, %v1751
    %v1753 = vpop.f32.mrb[0].mxu0
    %v1754 = vadd.f32 %v1636, %v1753
    %v1755 = vpop.f32.mrb[0].mxu0
    %v1756 = vadd.f32 %v1632, %v1755
    %v1757 = vpop.f32.mrb[0].mxu0
    %v1758 = vadd.f32 %v1636, %v1757
    %1759 = vdwg.mxu0
    %v1760 = vld [vmem:[%s3] sm:$0xff]
    %v1761 = vld [vmem:[%s3 + $0x8] sm:$0xff]
    %1764 = vrot.lane.b32.xlu0 %v1622, 96
    %v1765 = vpop.permute.xlu0 %1764
    %1766 = vrot.lane.b32.xlu0 %v1625, 96
    %v1767 = vpop.permute.xlu0 %1766
    %1770 = vrot.lane.b32.xlu0 %v1622, 64
    %v1771 = vpop.permute.xlu0 %1770
    %1772 = vrot.lane.b32.xlu0 %v1625, 64
    %v1773 = vpop.permute.xlu0 %1772
    %1776 = vrot.lane.b32.xlu0 %v1622, 32
    %v1777 = vpop.permute.xlu0 %1776
    %1778 = vrot.lane.b32.xlu0 %v1625, 32
    %v1779 = vpop.permute.xlu0 %1778
    %v1782 = vpack.c.bf16 %v1622, %v1622
    %v1783 = vpack.c.bf16 %v1625, %v1625
    %v1784 = vpack.c.bf16 %v1765, %v1765
    %v1785 = vpack.c.bf16 %v1767, %v1767
    %v1786 = vpack.c.bf16 %v1771, %v1771
    %v1787 = vpack.c.bf16 %v1773, %v1773
    %v1788 = vpack.c.bf16 %v1777, %v1777
    %v1789 = vpack.c.bf16 %v1779, %v1779
    %1792 = vrot.lane.b32.xlu0 %v1752, 96
    %v1793 = vpop.permute.xlu0 %1792
    %1794 = vrot.lane.b32.xlu0 %v1756, 96
    %v1795 = vpop.permute.xlu0 %1794
    %1798 = vrot.lane.b32.xlu0 %v1752, 64
    %v1799 = vpop.permute.xlu0 %1798
    %1800 = vrot.lane.b32.xlu0 %v1756, 64
    %v1801 = vpop.permute.xlu0 %1800
    %1804 = vrot.lane.b32.xlu0 %v1752, 32
    %v1805 = vpop.permute.xlu0 %1804
    %1806 = vrot.lane.b32.xlu0 %v1756, 32
    %v1807 = vpop.permute.xlu0 %1806
    %v1810 = vpack.c.bf16 %v1752, %v1752
    %v1811 = vpack.c.bf16 %v1756, %v1756
    %v1812 = vpack.c.bf16 %v1793, %v1793
    %v1813 = vpack.c.bf16 %v1795, %v1795
    %v1814 = vpack.c.bf16 %v1799, %v1799
    %v1815 = vpack.c.bf16 %v1801, %v1801
    %v1816 = vpack.c.bf16 %v1805, %v1805
    %v1817 = vpack.c.bf16 %v1807, %v1807
    %1820 = vrot.lane.b32.xlu0 %v1754, 96
    %v1821 = vpop.permute.xlu0 %1820
    %1822 = vrot.lane.b32.xlu0 %v1758, 96
    %v1823 = vpop.permute.xlu0 %1822
    %1826 = vrot.lane.b32.xlu0 %v1754, 64
    %v1827 = vpop.permute.xlu0 %1826
    %1828 = vrot.lane.b32.xlu0 %v1758, 64
    %v1829 = vpop.permute.xlu0 %1828
    %1832 = vrot.lane.b32.xlu0 %v1754, 32
    %v1833 = vpop.permute.xlu0 %1832
    %1834 = vrot.lane.b32.xlu0 %v1758, 32
    %v1835 = vpop.permute.xlu0 %1834
    %v1838 = vpack.c.bf16 %v1754, %v1754
    %v1839 = vpack.c.bf16 %v1758, %v1758
    %v1840 = vpack.c.bf16 %v1821, %v1821
    %v1841 = vpack.c.bf16 %v1823, %v1823
    %v1842 = vpack.c.bf16 %v1827, %v1827
    %v1843 = vpack.c.bf16 %v1829, %v1829
    %v1844 = vpack.c.bf16 %v1833, %v1833
    %v1845 = vpack.c.bf16 %v1835, %v1835
    %v1847 = vsel %vm520, %v1782, 0
    %v1850 = vsel %vm520, %v1810, 0
    %1852 = vmatprep.subr.bf16.mxu0 0
    %1853 = vmatpush1.bf16.xpose.msra.mxu0 %v1850
    %1854 = vmatprep.subr.bf16.mxu0 0
    %1855 = vmatpush1.bf16.xpose.msra.mxu0 0
    %1856 = vmatprep.subr.bf16.mxu0 0
    %1857 = vmatpush1.bf16.xpose.msra.mxu0 0
    %1858 = vmatprep.subr.bf16.mxu0 0
    %1859 = vmatpush1.bf16.xpose.msra.mxu0 0
    %1860 = vmatprep.subr.bf16.mxu0 0
    %1861 = vmatpush1.bf16.xpose.msra.mxu0 0
    %1862 = vmatprep.subr.bf16.mxu0 0
    %1863 = vmatpush1.bf16.xpose.msra.mxu0 0
    %1864 = vmatprep.subr.bf16.mxu0 0
    %1865 = vmatpush1.bf16.xpose.msra.mxu0 0
    %1866 = vmatprep.subr.bf16.mxu0 0
    %1867 = vmatpush1.bf16.xpose.msra.mxu0 0
    %1868 = vmatprep.subr.bf16.mxu0 0
    %1869 = vmatpush1.bf16.xpose.msra.mxu0 0
    %1870 = vmatprep.subr.bf16.mxu0 0
    %1871 = vmatpush1.bf16.xpose.msra.mxu0 0
    %1872 = vmatprep.subr.bf16.mxu0 0
    %1873 = vmatpush1.bf16.xpose.msra.mxu0 0
    %1874 = vmatprep.subr.bf16.mxu0 0
    %1875 = vmatpush1.bf16.xpose.msra.mxu0 0
    %1876 = vmatprep.subr.bf16.mxu0 0
    %1877 = vmatpush1.bf16.xpose.msra.mxu0 0
    %1878 = vmatprep.subr.bf16.mxu0 0
    %1879 = vmatpush1.bf16.xpose.msra.mxu0 0
    %1880 = vmatprep.subr.bf16.mxu0 0
    %1881 = vmatpush1.bf16.xpose.msra.mxu0 0
    %1882 = vmatprep.subr.bf16.mxu0 0
    %1883 = vmatpush1.bf16.xpose.msra.mxu0 0
    %1884 = vmatprep.mubr.bf16.mxu0 0
    %1885 = vmatmul.mubr.bf16.gmra.mrb[0].mxu0 %v1847
    %v1886 = vpop.f32.mrb[0].mxu0
    %v1887 = vadd.f32 0.0, %v1886
    %v1888 = vpop.f32.mrb[0].mxu0
    %v1889 = vpop.f32.mrb[0].mxu0
    %v1890 = vpop.f32.mrb[0].mxu0
    %1891 = vdwg.mxu0
    %v1893 = vsel %vm520, %v1783, 0
    %v1896 = vsel %vm520, %v1811, 0
    %1898 = vmatprep.subr.bf16.mxu0 0
    %1899 = vmatpush1.bf16.xpose.msra.mxu0 %v1896
    %1900 = vmatprep.subr.bf16.mxu0 0
    %1901 = vmatpush1.bf16.xpose.msra.mxu0 0
    %1902 = vmatprep.subr.bf16.mxu0 0
    %1903 = vmatpush1.bf16.xpose.msra.mxu0 0
    %1904 = vmatprep.subr.bf16.mxu0 0
    %1905 = vmatpush1.bf16.xpose.msra.mxu0 0
    %1906 = vmatprep.subr.bf16.mxu0 0
    %1907 = vmatpush1.bf16.xpose.msra.mxu0 0
    %1908 = vmatprep.subr.bf16.mxu0 0
    %1909 = vmatpush1.bf16.xpose.msra.mxu0 0
    %1910 = vmatprep.subr.bf16.mxu0 0
    %1911 = vmatpush1.bf16.xpose.msra.mxu0 0
    %1912 = vmatprep.subr.bf16.mxu0 0
    %1913 = vmatpush1.bf16.xpose.msra.mxu0 0
    %1914 = vmatprep.subr.bf16.mxu0 0
    %1915 = vmatpush1.bf16.xpose.msra.mxu0 0
    %1916 = vmatprep.subr.bf16.mxu0 0
    %1917 = vmatpush1.bf16.xpose.msra.mxu0 0
    %1918 = vmatprep.subr.bf16.mxu0 0
    %1919 = vmatpush1.bf16.xpose.msra.mxu0 0
    %1920 = vmatprep.subr.bf16.mxu0 0
    %1921 = vmatpush1.bf16.xpose.msra.mxu0 0
    %1922 = vmatprep.subr.bf16.mxu0 0
    %1923 = vmatpush1.bf16.xpose.msra.mxu0 0
    %1924 = vmatprep.subr.bf16.mxu0 0
    %1925 = vmatpush1.bf16.xpose.msra.mxu0 0
    %1926 = vmatprep.subr.bf16.mxu0 0
    %1927 = vmatpush1.bf16.xpose.msra.mxu0 0
    %1928 = vmatprep.subr.bf16.mxu0 0
    %1929 = vmatpush1.bf16.xpose.msra.mxu0 0
    %1930 = vmatprep.mubr.bf16.mxu0 0
    %1931 = vmatmul.mubr.bf16.gmra.mrb[0].mxu0 %v1893
    %v1932 = vpop.f32.mrb[0].mxu0
    %v1933 = vadd.f32 0.0, %v1932
    %v1934 = vpop.f32.mrb[0].mxu0
    %v1935 = vpop.f32.mrb[0].mxu0
    %v1936 = vpop.f32.mrb[0].mxu0
    %1937 = vdwg.mxu0
    %v1939 = vsel %vm520, %v1784, 0
    %v1942 = vsel %vm520, %v1812, 0
    %1944 = vmatprep.subr.bf16.mxu0 0
    %1945 = vmatpush1.bf16.xpose.msra.mxu0 %v1942
    %1946 = vmatprep.subr.bf16.mxu0 0
    %1947 = vmatpush1.bf16.xpose.msra.mxu0 0
    %1948 = vmatprep.subr.bf16.mxu0 0
    %1949 = vmatpush1.bf16.xpose.msra.mxu0 0
    %1950 = vmatprep.subr.bf16.mxu0 0
    %1951 = vmatpush1.bf16.xpose.msra.mxu0 0
    %1952 = vmatprep.subr.bf16.mxu0 0
    %1953 = vmatpush1.bf16.xpose.msra.mxu0 0
    %1954 = vmatprep.subr.bf16.mxu0 0
    %1955 = vmatpush1.bf16.xpose.msra.mxu0 0
    %1956 = vmatprep.subr.bf16.mxu0 0
    %1957 = vmatpush1.bf16.xpose.msra.mxu0 0
    %1958 = vmatprep.subr.bf16.mxu0 0
    %1959 = vmatpush1.bf16.xpose.msra.mxu0 0
    %1960 = vmatprep.subr.bf16.mxu0 0
    %1961 = vmatpush1.bf16.xpose.msra.mxu0 0
    %1962 = vmatprep.subr.bf16.mxu0 0
    %1963 = vmatpush1.bf16.xpose.msra.mxu0 0
    %1964 = vmatprep.subr.bf16.mxu0 0
    %1965 = vmatpush1.bf16.xpose.msra.mxu0 0
    %1966 = vmatprep.subr.bf16.mxu0 0
    %1967 = vmatpush1.bf16.xpose.msra.mxu0 0
    %1968 = vmatprep.subr.bf16.mxu0 0
    %1969 = vmatpush1.bf16.xpose.msra.mxu0 0
    %1970 = vmatprep.subr.bf16.mxu0 0
    %1971 = vmatpush1.bf16.xpose.msra.mxu0 0
    %1972 = vmatprep.subr.bf16.mxu0 0
    %1973 = vmatpush1.bf16.xpose.msra.mxu0 0
    %1974 = vmatprep.subr.bf16.mxu0 0
    %1975 = vmatpush1.bf16.xpose.msra.mxu0 0
    %1976 = vmatprep.mubr.bf16.mxu0 0
    %1977 = vmatmul.mubr.bf16.gmra.mrb[0].mxu0 %v1939
    %v1978 = vpop.f32.mrb[0].mxu0
    %v1979 = vadd.f32 0.0, %v1978
    %v1980 = vpop.f32.mrb[0].mxu0
    %v1981 = vpop.f32.mrb[0].mxu0
    %v1982 = vpop.f32.mrb[0].mxu0
    %1983 = vdwg.mxu0
    %v1985 = vsel %vm520, %v1785, 0
    %v1988 = vsel %vm520, %v1813, 0
    %1990 = vmatprep.subr.bf16.mxu0 0
    %1991 = vmatpush1.bf16.xpose.msra.mxu0 %v1988
    %1992 = vmatprep.subr.bf16.mxu0 0
    %1993 = vmatpush1.bf16.xpose.msra.mxu0 0
    %1994 = vmatprep.subr.bf16.mxu0 0
    %1995 = vmatpush1.bf16.xpose.msra.mxu0 0
    %1996 = vmatprep.subr.bf16.mxu0 0
    %1997 = vmatpush1.bf16.xpose.msra.mxu0 0
    %1998 = vmatprep.subr.bf16.mxu0 0
    %1999 = vmatpush1.bf16.xpose.msra.mxu0 0
    %2000 = vmatprep.subr.bf16.mxu0 0
    %2001 = vmatpush1.bf16.xpose.msra.mxu0 0
    %2002 = vmatprep.subr.bf16.mxu0 0
    %2003 = vmatpush1.bf16.xpose.msra.mxu0 0
    %2004 = vmatprep.subr.bf16.mxu0 0
    %2005 = vmatpush1.bf16.xpose.msra.mxu0 0
    %2006 = vmatprep.subr.bf16.mxu0 0
    %2007 = vmatpush1.bf16.xpose.msra.mxu0 0
    %2008 = vmatprep.subr.bf16.mxu0 0
    %2009 = vmatpush1.bf16.xpose.msra.mxu0 0
    %2010 = vmatprep.subr.bf16.mxu0 0
    %2011 = vmatpush1.bf16.xpose.msra.mxu0 0
    %2012 = vmatprep.subr.bf16.mxu0 0
    %2013 = vmatpush1.bf16.xpose.msra.mxu0 0
    %2014 = vmatprep.subr.bf16.mxu0 0
    %2015 = vmatpush1.bf16.xpose.msra.mxu0 0
    %2016 = vmatprep.subr.bf16.mxu0 0
    %2017 = vmatpush1.bf16.xpose.msra.mxu0 0
    %2018 = vmatprep.subr.bf16.mxu0 0
    %2019 = vmatpush1.bf16.xpose.msra.mxu0 0
    %2020 = vmatprep.subr.bf16.mxu0 0
    %2021 = vmatpush1.bf16.xpose.msra.mxu0 0
    %2022 = vmatprep.mubr.bf16.mxu0 0
    %2023 = vmatmul.mubr.bf16.gmra.mrb[0].mxu0 %v1985
    %v2024 = vpop.f32.mrb[0].mxu0
    %v2025 = vadd.f32 0.0, %v2024
    %v2026 = vpop.f32.mrb[0].mxu0
    %v2027 = vpop.f32.mrb[0].mxu0
    %v2028 = vpop.f32.mrb[0].mxu0
    %2029 = vdwg.mxu0
    %v2031 = vsel %vm520, %v1786, 0
    %v2034 = vsel %vm520, %v1814, 0
    %2036 = vmatprep.subr.bf16.mxu0 0
    %2037 = vmatpush1.bf16.xpose.msra.mxu0 %v2034
    %2038 = vmatprep.subr.bf16.mxu0 0
    %2039 = vmatpush1.bf16.xpose.msra.mxu0 0
    %2040 = vmatprep.subr.bf16.mxu0 0
    %2041 = vmatpush1.bf16.xpose.msra.mxu0 0
    %2042 = vmatprep.subr.bf16.mxu0 0
    %2043 = vmatpush1.bf16.xpose.msra.mxu0 0
    %2044 = vmatprep.subr.bf16.mxu0 0
    %2045 = vmatpush1.bf16.xpose.msra.mxu0 0
    %2046 = vmatprep.subr.bf16.mxu0 0
    %2047 = vmatpush1.bf16.xpose.msra.mxu0 0
    %2048 = vmatprep.subr.bf16.mxu0 0
    %2049 = vmatpush1.bf16.xpose.msra.mxu0 0
    %2050 = vmatprep.subr.bf16.mxu0 0
    %2051 = vmatpush1.bf16.xpose.msra.mxu0 0
    %2052 = vmatprep.subr.bf16.mxu0 0
    %2053 = vmatpush1.bf16.xpose.msra.mxu0 0
    %2054 = vmatprep.subr.bf16.mxu0 0
    %2055 = vmatpush1.bf16.xpose.msra.mxu0 0
    %2056 = vmatprep.subr.bf16.mxu0 0
    %2057 = vmatpush1.bf16.xpose.msra.mxu0 0
    %2058 = vmatprep.subr.bf16.mxu0 0
    %2059 = vmatpush1.bf16.xpose.msra.mxu0 0
    %2060 = vmatprep.subr.bf16.mxu0 0
    %2061 = vmatpush1.bf16.xpose.msra.mxu0 0
    %2062 = vmatprep.subr.bf16.mxu0 0
    %2063 = vmatpush1.bf16.xpose.msra.mxu0 0
    %2064 = vmatprep.subr.bf16.mxu0 0
    %2065 = vmatpush1.bf16.xpose.msra.mxu0 0
    %2066 = vmatprep.subr.bf16.mxu0 0
    %2067 = vmatpush1.bf16.xpose.msra.mxu0 0
    %2068 = vmatprep.mubr.bf16.mxu0 0
    %2069 = vmatmul.mubr.bf16.gmra.mrb[0].mxu0 %v2031
    %v2070 = vpop.f32.mrb[0].mxu0
    %v2071 = vadd.f32 0.0, %v2070
    %v2072 = vpop.f32.mrb[0].mxu0
    %v2073 = vpop.f32.mrb[0].mxu0
    %v2074 = vpop.f32.mrb[0].mxu0
    %2075 = vdwg.mxu0
    %v2077 = vsel %vm520, %v1787, 0
    %v2080 = vsel %vm520, %v1815, 0
    %2082 = vmatprep.subr.bf16.mxu0 0
    %2083 = vmatpush1.bf16.xpose.msra.mxu0 %v2080
    %2084 = vmatprep.subr.bf16.mxu0 0
    %2085 = vmatpush1.bf16.xpose.msra.mxu0 0
    %2086 = vmatprep.subr.bf16.mxu0 0
    %2087 = vmatpush1.bf16.xpose.msra.mxu0 0
    %2088 = vmatprep.subr.bf16.mxu0 0
    %2089 = vmatpush1.bf16.xpose.msra.mxu0 0
    %2090 = vmatprep.subr.bf16.mxu0 0
    %2091 = vmatpush1.bf16.xpose.msra.mxu0 0
    %2092 = vmatprep.subr.bf16.mxu0 0
    %2093 = vmatpush1.bf16.xpose.msra.mxu0 0
    %2094 = vmatprep.subr.bf16.mxu0 0
    %2095 = vmatpush1.bf16.xpose.msra.mxu0 0
    %2096 = vmatprep.subr.bf16.mxu0 0
    %2097 = vmatpush1.bf16.xpose.msra.mxu0 0
    %2098 = vmatprep.subr.bf16.mxu0 0
    %2099 = vmatpush1.bf16.xpose.msra.mxu0 0
    %2100 = vmatprep.subr.bf16.mxu0 0
    %2101 = vmatpush1.bf16.xpose.msra.mxu0 0
    %2102 = vmatprep.subr.bf16.mxu0 0
    %2103 = vmatpush1.bf16.xpose.msra.mxu0 0
    %2104 = vmatprep.subr.bf16.mxu0 0
    %2105 = vmatpush1.bf16.xpose.msra.mxu0 0
    %2106 = vmatprep.subr.bf16.mxu0 0
    %2107 = vmatpush1.bf16.xpose.msra.mxu0 0
    %2108 = vmatprep.subr.bf16.mxu0 0
    %2109 = vmatpush1.bf16.xpose.msra.mxu0 0
    %2110 = vmatprep.subr.bf16.mxu0 0
    %2111 = vmatpush1.bf16.xpose.msra.mxu0 0
    %2112 = vmatprep.subr.bf16.mxu0 0
    %2113 = vmatpush1.bf16.xpose.msra.mxu0 0
    %2114 = vmatprep.mubr.bf16.mxu0 0
    %2115 = vmatmul.mubr.bf16.gmra.mrb[0].mxu0 %v2077
    %v2116 = vpop.f32.mrb[0].mxu0
    %v2117 = vadd.f32 0.0, %v2116
    %v2118 = vpop.f32.mrb[0].mxu0
    %v2119 = vpop.f32.mrb[0].mxu0
    %v2120 = vpop.f32.mrb[0].mxu0
    %2121 = vdwg.mxu0
    %v2123 = vsel %vm520, %v1788, 0
    %v2126 = vsel %vm520, %v1816, 0
    %2128 = vmatprep.subr.bf16.mxu0 0
    %2129 = vmatpush1.bf16.xpose.msra.mxu0 %v2126
    %2130 = vmatprep.subr.bf16.mxu0 0
    %2131 = vmatpush1.bf16.xpose.msra.mxu0 0
    %2132 = vmatprep.subr.bf16.mxu0 0
    %2133 = vmatpush1.bf16.xpose.msra.mxu0 0
    %2134 = vmatprep.subr.bf16.mxu0 0
    %2135 = vmatpush1.bf16.xpose.msra.mxu0 0
    %2136 = vmatprep.subr.bf16.mxu0 0
    %2137 = vmatpush1.bf16.xpose.msra.mxu0 0
    %2138 = vmatprep.subr.bf16.mxu0 0
    %2139 = vmatpush1.bf16.xpose.msra.mxu0 0
    %2140 = vmatprep.subr.bf16.mxu0 0
    %2141 = vmatpush1.bf16.xpose.msra.mxu0 0
    %2142 = vmatprep.subr.bf16.mxu0 0
    %2143 = vmatpush1.bf16.xpose.msra.mxu0 0
    %2144 = vmatprep.subr.bf16.mxu0 0
    %2145 = vmatpush1.bf16.xpose.msra.mxu0 0
    %2146 = vmatprep.subr.bf16.mxu0 0
    %2147 = vmatpush1.bf16.xpose.msra.mxu0 0
    %2148 = vmatprep.subr.bf16.mxu0 0
    %2149 = vmatpush1.bf16.xpose.msra.mxu0 0
    %2150 = vmatprep.subr.bf16.mxu0 0
    %2151 = vmatpush1.bf16.xpose.msra.mxu0 0
    %2152 = vmatprep.subr.bf16.mxu0 0
    %2153 = vmatpush1.bf16.xpose.msra.mxu0 0
    %2154 = vmatprep.subr.bf16.mxu0 0
    %2155 = vmatpush1.bf16.xpose.msra.mxu0 0
    %2156 = vmatprep.subr.bf16.mxu0 0
    %2157 = vmatpush1.bf16.xpose.msra.mxu0 0
    %2158 = vmatprep.subr.bf16.mxu0 0
    %2159 = vmatpush1.bf16.xpose.msra.mxu0 0
    %2160 = vmatprep.mubr.bf16.mxu0 0
    %2161 = vmatmul.mubr.bf16.gmra.mrb[0].mxu0 %v2123
    %v2162 = vpop.f32.mrb[0].mxu0
    %v2163 = vadd.f32 0.0, %v2162
    %v2164 = vpop.f32.mrb[0].mxu0
    %v2165 = vpop.f32.mrb[0].mxu0
    %v2166 = vpop.f32.mrb[0].mxu0
    %2167 = vdwg.mxu0
    %v2169 = vsel %vm520, %v1789, 0
    %v2172 = vsel %vm520, %v1817, 0
    %2174 = vmatprep.subr.bf16.mxu0 0
    %2175 = vmatpush1.bf16.xpose.msra.mxu0 %v2172
    %2176 = vmatprep.subr.bf16.mxu0 0
    %2177 = vmatpush1.bf16.xpose.msra.mxu0 0
    %2178 = vmatprep.subr.bf16.mxu0 0
    %2179 = vmatpush1.bf16.xpose.msra.mxu0 0
    %2180 = vmatprep.subr.bf16.mxu0 0
    %2181 = vmatpush1.bf16.xpose.msra.mxu0 0
    %2182 = vmatprep.subr.bf16.mxu0 0
    %2183 = vmatpush1.bf16.xpose.msra.mxu0 0
    %2184 = vmatprep.subr.bf16.mxu0 0
    %2185 = vmatpush1.bf16.xpose.msra.mxu0 0
    %2186 = vmatprep.subr.bf16.mxu0 0
    %2187 = vmatpush1.bf16.xpose.msra.mxu0 0
    %2188 = vmatprep.subr.bf16.mxu0 0
    %2189 = vmatpush1.bf16.xpose.msra.mxu0 0
    %2190 = vmatprep.subr.bf16.mxu0 0
    %2191 = vmatpush1.bf16.xpose.msra.mxu0 0
    %2192 = vmatprep.subr.bf16.mxu0 0
    %2193 = vmatpush1.bf16.xpose.msra.mxu0 0
    %2194 = vmatprep.subr.bf16.mxu0 0
    %2195 = vmatpush1.bf16.xpose.msra.mxu0 0
    %2196 = vmatprep.subr.bf16.mxu0 0
    %2197 = vmatpush1.bf16.xpose.msra.mxu0 0
    %2198 = vmatprep.subr.bf16.mxu0 0
    %2199 = vmatpush1.bf16.xpose.msra.mxu0 0
    %2200 = vmatprep.subr.bf16.mxu0 0
    %2201 = vmatpush1.bf16.xpose.msra.mxu0 0
    %2202 = vmatprep.subr.bf16.mxu0 0
    %2203 = vmatpush1.bf16.xpose.msra.mxu0 0
    %2204 = vmatprep.subr.bf16.mxu0 0
    %2205 = vmatpush1.bf16.xpose.msra.mxu0 0
    %2206 = vmatprep.mubr.bf16.mxu0 0
    %2207 = vmatmul.mubr.bf16.gmra.mrb[0].mxu0 %v2169
    %v2208 = vpop.f32.mrb[0].mxu0
    %v2209 = vadd.f32 0.0, %v2208
    %v2210 = vpop.f32.mrb[0].mxu0
    %v2211 = vpop.f32.mrb[0].mxu0
    %v2212 = vpop.f32.mrb[0].mxu0
    %2213 = vdwg.mxu0
    %v2214 = vmul.f32 %v1887, 0.17677669
    %v2215 = vmul.f32 %v1933, 0.17677669
    %v2216 = vmul.f32 %v1979, 0.17677669
    %v2217 = vmul.f32 %v2025, 0.17677669
    %v2218 = vmul.f32 %v2071, 0.17677669
    %v2219 = vmul.f32 %v2117, 0.17677669
    %v2220 = vmul.f32 %v2163, 0.17677669
    %v2221 = vmul.f32 %v2209, 0.17677669
    %v2222 = vadd.f32 %v2214, %v1760
    %v2223 = vadd.f32 %v2215, %v1761
    %v2224 = vadd.f32 %v2216, %v1760
    %v2225 = vadd.f32 %v2217, %v1761
    %v2226 = vadd.f32 %v2218, %v1760
    %v2227 = vadd.f32 %v2219, %v1761
    %v2228 = vadd.f32 %v2220, %v1760
    %v2229 = vadd.f32 %v2221, %v1761
    %v2230 = vsel %vm905, %v2222, -inf
    %2231 = vmax.xlane.f32.xlu0 %v2230
    %v2232 = vpop.xlane.xlu0 %2231
    %v2233 = vsel %vm905, %v2223, -inf
    %2234 = vmax.xlane.f32.xlu0 %v2233
    %v2235 = vpop.xlane.xlu0 %2234
    %v2236 = vsel %vm905, %v2224, -inf
    %2237 = vmax.xlane.f32.xlu0 %v2236
    %v2238 = vpop.xlane.xlu0 %2237
    %v2239 = vsel %vm905, %v2225, -inf
    %2240 = vmax.xlane.f32.xlu0 %v2239
    %v2241 = vpop.xlane.xlu0 %2240
    %v2242 = vsel %vm905, %v2226, -inf
    %2243 = vmax.xlane.f32.xlu0 %v2242
    %v2244 = vpop.xlane.xlu0 %2243
    %v2245 = vsel %vm905, %v2227, -inf
    %2246 = vmax.xlane.f32.xlu0 %v2245
    %v2247 = vpop.xlane.xlu0 %2246
    %v2248 = vsel %vm905, %v2228, -inf
    %2249 = vmax.xlane.f32.xlu0 %v2248
    %v2250 = vpop.xlane.xlu0 %2249
    %v2251 = vsel %vm905, %v2229, -inf
    %2252 = vmax.xlane.f32.xlu0 %v2251
    %v2253 = vpop.xlane.xlu0 %2252
    %v2254 = vsub.f32 %v2222, %v2232
    %v2255 = vsub.f32 %v2223, %v2235
    %v2256 = vsub.f32 %v2224, %v2238
    %v2257 = vsub.f32 %v2225, %v2241
    %v2258 = vsub.f32 %v2226, %v2244
    %v2259 = vsub.f32 %v2227, %v2247
    %v2260 = vsub.f32 %v2228, %v2250
    %v2261 = vsub.f32 %v2229, %v2253
    %v2262 = vmul.f32 %v2254, 1.442695
    %v2263 = vpow.pop %v2262
    %v2264 = vmul.f32 %v2255, 1.442695
    %v2265 = vpow.pop %v2264
    %v2266 = vmul.f32 %v2256, 1.442695
    %v2267 = vpow.pop %v2266
    %v2268 = vmul.f32 %v2257, 1.442695
    %v2269 = vpow.pop %v2268
    %v2270 = vmul.f32 %v2258, 1.442695
    %v2271 = vpow.pop %v2270
    %v2272 = vmul.f32 %v2259, 1.442695
    %v2273 = vpow.pop %v2272
    %v2274 = vmul.f32 %v2260, 1.442695
    %v2275 = vpow.pop %v2274
    %v2276 = vmul.f32 %v2261, 1.442695
    %v2277 = vpow.pop %v2276
    %v2278 = vsel %vm905, %v2263, 0.0
    %2279 = vadd.xlane.f32.xlu0 %v2278
    %v2280 = vpop.xlane.xlu0 %2279
    %v2281 = vsel %vm905, %v2265, 0.0
    %2282 = vadd.xlane.f32.xlu0 %v2281
    %v2283 = vpop.xlane.xlu0 %2282
    %v2284 = vsel %vm905, %v2267, 0.0
    %2285 = vadd.xlane.f32.xlu0 %v2284
    %v2286 = vpop.xlane.xlu0 %2285
    %v2287 = vsel %vm905, %v2269, 0.0
    %2288 = vadd.xlane.f32.xlu0 %v2287
    %v2289 = vpop.xlane.xlu0 %2288
    %v2290 = vsel %vm905, %v2271, 0.0
    %2291 = vadd.xlane.f32.xlu0 %v2290
    %v2292 = vpop.xlane.xlu0 %2291
    %v2293 = vsel %vm905, %v2273, 0.0
    %2294 = vadd.xlane.f32.xlu0 %v2293
    %v2295 = vpop.xlane.xlu0 %2294
    %v2296 = vsel %vm905, %v2275, 0.0
    %2297 = vadd.xlane.f32.xlu0 %v2296
    %v2298 = vpop.xlane.xlu0 %2297
    %v2299 = vsel %vm905, %v2277, 0.0
    %2300 = vadd.xlane.f32.xlu0 %v2299
    %v2301 = vpop.xlane.xlu0 %2300
    %v2302 = vrcp.pop %v2280
    %v2303 = vrcp.pop %v2283
    %v2304 = vrcp.pop %v2286
    %v2305 = vrcp.pop %v2289
    %v2306 = vrcp.pop %v2292
    %v2307 = vrcp.pop %v2295
    %v2308 = vrcp.pop %v2298
    %v2309 = vrcp.pop %v2301
    %v2310 = vmul.f32 %v2263, %v2302
    %v2311 = vmul.f32 %v2265, %v2303
    %v2312 = vmul.f32 %v2267, %v2304
    %v2313 = vmul.f32 %v2269, %v2305
    %v2314 = vmul.f32 %v2271, %v2306
    %v2315 = vmul.f32 %v2273, %v2307
    %v2316 = vmul.f32 %v2275, %v2308
    %v2317 = vmul.f32 %v2277, %v2309
    %v2318 = vpack.c.bf16 %v2310, %v2310
    %v2319 = vpack.c.bf16 %v2311, %v2311
    %v2320 = vpack.c.bf16 %v2312, %v2312
    %v2321 = vpack.c.bf16 %v2313, %v2313
    %v2322 = vpack.c.bf16 %v2314, %v2314
    %v2323 = vpack.c.bf16 %v2315, %v2315
    %v2324 = vpack.c.bf16 %v2316, %v2316
    %v2325 = vpack.c.bf16 %v2317, %v2317
    %v2327 = vsel %vm905, %v2318, 0
    %v2330 = vsel %vm1005, %v1838, 0
    %2332 = vmatprep.subr.bf16.mxu0 0
    %2333 = vmatpush1.bf16.msra.mxu0 %v2330
    %2334 = vmatprep.subr.bf16.mxu0 0
    %2335 = vmatpush1.bf16.msra.mxu0 0
    %2336 = vmatprep.subr.bf16.mxu0 0
    %2337 = vmatpush1.bf16.msra.mxu0 0
    %2338 = vmatprep.subr.bf16.mxu0 0
    %2339 = vmatpush1.bf16.msra.mxu0 0
    %2340 = vmatprep.subr.bf16.mxu0 0
    %2341 = vmatpush1.bf16.msra.mxu0 0
    %2342 = vmatprep.subr.bf16.mxu0 0
    %2343 = vmatpush1.bf16.msra.mxu0 0
    %2344 = vmatprep.subr.bf16.mxu0 0
    %2345 = vmatpush1.bf16.msra.mxu0 0
    %2346 = vmatprep.subr.bf16.mxu0 0
    %2347 = vmatpush1.bf16.msra.mxu0 0
    %2348 = vmatprep.subr.bf16.mxu0 0
    %2349 = vmatpush1.bf16.msra.mxu0 0
    %2350 = vmatprep.subr.bf16.mxu0 0
    %2351 = vmatpush1.bf16.msra.mxu0 0
    %2352 = vmatprep.subr.bf16.mxu0 0
    %2353 = vmatpush1.bf16.msra.mxu0 0
    %2354 = vmatprep.subr.bf16.mxu0 0
    %2355 = vmatpush1.bf16.msra.mxu0 0
    %2356 = vmatprep.subr.bf16.mxu0 0
    %2357 = vmatpush1.bf16.msra.mxu0 0
    %2358 = vmatprep.subr.bf16.mxu0 0
    %2359 = vmatpush1.bf16.msra.mxu0 0
    %2360 = vmatprep.subr.bf16.mxu0 0
    %2361 = vmatpush1.bf16.msra.mxu0 0
    %2362 = vmatprep.subr.bf16.mxu0 0
    %2363 = vmatpush1.bf16.msra.mxu0 0
    %2364 = vmatprep.mubr.bf16.mxu0 0
    %2365 = vmatmul.mubr.bf16.gmra.mrb[0].mxu0 %v2327
    %v2366 = vpop.f32.mrb[0].mxu0
    %v2367 = vadd.f32 0.0, %v2366
    %v2368 = vpop.f32.mrb[0].mxu0
    %v2369 = vpop.f32.mrb[0].mxu0
    %v2370 = vpop.f32.mrb[0].mxu0
    %2371 = vdwg.mxu0
    %v2373 = vsel %vm905, %v2319, 0
    %v2376 = vsel %vm1005, %v1839, 0
    %2378 = vmatprep.subr.bf16.mxu0 0
    %2379 = vmatpush1.bf16.msra.mxu0 %v2376
    %2380 = vmatprep.subr.bf16.mxu0 0
    %2381 = vmatpush1.bf16.msra.mxu0 0
    %2382 = vmatprep.subr.bf16.mxu0 0
    %2383 = vmatpush1.bf16.msra.mxu0 0
    %2384 = vmatprep.subr.bf16.mxu0 0
    %2385 = vmatpush1.bf16.msra.mxu0 0
    %2386 = vmatprep.subr.bf16.mxu0 0
    %2387 = vmatpush1.bf16.msra.mxu0 0
    %2388 = vmatprep.subr.bf16.mxu0 0
    %2389 = vmatpush1.bf16.msra.mxu0 0
    %2390 = vmatprep.subr.bf16.mxu0 0
    %2391 = vmatpush1.bf16.msra.mxu0 0
    %2392 = vmatprep.subr.bf16.mxu0 0
    %2393 = vmatpush1.bf16.msra.mxu0 0
    %2394 = vmatprep.subr.bf16.mxu0 0
    %2395 = vmatpush1.bf16.msra.mxu0 0
    %2396 = vmatprep.subr.bf16.mxu0 0
    %2397 = vmatpush1.bf16.msra.mxu0 0
    %2398 = vmatprep.subr.bf16.mxu0 0
    %2399 = vmatpush1.bf16.msra.mxu0 0
    %2400 = vmatprep.subr.bf16.mxu0 0
    %2401 = vmatpush1.bf16.msra.mxu0 0
    %2402 = vmatprep.subr.bf16.mxu0 0
    %2403 = vmatpush1.bf16.msra.mxu0 0
    %2404 = vmatprep.subr.bf16.mxu0 0
    %2405 = vmatpush1.bf16.msra.mxu0 0
    %2406 = vmatprep.subr.bf16.mxu0 0
    %2407 = vmatpush1.bf16.msra.mxu0 0
    %2408 = vmatprep.subr.bf16.mxu0 0
    %2409 = vmatpush1.bf16.msra.mxu0 0
    %2410 = vmatprep.mubr.bf16.mxu0 0
    %2411 = vmatmul.mubr.bf16.gmra.mrb[0].mxu0 %v2373
    %v2412 = vpop.f32.mrb[0].mxu0
    %v2413 = vadd.f32 0.0, %v2412
    %v2414 = vpop.f32.mrb[0].mxu0
    %v2415 = vpop.f32.mrb[0].mxu0
    %v2416 = vpop.f32.mrb[0].mxu0
    %2417 = vdwg.mxu0
    %v2419 = vsel %vm905, %v2320, 0
    %v2422 = vsel %vm1005, %v1840, 0
    %2424 = vmatprep.subr.bf16.mxu0 0
    %2425 = vmatpush1.bf16.msra.mxu0 %v2422
    %2426 = vmatprep.subr.bf16.mxu0 0
    %2427 = vmatpush1.bf16.msra.mxu0 0
    %2428 = vmatprep.subr.bf16.mxu0 0
    %2429 = vmatpush1.bf16.msra.mxu0 0
    %2430 = vmatprep.subr.bf16.mxu0 0
    %2431 = vmatpush1.bf16.msra.mxu0 0
    %2432 = vmatprep.subr.bf16.mxu0 0
    %2433 = vmatpush1.bf16.msra.mxu0 0
    %2434 = vmatprep.subr.bf16.mxu0 0
    %2435 = vmatpush1.bf16.msra.mxu0 0
    %2436 = vmatprep.subr.bf16.mxu0 0
    %2437 = vmatpush1.bf16.msra.mxu0 0
    %2438 = vmatprep.subr.bf16.mxu0 0
    %2439 = vmatpush1.bf16.msra.mxu0 0
    %2440 = vmatprep.subr.bf16.mxu0 0
    %2441 = vmatpush1.bf16.msra.mxu0 0
    %2442 = vmatprep.subr.bf16.mxu0 0
    %2443 = vmatpush1.bf16.msra.mxu0 0
    %2444 = vmatprep.subr.bf16.mxu0 0
    %2445 = vmatpush1.bf16.msra.mxu0 0
    %2446 = vmatprep.subr.bf16.mxu0 0
    %2447 = vmatpush1.bf16.msra.mxu0 0
    %2448 = vmatprep.subr.bf16.mxu0 0
    %2449 = vmatpush1.bf16.msra.mxu0 0
    %2450 = vmatprep.subr.bf16.mxu0 0
    %2451 = vmatpush1.bf16.msra.mxu0 0
    %2452 = vmatprep.subr.bf16.mxu0 0
    %2453 = vmatpush1.bf16.msra.mxu0 0
    %2454 = vmatprep.subr.bf16.mxu0 0
    %2455 = vmatpush1.bf16.msra.mxu0 0
    %2456 = vmatprep.mubr.bf16.mxu0 0
    %2457 = vmatmul.mubr.bf16.gmra.mrb[0].mxu0 %v2419
    %v2458 = vpop.f32.mrb[0].mxu0
    %v2459 = vadd.f32 0.0, %v2458
    %v2460 = vpop.f32.mrb[0].mxu0
    %v2461 = vpop.f32.mrb[0].mxu0
    %v2462 = vpop.f32.mrb[0].mxu0
    %2463 = vdwg.mxu0
    %v2465 = vsel %vm905, %v2321, 0
    %v2468 = vsel %vm1005, %v1841, 0
    %2470 = vmatprep.subr.bf16.mxu0 0
    %2471 = vmatpush1.bf16.msra.mxu0 %v2468
    %2472 = vmatprep.subr.bf16.mxu0 0
    %2473 = vmatpush1.bf16.msra.mxu0 0
    %2474 = vmatprep.subr.bf16.mxu0 0
    %2475 = vmatpush1.bf16.msra.mxu0 0
    %2476 = vmatprep.subr.bf16.mxu0 0
    %2477 = vmatpush1.bf16.msra.mxu0 0
    %2478 = vmatprep.subr.bf16.mxu0 0
    %2479 = vmatpush1.bf16.msra.mxu0 0
    %2480 = vmatprep.subr.bf16.mxu0 0
    %2481 = vmatpush1.bf16.msra.mxu0 0
    %2482 = vmatprep.subr.bf16.mxu0 0
    %2483 = vmatpush1.bf16.msra.mxu0 0
    %2484 = vmatprep.subr.bf16.mxu0 0
    %2485 = vmatpush1.bf16.msra.mxu0 0
    %2486 = vmatprep.subr.bf16.mxu0 0
    %2487 = vmatpush1.bf16.msra.mxu0 0
    %2488 = vmatprep.subr.bf16.mxu0 0
    %2489 = vmatpush1.bf16.msra.mxu0 0
    %2490 = vmatprep.subr.bf16.mxu0 0
    %2491 = vmatpush1.bf16.msra.mxu0 0
    %2492 = vmatprep.subr.bf16.mxu0 0
    %2493 = vmatpush1.bf16.msra.mxu0 0
    %2494 = vmatprep.subr.bf16.mxu0 0
    %2495 = vmatpush1.bf16.msra.mxu0 0
    %2496 = vmatprep.subr.bf16.mxu0 0
    %2497 = vmatpush1.bf16.msra.mxu0 0
    %2498 = vmatprep.subr.bf16.mxu0 0
    %2499 = vmatpush1.bf16.msra.mxu0 0
    %2500 = vmatprep.subr.bf16.mxu0 0
    %2501 = vmatpush1.bf16.msra.mxu0 0
    %2502 = vmatprep.mubr.bf16.mxu0 0
    %2503 = vmatmul.mubr.bf16.gmra.mrb[0].mxu0 %v2465
    %v2504 = vpop.f32.mrb[0].mxu0
    %v2505 = vadd.f32 0.0, %v2504
    %v2506 = vpop.f32.mrb[0].mxu0
    %v2507 = vpop.f32.mrb[0].mxu0
    %v2508 = vpop.f32.mrb[0].mxu0
    %2509 = vdwg.mxu0
    %v2511 = vsel %vm905, %v2322, 0
    %v2514 = vsel %vm1005, %v1842, 0
    %2516 = vmatprep.subr.bf16.mxu0 0
    %2517 = vmatpush1.bf16.msra.mxu0 %v2514
    %2518 = vmatprep.subr.bf16.mxu0 0
    %2519 = vmatpush1.bf16.msra.mxu0 0
    %2520 = vmatprep.subr.bf16.mxu0 0
    %2521 = vmatpush1.bf16.msra.mxu0 0
    %2522 = vmatprep.subr.bf16.mxu0 0
    %2523 = vmatpush1.bf16.msra.mxu0 0
    %2524 = vmatprep.subr.bf16.mxu0 0
    %2525 = vmatpush1.bf16.msra.mxu0 0
    %2526 = vmatprep.subr.bf16.mxu0 0
    %2527 = vmatpush1.bf16.msra.mxu0 0
    %2528 = vmatprep.subr.bf16.mxu0 0
    %2529 = vmatpush1.bf16.msra.mxu0 0
    %2530 = vmatprep.subr.bf16.mxu0 0
    %2531 = vmatpush1.bf16.msra.mxu0 0
    %2532 = vmatprep.subr.bf16.mxu0 0
    %2533 = vmatpush1.bf16.msra.mxu0 0
    %2534 = vmatprep.subr.bf16.mxu0 0
    %2535 = vmatpush1.bf16.msra.mxu0 0
    %2536 = vmatprep.subr.bf16.mxu0 0
    %2537 = vmatpush1.bf16.msra.mxu0 0
    %2538 = vmatprep.subr.bf16.mxu0 0
    %2539 = vmatpush1.bf16.msra.mxu0 0
    %2540 = vmatprep.subr.bf16.mxu0 0
    %2541 = vmatpush1.bf16.msra.mxu0 0
    %2542 = vmatprep.subr.bf16.mxu0 0
    %2543 = vmatpush1.bf16.msra.mxu0 0
    %2544 = vmatprep.subr.bf16.mxu0 0
    %2545 = vmatpush1.bf16.msra.mxu0 0
    %2546 = vmatprep.subr.bf16.mxu0 0
    %2547 = vmatpush1.bf16.msra.mxu0 0
    %2548 = vmatprep.mubr.bf16.mxu0 0
    %2549 = vmatmul.mubr.bf16.gmra.mrb[0].mxu0 %v2511
    %v2550 = vpop.f32.mrb[0].mxu0
    %v2551 = vadd.f32 0.0, %v2550
    %v2552 = vpop.f32.mrb[0].mxu0
    %v2553 = vpop.f32.mrb[0].mxu0
    %v2554 = vpop.f32.mrb[0].mxu0
    %2555 = vdwg.mxu0
    %v2557 = vsel %vm905, %v2323, 0
    %v2560 = vsel %vm1005, %v1843, 0
    %2562 = vmatprep.subr.bf16.mxu0 0
    %2563 = vmatpush1.bf16.msra.mxu0 %v2560
    %2564 = vmatprep.subr.bf16.mxu0 0
    %2565 = vmatpush1.bf16.msra.mxu0 0
    %2566 = vmatprep.subr.bf16.mxu0 0
    %2567 = vmatpush1.bf16.msra.mxu0 0
    %2568 = vmatprep.subr.bf16.mxu0 0
    %2569 = vmatpush1.bf16.msra.mxu0 0
    %2570 = vmatprep.subr.bf16.mxu0 0
    %2571 = vmatpush1.bf16.msra.mxu0 0
    %2572 = vmatprep.subr.bf16.mxu0 0
    %2573 = vmatpush1.bf16.msra.mxu0 0
    %2574 = vmatprep.subr.bf16.mxu0 0
    %2575 = vmatpush1.bf16.msra.mxu0 0
    %2576 = vmatprep.subr.bf16.mxu0 0
    %2577 = vmatpush1.bf16.msra.mxu0 0
    %2578 = vmatprep.subr.bf16.mxu0 0
    %2579 = vmatpush1.bf16.msra.mxu0 0
    %2580 = vmatprep.subr.bf16.mxu0 0
    %2581 = vmatpush1.bf16.msra.mxu0 0
    %2582 = vmatprep.subr.bf16.mxu0 0
    %2583 = vmatpush1.bf16.msra.mxu0 0
    %2584 = vmatprep.subr.bf16.mxu0 0
    %2585 = vmatpush1.bf16.msra.mxu0 0
    %2586 = vmatprep.subr.bf16.mxu0 0
    %2587 = vmatpush1.bf16.msra.mxu0 0
    %2588 = vmatprep.subr.bf16.mxu0 0
    %2589 = vmatpush1.bf16.msra.mxu0 0
    %2590 = vmatprep.subr.bf16.mxu0 0
    %2591 = vmatpush1.bf16.msra.mxu0 0
    %2592 = vmatprep.subr.bf16.mxu0 0
    %2593 = vmatpush1.bf16.msra.mxu0 0
    %2594 = vmatprep.mubr.bf16.mxu0 0
    %2595 = vmatmul.mubr.bf16.gmra.mrb[0].mxu0 %v2557
    %v2596 = vpop.f32.mrb[0].mxu0
    %v2597 = vadd.f32 0.0, %v2596
    %v2598 = vpop.f32.mrb[0].mxu0
    %v2599 = vpop.f32.mrb[0].mxu0
    %v2600 = vpop.f32.mrb[0].mxu0
    %2601 = vdwg.mxu0
    %v2603 = vsel %vm905, %v2324, 0
    %v2606 = vsel %vm1005, %v1844, 0
    %2608 = vmatprep.subr.bf16.mxu0 0
    %2609 = vmatpush1.bf16.msra.mxu0 %v2606
    %2610 = vmatprep.subr.bf16.mxu0 0
    %2611 = vmatpush1.bf16.msra.mxu0 0
    %2612 = vmatprep.subr.bf16.mxu0 0
    %2613 = vmatpush1.bf16.msra.mxu0 0
    %2614 = vmatprep.subr.bf16.mxu0 0
    %2615 = vmatpush1.bf16.msra.mxu0 0
    %2616 = vmatprep.subr.bf16.mxu0 0
    %2617 = vmatpush1.bf16.msra.mxu0 0
    %2618 = vmatprep.subr.bf16.mxu0 0
    %2619 = vmatpush1.bf16.msra.mxu0 0
    %2620 = vmatprep.subr.bf16.mxu0 0
    %2621 = vmatpush1.bf16.msra.mxu0 0
    %2622 = vmatprep.subr.bf16.mxu0 0
    %2623 = vmatpush1.bf16.msra.mxu0 0
    %2624 = vmatprep.subr.bf16.mxu0 0
    %2625 = vmatpush1.bf16.msra.mxu0 0
    %2626 = vmatprep.subr.bf16.mxu0 0
    %2627 = vmatpush1.bf16.msra.mxu0 0
    %2628 = vmatprep.subr.bf16.mxu0 0
    %2629 = vmatpush1.bf16.msra.mxu0 0
    %2630 = vmatprep.subr.bf16.mxu0 0
    %2631 = vmatpush1.bf16.msra.mxu0 0
    %2632 = vmatprep.subr.bf16.mxu0 0
    %2633 = vmatpush1.bf16.msra.mxu0 0
    %2634 = vmatprep.subr.bf16.mxu0 0
    %2635 = vmatpush1.bf16.msra.mxu0 0
    %2636 = vmatprep.subr.bf16.mxu0 0
    %2637 = vmatpush1.bf16.msra.mxu0 0
    %2638 = vmatprep.subr.bf16.mxu0 0
    %2639 = vmatpush1.bf16.msra.mxu0 0
    %2640 = vmatprep.mubr.bf16.mxu0 0
    %2641 = vmatmul.mubr.bf16.gmra.mrb[0].mxu0 %v2603
    %v2642 = vpop.f32.mrb[0].mxu0
    %v2643 = vadd.f32 0.0, %v2642
    %v2644 = vpop.f32.mrb[0].mxu0
    %v2645 = vpop.f32.mrb[0].mxu0
    %v2646 = vpop.f32.mrb[0].mxu0
    %2647 = vdwg.mxu0
    %v2649 = vsel %vm905, %v2325, 0
    %v2652 = vsel %vm1005, %v1845, 0
    %2654 = vmatprep.subr.bf16.mxu0 0
    %2655 = vmatpush1.bf16.msra.mxu0 %v2652
    %2656 = vmatprep.subr.bf16.mxu0 0
    %2657 = vmatpush1.bf16.msra.mxu0 0
    %2658 = vmatprep.subr.bf16.mxu0 0
    %2659 = vmatpush1.bf16.msra.mxu0 0
    %2660 = vmatprep.subr.bf16.mxu0 0
    %2661 = vmatpush1.bf16.msra.mxu0 0
    %2662 = vmatprep.subr.bf16.mxu0 0
    %2663 = vmatpush1.bf16.msra.mxu0 0
    %2664 = vmatprep.subr.bf16.mxu0 0
    %2665 = vmatpush1.bf16.msra.mxu0 0
    %2666 = vmatprep.subr.bf16.mxu0 0
    %2667 = vmatpush1.bf16.msra.mxu0 0
    %2668 = vmatprep.subr.bf16.mxu0 0
    %2669 = vmatpush1.bf16.msra.mxu0 0
    %2670 = vmatprep.subr.bf16.mxu0 0
    %2671 = vmatpush1.bf16.msra.mxu0 0
    %2672 = vmatprep.subr.bf16.mxu0 0
    %2673 = vmatpush1.bf16.msra.mxu0 0
    %2674 = vmatprep.subr.bf16.mxu0 0
    %2675 = vmatpush1.bf16.msra.mxu0 0
    %2676 = vmatprep.subr.bf16.mxu0 0
    %2677 = vmatpush1.bf16.msra.mxu0 0
    %2678 = vmatprep.subr.bf16.mxu0 0
    %2679 = vmatpush1.bf16.msra.mxu0 0
    %2680 = vmatprep.subr.bf16.mxu0 0
    %2681 = vmatpush1.bf16.msra.mxu0 0
    %2682 = vmatprep.subr.bf16.mxu0 0
    %2683 = vmatpush1.bf16.msra.mxu0 0
    %2684 = vmatprep.subr.bf16.mxu0 0
    %2685 = vmatpush1.bf16.msra.mxu0 0
    %2686 = vmatprep.mubr.bf16.mxu0 0
    %2687 = vmatmul.mubr.bf16.gmra.mrb[0].mxu0 %v2649
    %v2688 = vpop.f32.mrb[0].mxu0
    %v2689 = vadd.f32 0.0, %v2688
    %v2690 = vpop.f32.mrb[0].mxu0
    %v2691 = vpop.f32.mrb[0].mxu0
    %v2692 = vpop.f32.mrb[0].mxu0
    %2693 = vdwg.mxu0
    %2696 = vrot.lane.b32.xlu0 %v2459, 32
    %v2697 = vpop.permute.xlu0 %2696
    %2698 = vrot.lane.b32.xlu0 %v2505, 32
    %v2699 = vpop.permute.xlu0 %2698
    %2704 = vrot.lane.b32.xlu0 %v2551, 64
    %v2705 = vpop.permute.xlu0 %2704
    %2706 = vrot.lane.b32.xlu0 %v2597, 64
    %v2707 = vpop.permute.xlu0 %2706
    %2712 = vrot.lane.b32.xlu0 %v2643, 96
    %v2713 = vpop.permute.xlu0 %2712
    %2714 = vrot.lane.b32.xlu0 %v2689, 96
    %v2715 = vpop.permute.xlu0 %2714
    %v2718 = vsel %vm520, %v2367, %v2697
    %v2719 = vsel %vm520, %v2413, %v2699
    %v2720 = vsel %vm1397, %v2718, %v2705
    %v2721 = vsel %vm1397, %v2719, %v2707
    %v2722 = vsel %vm1400, %v2720, %v2713
    %v2723 = vsel %vm1400, %v2721, %v2715
    %v2724 = vpack.c.bf16 %v2723, %v2722
    %v2725 = vlaneseq
    %v2726 = vshrl.u32 %v2725, 7
    %v2727 = vsub.s32 6, %v2726
    %v2728 = vrot.slane %v60, %v2727
    %v2745 = vunpack.c.l.b16 %v145
    %v2746 = vunpack.c.l.b16 %v146
    %v2747 = vunpack.c.l.b16 %v147
    %v2748 = vunpack.c.l.b16 %v148
    %v2749 = vunpack.c.l.b16 %v149
    %v2750 = vunpack.c.l.b16 %v150
    %v2751 = vunpack.c.l.b16 %v151
    %v2752 = vunpack.c.l.b16 %v152
    %v2753 = vunpack.c.l.b16 %v153
    %v2754 = vunpack.c.l.b16 %v154
    %v2755 = vunpack.c.l.b16 %v155
    %v2756 = vunpack.c.l.b16 %v156
    %v2757 = vunpack.c.l.b16 %v157
    %v2758 = vunpack.c.l.b16 %v158
    %v2759 = vunpack.c.l.b16 %v159
    %v2760 = vunpack.c.l.b16 %v160
    %v2761 = vpack.c.b16 %v2746, %v2745
    %v2762 = vpack.c.b16 %v2748, %v2747
    %v2763 = vpack.c.b16 %v2750, %v2749
    %v2764 = vpack.c.b16 %v2752, %v2751
    %v2765 = vpack.c.b16 %v2754, %v2753
    %v2766 = vpack.c.b16 %v2756, %v2755
    %v2767 = vpack.c.b16 %v2758, %v2757
    %v2768 = vpack.c.b16 %v2760, %v2759
    %2777 = vmatprep.subr.bf16.mxu0 0
    %2778 = vmatpush1.bf16.msra.mxu0 %v2761
    %2779 = vmatprep.subr.bf16.mxu0 0
    %2780 = vmatpush1.bf16.msra.mxu0 %v2762
    %2781 = vmatprep.subr.bf16.mxu0 0
    %2782 = vmatpush1.bf16.msra.mxu0 %v2763
    %2783 = vmatprep.subr.bf16.mxu0 0
    %2784 = vmatpush1.bf16.msra.mxu0 %v2764
    %2785 = vmatprep.subr.bf16.mxu0 0
    %2786 = vmatpush1.bf16.msra.mxu0 %v2765
    %2787 = vmatprep.subr.bf16.mxu0 0
    %2788 = vmatpush1.bf16.msra.mxu0 %v2766
    %2789 = vmatprep.subr.bf16.mxu0 0
    %2790 = vmatpush1.bf16.msra.mxu0 %v2767
    %2791 = vmatprep.subr.bf16.mxu0 0
    %2792 = vmatpush1.bf16.msra.mxu0 %v2768
    %2793 = vmatprep.subr.bf16.mxu0 0
    %2794 = vmatpush1.bf16.msra.mxu0 0
    %2795 = vmatprep.subr.bf16.mxu0 0
    %2796 = vmatpush1.bf16.msra.mxu0 0
    %2797 = vmatprep.subr.bf16.mxu0 0
    %2798 = vmatpush1.bf16.msra.mxu0 0
    %2799 = vmatprep.subr.bf16.mxu0 0
    %2800 = vmatpush1.bf16.msra.mxu0 0
    %2801 = vmatprep.subr.bf16.mxu0 0
    %2802 = vmatpush1.bf16.msra.mxu0 0
    %2803 = vmatprep.subr.bf16.mxu0 0
    %2804 = vmatpush1.bf16.msra.mxu0 0
    %2805 = vmatprep.subr.bf16.mxu0 0
    %2806 = vmatpush1.bf16.msra.mxu0 0
    %2807 = vmatprep.subr.bf16.mxu0 0
    %2808 = vmatpush1.bf16.msra.mxu0 0
    %2809 = vmatprep.mubr.bf16.mxu0 0
    %2810 = vmatmul.mubr.bf16.gmra.mrb[0].mxu0 %v2724
    %v2811 = vpop.f32.mrb[0].mxu0
    %v2812 = vadd.f32 %v2728, %v2811
    %v2813 = vpop.f32.mrb[0].mxu0
    %v2814 = vpop.f32.mrb[0].mxu0
    %v2815 = vadd.f32 %v2728, %v2814
    %v2816 = vpop.f32.mrb[0].mxu0
    %2817 = vdwg.mxu0
    %v2818 = vadd.f32 %v1532, %v2812
    %v2819 = vadd.f32 %v1533, %v2815
    %2820 = vadd.xlane.f32.xlu0 %v2818
    %v2821 = vpop.xlane.xlu0 %2820
    %2822 = vadd.xlane.f32.xlu0 %v2819
    %v2823 = vpop.xlane.xlu0 %2822
    %v2824 = vmul.f32 %v2821, %v1503
    %v2825 = vmul.f32 %v2823, %v1503
    %v2826 = vsub.f32 %v2818, %v2824
    %v2827 = vsub.f32 %v2819, %v2825
    %v2828 = vmul.f32 %v2826, %v2826
    %v2829 = vmul.f32 %v2827, %v2827
    %2830 = vadd.xlane.f32.xlu0 %v2828
    %v2831 = vpop.xlane.xlu0 %2830
    %2832 = vadd.xlane.f32.xlu0 %v2829
    %v2833 = vpop.xlane.xlu0 %2832
    %v2834 = vmul.f32 %v2831, %v1503
    %v2835 = vmul.f32 %v2833, %v1503
    %v2836 = vadd.f32 %v2834, 1e-05
    %v2837 = vadd.f32 %v2835, 1e-05
    %v2838 = vrsqrt.pop %v2836
    %v2839 = vrsqrt.pop %v2837
    %v2840 = vmul.f32 %v2826, %v2838
    %v2841 = vmul.f32 %v2827, %v2839
    %v2842 = vlaneseq
    %v2843 = vshrl.u32 %v2842, 7
    %v2844 = vsub.s32 7, %v2843
    %v2845 = vrot.slane %v60, %v2844
    %v2846 = vmul.f32 %v2840, %v2845
    %v2847 = vmul.f32 %v2841, %v2845
    %v2848 = vlaneseq
    %v2849 = vshrl.u32 %v2848, 7
    %v2850 = vsub.s32 0, %v2849
    %v2851 = vrot.slane %v63, %v2850
    %v2852 = vadd.f32 %v2846, %v2851
    %v2853 = vadd.f32 %v2847, %v2851
    %v2854 = vpack.c.bf16 %v2853, %v2852
    %v2855 = vlaneseq
    %v2856 = vshrl.u32 %v2855, 7
    %v2857 = vsub.s32 1, %v2856
    %v2858 = vrot.slane %v63, %v2857
    %v2859 = vlaneseq
    %v2860 = vshrl.u32 %v2859, 7
    %v2861 = vsub.s32 1, %v2860
    %v2862 = vrot.slane %v64, %v2861
    %v2879 = vunpack.c.l.b16 %v161
    %v2880 = vunpack.c.h.b16 %v161
    %v2881 = vunpack.c.l.b16 %v162
    %v2882 = vunpack.c.h.b16 %v162
    %v2883 = vunpack.c.l.b16 %v163
    %v2884 = vunpack.c.h.b16 %v163
    %v2885 = vunpack.c.l.b16 %v164
    %v2886 = vunpack.c.h.b16 %v164
    %v2887 = vunpack.c.l.b16 %v165
    %v2888 = vunpack.c.h.b16 %v165
    %v2889 = vunpack.c.l.b16 %v166
    %v2890 = vunpack.c.h.b16 %v166
    %v2891 = vunpack.c.l.b16 %v167
    %v2892 = vunpack.c.h.b16 %v167
    %v2893 = vunpack.c.l.b16 %v168
    %v2894 = vunpack.c.h.b16 %v168
    %v2895 = vunpack.c.l.b16 %v169
    %v2896 = vunpack.c.h.b16 %v169
    %v2897 = vunpack.c.l.b16 %v170
    %v2898 = vunpack.c.h.b16 %v170
    %v2899 = vunpack.c.l.b16 %v171
    %v2900 = vunpack.c.h.b16 %v171
    %v2901 = vunpack.c.l.b16 %v172
    %v2902 = vunpack.c.h.b16 %v172
    %v2903 = vunpack.c.l.b16 %v173
    %v2904 = vunpack.c.h.b16 %v173
    %v2905 = vunpack.c.l.b16 %v174
    %v2906 = vunpack.c.h.b16 %v174
    %v2907 = vunpack.c.l.b16 %v175
    %v2908 = vunpack.c.h.b16 %v175
    %v2909 = vunpack.c.l.b16 %v176
    %v2910 = vunpack.c.h.b16 %v176
    %v2911 = vpack.c.b16 %v2881, %v2879
    %v2912 = vpack.c.b16 %v2882, %v2880
    %v2913 = vpack.c.b16 %v2885, %v2883
    %v2914 = vpack.c.b16 %v2886, %v2884
    %v2915 = vpack.c.b16 %v2889, %v2887
    %v2916 = vpack.c.b16 %v2890, %v2888
    %v2917 = vpack.c.b16 %v2893, %v2891
    %v2918 = vpack.c.b16 %v2894, %v2892
    %v2919 = vpack.c.b16 %v2897, %v2895
    %v2920 = vpack.c.b16 %v2898, %v2896
    %v2921 = vpack.c.b16 %v2901, %v2899
    %v2922 = vpack.c.b16 %v2902, %v2900
    %v2923 = vpack.c.b16 %v2905, %v2903
    %v2924 = vpack.c.b16 %v2906, %v2904
    %v2925 = vpack.c.b16 %v2909, %v2907
    %v2926 = vpack.c.b16 %v2910, %v2908
    %2943 = vmatprep.subr.bf16.mxu0 %v2912
    %2944 = vmatpush1.bf16.msra.mxu0 %v2911
    %2945 = vmatprep.subr.bf16.mxu0 %v2914
    %2946 = vmatpush1.bf16.msra.mxu0 %v2913
    %2947 = vmatprep.subr.bf16.mxu0 %v2916
    %2948 = vmatpush1.bf16.msra.mxu0 %v2915
    %2949 = vmatprep.subr.bf16.mxu0 %v2918
    %2950 = vmatpush1.bf16.msra.mxu0 %v2917
    %2951 = vmatprep.subr.bf16.mxu0 %v2920
    %2952 = vmatpush1.bf16.msra.mxu0 %v2919
    %2953 = vmatprep.subr.bf16.mxu0 %v2922
    %2954 = vmatpush1.bf16.msra.mxu0 %v2921
    %2955 = vmatprep.subr.bf16.mxu0 %v2924
    %2956 = vmatpush1.bf16.msra.mxu0 %v2923
    %2957 = vmatprep.subr.bf16.mxu0 %v2926
    %2958 = vmatpush1.bf16.msra.mxu0 %v2925
    %2959 = vmatprep.subr.bf16.mxu0 0
    %2960 = vmatpush1.bf16.msra.mxu0 0
    %2961 = vmatprep.subr.bf16.mxu0 0
    %2962 = vmatpush1.bf16.msra.mxu0 0
    %2963 = vmatprep.subr.bf16.mxu0 0
    %2964 = vmatpush1.bf16.msra.mxu0 0
    %2965 = vmatprep.subr.bf16.mxu0 0
    %2966 = vmatpush1.bf16.msra.mxu0 0
    %2967 = vmatprep.subr.bf16.mxu0 0
    %2968 = vmatpush1.bf16.msra.mxu0 0
    %2969 = vmatprep.subr.bf16.mxu0 0
    %2970 = vmatpush1.bf16.msra.mxu0 0
    %2971 = vmatprep.subr.bf16.mxu0 0
    %2972 = vmatpush1.bf16.msra.mxu0 0
    %2973 = vmatprep.subr.bf16.mxu0 0
    %2974 = vmatpush1.bf16.msra.mxu0 0
    %2975 = vmatprep.mubr.bf16.mxu0 0
    %2976 = vmatmul.mubr.bf16.gmra.mrb[0].mxu0 %v2854
    %v2977 = vpop.f32.mrb[0].mxu0
    %v2978 = vadd.f32 %v2858, %v2977
    %v2979 = vpop.f32.mrb[0].mxu0
    %v2980 = vadd.f32 %v2862, %v2979
    %v2981 = vpop.f32.mrb[0].mxu0
    %v2982 = vadd.f32 %v2858, %v2981
    %v2983 = vpop.f32.mrb[0].mxu0
    %v2984 = vadd.f32 %v2862, %v2983
    %2985 = vdwg.mxu0
    %v2986 = vmax.f32 %v2978, 0.0
    %v2987 = vmax.f32 %v2980, 0.0
    %v2988 = vmax.f32 %v2982, 0.0
    %v2989 = vmax.f32 %v2984, 0.0
    %v2990 = vpack.c.bf16 %v2988, %v2986
    %v2991 = vpack.c.bf16 %v2989, %v2987
    %v2992 = vlaneseq
    %v2993 = vshrl.u32 %v2992, 7
    %v2994 = vsub.s32 2, %v2993
    %v2995 = vrot.slane %v63, %v2994
    %v3028 = vunpack.c.l.b16 %v177
    %v3029 = vunpack.c.l.b16 %v178
    %v3030 = vunpack.c.l.b16 %v179
    %v3031 = vunpack.c.l.b16 %v180
    %v3032 = vunpack.c.l.b16 %v181
    %v3033 = vunpack.c.l.b16 %v182
    %v3034 = vunpack.c.l.b16 %v183
    %v3035 = vunpack.c.l.b16 %v184
    %v3036 = vunpack.c.l.b16 %v185
    %v3037 = vunpack.c.l.b16 %v186
    %v3038 = vunpack.c.l.b16 %v187
    %v3039 = vunpack.c.l.b16 %v188
    %v3040 = vunpack.c.l.b16 %v189
    %v3041 = vunpack.c.l.b16 %v190
    %v3042 = vunpack.c.l.b16 %v191
    %v3043 = vunpack.c.l.b16 %v192
    %v3044 = vunpack.c.l.b16 %v193
    %v3045 = vunpack.c.l.b16 %v194
    %v3046 = vunpack.c.l.b16 %v195
    %v3047 = vunpack.c.l.b16 %v196
    %v3048 = vunpack.c.l.b16 %v197
    %v3049 = vunpack.c.l.b16 %v198
    %v3050 = vunpack.c.l.b16 %v199
    %v3051 = vunpack.c.l.b16 %v200
    %v3052 = vunpack.c.l.b16 %v201
    %v3053 = vunpack.c.l.b16 %v202
    %v3054 = vunpack.c.l.b16 %v203
    %v3055 = vunpack.c.l.b16 %v204
    %v3056 = vunpack.c.l.b16 %v205
    %v3057 = vunpack.c.l.b16 %v206
    %v3058 = vunpack.c.l.b16 %v207
    %v3059 = vunpack.c.l.b16 %v208
    %v3060 = vpack.c.b16 %v3029, %v3028
    %v3061 = vpack.c.b16 %v3031, %v3030
    %v3062 = vpack.c.b16 %v3033, %v3032
    %v3063 = vpack.c.b16 %v3035, %v3034
    %v3064 = vpack.c.b16 %v3037, %v3036
    %v3065 = vpack.c.b16 %v3039, %v3038
    %v3066 = vpack.c.b16 %v3041, %v3040
    %v3067 = vpack.c.b16 %v3043, %v3042
    %v3068 = vpack.c.b16 %v3045, %v3044
    %v3069 = vpack.c.b16 %v3047, %v3046
    %v3070 = vpack.c.b16 %v3049, %v3048
    %v3071 = vpack.c.b16 %v3051, %v3050
    %v3072 = vpack.c.b16 %v3053, %v3052
    %v3073 = vpack.c.b16 %v3055, %v3054
    %v3074 = vpack.c.b16 %v3057, %v3056
    %v3075 = vpack.c.b16 %v3059, %v3058
    %3092 = vmatprep.subr.bf16.mxu0 0
    %3093 = vmatpush1.bf16.msra.mxu0 %v3060
    %3094 = vmatprep.subr.bf16.mxu0 0
    %3095 = vmatpush1.bf16.msra.mxu0 %v3061
    %3096 = vmatprep.subr.bf16.mxu0 0
    %3097 = vmatpush1.bf16.msra.mxu0 %v3062
    %3098 = vmatprep.subr.bf16.mxu0 0
    %3099 = vmatpush1.bf16.msra.mxu0 %v3063
    %3100 = vmatprep.subr.bf16.mxu0 0
    %3101 = vmatpush1.bf16.msra.mxu0 %v3064
    %3102 = vmatprep.subr.bf16.mxu0 0
    %3103 = vmatpush1.bf16.msra.mxu0 %v3065
    %3104 = vmatprep.subr.bf16.mxu0 0
    %3105 = vmatpush1.bf16.msra.mxu0 %v3066
    %3106 = vmatprep.subr.bf16.mxu0 0
    %3107 = vmatpush1.bf16.msra.mxu0 %v3067
    %3108 = vmatprep.subr.bf16.mxu0 0
    %3109 = vmatpush1.bf16.msra.mxu0 %v3068
    %3110 = vmatprep.subr.bf16.mxu0 0
    %3111 = vmatpush1.bf16.msra.mxu0 %v3069
    %3112 = vmatprep.subr.bf16.mxu0 0
    %3113 = vmatpush1.bf16.msra.mxu0 %v3070
    %3114 = vmatprep.subr.bf16.mxu0 0
    %3115 = vmatpush1.bf16.msra.mxu0 %v3071
    %3116 = vmatprep.subr.bf16.mxu0 0
    %3117 = vmatpush1.bf16.msra.mxu0 %v3072
    %3118 = vmatprep.subr.bf16.mxu0 0
    %3119 = vmatpush1.bf16.msra.mxu0 %v3073
    %3120 = vmatprep.subr.bf16.mxu0 0
    %3121 = vmatpush1.bf16.msra.mxu0 %v3074
    %3122 = vmatprep.subr.bf16.mxu0 0
    %3123 = vmatpush1.bf16.msra.mxu0 %v3075
    %3124 = vmatprep.mubr.bf16.mxu0 %v2991
    %3125 = vmatmul.mubr.bf16.gmra.mrb[0].mxu0 %v2990
    %v3126 = vpop.f32.mrb[0].mxu0
    %v3127 = vadd.f32 %v2995, %v3126
    %v3128 = vpop.f32.mrb[0].mxu0
    %v3129 = vpop.f32.mrb[0].mxu0
    %v3130 = vadd.f32 %v2995, %v3129
    %v3131 = vpop.f32.mrb[0].mxu0
    %3132 = vdwg.mxu0
    %v3133 = vadd.f32 %v2852, %v3127
    %v3134 = vadd.f32 %v2853, %v3130
    %3135 = vadd.xlane.f32.xlu0 %v3133
    %v3136 = vpop.xlane.xlu0 %3135
    %3137 = vadd.xlane.f32.xlu0 %v3134
    %v3138 = vpop.xlane.xlu0 %3137
    %v3139 = vmul.f32 %v3136, %v1503
    %v3140 = vmul.f32 %v3138, %v1503
    %v3141 = vsub.f32 %v3133, %v3139
    %v3142 = vsub.f32 %v3134, %v3140
    %v3143 = vmul.f32 %v3141, %v3141
    %v3144 = vmul.f32 %v3142, %v3142
    %3145 = vadd.xlane.f32.xlu0 %v3143
    %v3146 = vpop.xlane.xlu0 %3145
    %3147 = vadd.xlane.f32.xlu0 %v3144
    %v3148 = vpop.xlane.xlu0 %3147
    %v3149 = vmul.f32 %v3146, %v1503
    %v3150 = vmul.f32 %v3148, %v1503
    %v3151 = vadd.f32 %v3149, 1e-05
    %v3152 = vadd.f32 %v3150, 1e-05
    %v3153 = vrsqrt.pop %v3151
    %v3154 = vrsqrt.pop %v3152
    %v3155 = vmul.f32 %v3141, %v3153
    %v3156 = vmul.f32 %v3142, %v3154
    %v3157 = vlaneseq
    %v3158 = vshrl.u32 %v3157, 7
    %v3159 = vsub.s32 3, %v3158
    %v3160 = vrot.slane %v63, %v3159
    %v3161 = vmul.f32 %v3155, %v3160
    %v3162 = vmul.f32 %v3156, %v3160
    %v3163 = vlaneseq
    %v3164 = vshrl.u32 %v3163, 7
    %v3165 = vsub.s32 4, %v3164
    %v3166 = vrot.slane %v63, %v3165
    %v3167 = vadd.f32 %v3161, %v3166
    %v3168 = vadd.f32 %v3162, %v3166
    %3169 = vst [vmem:[#allocation7] sm:$0xff] %v3167
    %3170 = vst [vmem:[#allocation7 + $0x8] sm:$0xff] %v3168
    // Predicated region
    $region38: #{decoder_layer.1} parent=1 // pred_check
      _
    $region39: #{decoder_layer.1} parent=1 // pred_check_branch
      %3172 = sbr.rel (0) target = $region41
    $region40: #{decoder_layer.1} parent=1 // pred_region
      %s3174 = ssub.s32 256, 256
      %3175 = vsyncadd [#allocation4], %s3174
      %s3176 = sshll.u32 [#allocation7], 4
      %s3177 = int_to_ptr.vmem [resolvable:$true] %s3176
      %3182 = dma.vmem_to_hbm [thread:$0]  %s3177, 256, %s7, [#allocation4], 128, 128, 8
    $region41: #{decoder_layer.1} parent=1 // pred_fallthru
      _
    // Predicated region
    $region42: #{decoder_layer.1} parent=1 // pred_check
      _
    $region43: #{decoder_layer.1} parent=1 // pred_check_branch
      %3184 = sbr.rel (0) target = $region45
    $region44: #{decoder_layer.1} parent=1 // pred_region
      %3185 = dma.done [#allocation4], 256
    $region45: #{decoder_layer.1} parent=1 // pred_fallthru
      _
    %3186 = vsyncpa [#allocation3], 1
    %3187 = vsyncpa [#allocation6], 1
    %3188 = vsyncpa [#allocation4], 1

</llo_original>
